<compile_context>
chip_gen: v6e
topology: v6e:2x2x1
jax: 0.10.0
libtpu: 0.0.40
codegen_flags: <defaults>
</compile_context>

<pallas_src>
import jax
import jax.numpy as jnp
from jax import lax
from jax.experimental import pallas as pl
from jax.experimental.pallas import tpu as pltpu

LANE = 128  # lane-dense padded channel width for every layer output


# ----------------------------- Pallas kernels ------------------------------

def _conv_pool_kernel(a_ref, w_ref, b_ref, o_ref):
    """Fused im2col-matmul conv + bias + ReLU + 2x2 max-pool.

    a_ref: (4, M4, K)  im2col rows; leading dim = pool-quad position (di, dj);
                       within a quad block rows are ordered (n, h_out, w_out).
    w_ref: (K, 128)    flattened conv filters, out-channels on lanes (zero-padded).
    b_ref: (1, 128)    bias (zero-padded).
    o_ref: (M4, 128)   pooled activation: rows (n, h_pool, w_pool), lanes = channels.
    """
    w = w_ref[...]

    def tap(q):  # conv output sampled at pool-quad offset q (MXU matmul)
        return jnp.dot(a_ref[q], w, preferred_element_type=jnp.float32)

    # max-pool(ReLU(conv + b)) == ReLU(max-pool(conv) + b)  (ReLU monotone, b shared)
    m = jnp.maximum(jnp.maximum(tap(0), tap(1)), jnp.maximum(tap(2), tap(3)))
    o_ref[...] = jnp.maximum(m + b_ref[...], 0.0)


def _fc_stack_kernel(x_ref, w1_ref, b1_ref, w2_ref, b2_ref, w3_ref, b3_ref, o_ref):
    """fc1+ReLU -> fc2+ReLU -> fc3; intermediates live only in VMEM/vregs."""
    h = jnp.dot(x_ref[...], w1_ref[...], preferred_element_type=jnp.float32)
    h = jnp.maximum(h + b1_ref[...], 0.0)                      # (N, 128), cols>=120 are 0
    h = jnp.dot(h, w2_ref[...], preferred_element_type=jnp.float32)
    h = jnp.maximum(h + b2_ref[...], 0.0)                      # (N, 128), cols>=84 are 0
    h = jnp.dot(h, w3_ref[...], preferred_element_type=jnp.float32)
    o_ref[...] = h + b3_ref[...]                               # (N, 128), cols>=10 are 0


# ----------------------------- Pallas wrappers ------------------------------

_VMEM = pl.BlockSpec(memory_space=pltpu.MemorySpace.VMEM)


def conv_pool_stage(a, w_packed, b_packed):
    """a: (4, M4, K) -> pooled activation (M4, 128)."""
    _, m4, _ = a.shape
    return pl.pallas_call(
        _conv_pool_kernel,
        out_shape=jax.ShapeDtypeStruct((m4, LANE), jnp.float32),
        in_specs=[_VMEM] * 3,
        out_specs=_VMEM,
    )(a, w_packed, b_packed)


def fc_stack(x, pp):
    """x: (N, 25*128) flattened conv2-stage output -> (N, 128) logits (padded)."""
    n = x.shape[0]
    return pl.pallas_call(
        _fc_stack_kernel,
        out_shape=jax.ShapeDtypeStruct((n, LANE), jnp.float32),
        in_specs=[_VMEM] * 7,
        out_specs=_VMEM,
    )(x, pp["fc1_w"], pp["fc1_b"], pp["fc2_w"], pp["fc2_b"],
      pp["fc3_w"], pp["fc3_b"])


# ------------------------------- glue / model ------------------------------

def pooled_quad_patches(x_nhwc, ksize):
    """x_nhwc: (N, H, W, C) -> im2col tensor (4, N*Ho2*Wo2, C*ksize*ksize).

    Leading dim = 2x2 pool-quad position; feature order = (c, kh, kw), matching
    PyTorch's weight.reshape(Cout, -1). Identity-filter patches at HIGHEST
    precision are an exact copy of the input values.
    """
    n, h, w, c = x_nhwc.shape
    k = c * ksize * ksize
    patches = lax.conv_general_dilated_patches(
        x_nhwc, filter_shape=(ksize, ksize), window_strides=(1, 1),
        padding="VALID", dimension_numbers=("NHWC", "HWIO", "NHWC"),
        precision=lax.Precision.HIGHEST)               # (N, Ho, Wo, K)
    ho, wo = h - ksize + 1, w - ksize + 1
    ho2, wo2 = ho // 2, wo // 2
    blocks = [patches[:, di::2, dj::2, :].reshape(n * ho2 * wo2, k)
              for di in (0, 1) for dj in (0, 1)]
    return jnp.stack(blocks, axis=0), ho2, wo2          # (4, M4, K)


def pack_params(p):
    """One-time repack of PyTorch-layout params into MXU/lane-friendly layouts.
    Done once outside the jitted forward: no per-step weight transposes."""
    def padded(a, shape):
        return jnp.zeros(shape, jnp.float32).at[
            tuple(slice(0, s) for s in a.shape)].set(a)

    c1, c2 = 6, 16
    out = {
        # conv weights: (Cout, Cin, kh, kw) -> (Cin*kh*kw, 128), out-channels on lanes
        "w1": padded(p["w1"].reshape(c1, -1).T, (25, LANE)),
        "b1": padded(p["b1"].reshape(1, c1), (1, LANE)),
        "w2": padded(p["w2"].reshape(c2, -1).T, (150, LANE)),
        "b2": padded(p["b2"].reshape(1, c2), (1, LANE)),
        "fc1_b": padded(p["fc1_b"].reshape(1, 120), (1, LANE)),
        "fc2_w": padded(p["fc2_w"].T, (LANE, LANE)),     # (120,84) -> (128,128)
        "fc2_b": padded(p["fc2_b"].reshape(1, 84), (1, LANE)),
        "fc3_w": padded(p["fc3_w"].T, (LANE, LANE)),     # (84,10) -> (128,128)
        "fc3_b": padded(p["fc3_b"].reshape(1, 10), (1, LANE)),
    }
    # fc1: absorb the conv2-stage output layout (rows (n,h,w), 128 channel lanes)
    # so the only glue between conv2 and the FC stack is a reshape.
    f1 = p["fc1_w"].reshape(120, c2, 5, 5)               # [j, c, h, w]
    f1 = jnp.transpose(f1, (2, 3, 1, 0))                 # [h, w, c, j]
    f1 = padded(f1, (5, 5, LANE, 120)).reshape(5 * 5 * LANE, 120)
    out["fc1_w"] = padded(f1, (5 * 5 * LANE, LANE))      # (3200, 128)
    return out


def lenet_forward(x, pp):
    """x: (N, 1, 32, 32) NCHW, pp: pack_params(...) output. Returns (N, 10)."""
    n = x.shape[0]
    x_nhwc = jnp.transpose(x, (0, 2, 3, 1))              # (N, 32, 32, 1)

    # conv1 + ReLU + 2x2 pool  (one Pallas call)
    a1, h1, w1 = pooled_quad_patches(x_nhwc, 5)          # (4, N*14*14, 25)
    o1 = conv_pool_stage(a1, pp["w1"], pp["b1"])         # (N*14*14, 128)

    # conv2 + ReLU + 2x2 pool  (one Pallas call); lanes->channels, no transpose
    x2 = o1[:, :6].reshape(n, h1, w1, 6)                 # (N, 14, 14, 6) NHWC
    a2, h2, w2 = pooled_quad_patches(x2, 5)              # (4, N*5*5, 150)
    o2 = conv_pool_stage(a2, pp["w2"], pp["b2"])         # (N*25, 128)

    # fc1 -> fc2 -> fc3 fused in one Pallas call; the NCHW flatten permutation
    # is baked into pp["fc1_w"], so only a reshape is needed here.
    xf = o2.reshape(n, h2 * w2 * LANE)                   # (N, 3200)
    y = fc_stack(xf, pp)                                 # (N, 128)
    return y[:, :10]


def init_params(key):
    ks = jax.random.split(key, 10)
    s = 0.1
    return {
        "w1": jax.random.normal(ks[0], (6, 1, 5, 5), jnp.float32) * s,
        "b1": jax.random.normal(ks[1], (6,), jnp.float32) * s,
        "w2": jax.random.normal(ks[2], (16, 6, 5, 5), jnp.float32) * s,
        "b2": jax.random.normal(ks[3], (16,), jnp.float32) * s,
        "fc1_w": jax.random.normal(ks[4], (120, 400), jnp.float32) * s,
        "fc1_b": jax.random.normal(ks[5], (120,), jnp.float32) * s,
        "fc2_w": jax.random.normal(ks[6], (84, 120), jnp.float32) * s,
        "fc2_b": jax.random.normal(ks[7], (84,), jnp.float32) * s,
        "fc3_w": jax.random.normal(ks[8], (10, 84), jnp.float32) * s,
        "fc3_b": jax.random.normal(ks[9], (10,), jnp.float32) * s,
    }


def lenet_reference(x, p):
    """Pure-JAX reference matching the PyTorch forward semantics."""
    def conv(x, w, b):
        y = lax.conv_general_dilated(
            x, w, window_strides=(1, 1), padding="VALID",
            dimension_numbers=("NCHW", "OIHW", "NCHW"))
        return jax.nn.relu(y + b[None, :, None, None])

    def pool(x):
        n, c, h, w = x.shape
        return x.reshape(n, c, h // 2, 2, w // 2, 2).max(axis=(3, 5))

    x = pool(conv(x, p["w1"], p["b1"]))
    x = pool(conv(x, p["w2"], p["b2"]))
    x = x.reshape(x.shape[0], -1)
    x = jax.nn.relu(x @ p["fc1_w"].T + p["fc1_b"])
    x = jax.nn.relu(x @ p["fc2_w"].T + p["fc2_b"])
    return x @ p["fc3_w"].T + p["fc3_b"]


if __name__ == "__main__":
    key = jax.random.PRNGKey(0)
    k_x, k_p = jax.random.split(key)
    # LeNet's fc1 (16*5*5 -> 120) fixes the spatial size: input is (N, 1, 32, 32).
    x = jax.random.normal(k_x, (2, 1, 32, 32), jnp.float32)
    params = init_params(k_p)
    packed = pack_params(params)            # one-time repack, outside the jit

    out = jax.jit(lenet_forward)(x, packed)
    out = jax.block_until_ready(out)
    assert out.shape == (2, 10)

    ref = lenet_reference(x, params)
    assert jnp.allclose(out, ref, atol=1e-4, rtol=1e-4), "mismatch vs JAX reference"
    print("KERNEL_OK")
</pallas_src>

<mosaic_0001>
module attributes {stable_mosaic.version = 11 : i64} {
  func.func @_conv_pool_kernel(%arg0: memref<4x392x25xf32, #tpu.memory_space<vmem>>, %arg1: memref<25x128xf32, #tpu.memory_space<vmem>>, %arg2: memref<1x128xf32, #tpu.memory_space<vmem>>, %arg3: memref<392x128xf32, #tpu.memory_space<vmem>>) attributes {dimension_semantics = [], scalar_prefetch = 0 : i64, scratch_operands = 0 : i64, tpu.core_type = #tpu.core_type<tc>} {
    %c0 = arith.constant 0 : index
    %c0_0 = arith.constant 0 : index
    %0 = vector.load %arg1[%c0, %c0_0] : memref<25x128xf32, #tpu.memory_space<vmem>>, vector<25x128xf32>
    %c0_1 = arith.constant 0 : index
    %c0_2 = arith.constant 0 : index
    %c0_3 = arith.constant 0 : index
    %1 = vector.load %arg0[%c0_1, %c0_2, %c0_3] : memref<4x392x25xf32, #tpu.memory_space<vmem>>, vector<1x392x25xf32>
    %2 = vector.shape_cast %1 : vector<1x392x25xf32> to vector<392x25xf32>
    %cst = arith.constant dense<0.000000e+00> : vector<392x128xf32>
    %3 = tpu.matmul %2, %0, %cst {dimension_numbers = #tpu.dot_dimension_numbers<[1], [0], [0], [1], [0, 0, 1, 1], [], []>} : vector<392x25xf32>, vector<25x128xf32>, vector<392x128xf32> -> vector<392x128xf32>
    %c1 = arith.constant 1 : index
    %c0_4 = arith.constant 0 : index
    %c0_5 = arith.constant 0 : index
    %4 = vector.load %arg0[%c1, %c0_4, %c0_5] : memref<4x392x25xf32, #tpu.memory_space<vmem>>, vector<1x392x25xf32>
    %5 = vector.shape_cast %4 : vector<1x392x25xf32> to vector<392x25xf32>
    %cst_6 = arith.constant dense<0.000000e+00> : vector<392x128xf32>
    %6 = tpu.matmul %5, %0, %cst_6 {dimension_numbers = #tpu.dot_dimension_numbers<[1], [0], [0], [1], [0, 0, 1, 1], [], []>} : vector<392x25xf32>, vector<25x128xf32>, vector<392x128xf32> -> vector<392x128xf32>
    %7 = arith.maximumf %3, %6 : vector<392x128xf32>
    %c2 = arith.constant 2 : index
    %c0_7 = arith.constant 0 : index
    %c0_8 = arith.constant 0 : index
    %8 = vector.load %arg0[%c2, %c0_7, %c0_8] : memref<4x392x25xf32, #tpu.memory_space<vmem>>, vector<1x392x25xf32>
    %9 = vector.shape_cast %8 : vector<1x392x25xf32> to vector<392x25xf32>
    %cst_9 = arith.constant dense<0.000000e+00> : vector<392x128xf32>
    %10 = tpu.matmul %9, %0, %cst_9 {dimension_numbers = #tpu.dot_dimension_numbers<[1], [0], [0], [1], [0, 0, 1, 1], [], []>} : vector<392x25xf32>, vector<25x128xf32>, vector<392x128xf32> -> vector<392x128xf32>
    %c3 = arith.constant 3 : index
    %c0_10 = arith.constant 0 : index
    %c0_11 = arith.constant 0 : index
    %11 = vector.load %arg0[%c3, %c0_10, %c0_11] : memref<4x392x25xf32, #tpu.memory_space<vmem>>, vector<1x392x25xf32>
    %12 = vector.shape_cast %11 : vector<1x392x25xf32> to vector<392x25xf32>
    %cst_12 = arith.constant dense<0.000000e+00> : vector<392x128xf32>
    %13 = tpu.matmul %12, %0, %cst_12 {dimension_numbers = #tpu.dot_dimension_numbers<[1], [0], [0], [1], [0, 0, 1, 1], [], []>} : vector<392x25xf32>, vector<25x128xf32>, vector<392x128xf32> -> vector<392x128xf32>
    %14 = arith.maximumf %10, %13 : vector<392x128xf32>
    %15 = arith.maximumf %7, %14 : vector<392x128xf32>
    %c0_13 = arith.constant 0 : index
    %c0_14 = arith.constant 0 : index
    %16 = vector.load %arg2[%c0_13, %c0_14] : memref<1x128xf32, #tpu.memory_space<vmem>>, vector<1x128xf32>
    %17 = vector.broadcast %16 : vector<1x128xf32> to vector<392x128xf32>
    %18 = arith.addf %15, %17 : vector<392x128xf32>
    %cst_15 = arith.constant 0.000000e+00 : f32
    %19 = vector.broadcast %cst_15 : f32 to vector<392x128xf32>
    %20 = arith.maximumf %18, %19 : vector<392x128xf32>
    %c0_16 = arith.constant 0 : index
    %c0_17 = arith.constant 0 : index
    %21 = vector.load %arg3[%c0_16, %c0_17] : memref<392x128xf32, #tpu.memory_space<vmem>>, vector<392x128xf32>
    tpu.vector_store %arg3[%c0_16, %c0_17], %20 {strides = array<i32>} : memref<392x128xf32, #tpu.memory_space<vmem>>, vector<392x128xf32>,
    return
  }
}

module attributes {stable_mosaic.version = 11 : i64} {
  func.func @_conv_pool_kernel(%arg0: memref<4x50x150xf32, #tpu.memory_space<vmem>>, %arg1: memref<150x128xf32, #tpu.memory_space<vmem>>, %arg2: memref<1x128xf32, #tpu.memory_space<vmem>>, %arg3: memref<50x128xf32, #tpu.memory_space<vmem>>) attributes {dimension_semantics = [], scalar_prefetch = 0 : i64, scratch_operands = 0 : i64, tpu.core_type = #tpu.core_type<tc>} {
    %c0 = arith.constant 0 : index
    %c0_0 = arith.constant 0 : index
    %0 = vector.load %arg1[%c0, %c0_0] : memref<150x128xf32, #tpu.memory_space<vmem>>, vector<150x128xf32>
    %c0_1 = arith.constant 0 : index
    %c0_2 = arith.constant 0 : index
    %c0_3 = arith.constant 0 : index
    %1 = vector.load %arg0[%c0_1, %c0_2, %c0_3] : memref<4x50x150xf32, #tpu.memory_space<vmem>>, vector<1x50x150xf32>
    %2 = vector.shape_cast %1 : vector<1x50x150xf32> to vector<50x150xf32>
    %cst = arith.constant dense<0.000000e+00> : vector<50x128xf32>
    %3 = tpu.matmul %2, %0, %cst {dimension_numbers = #tpu.dot_dimension_numbers<[1], [0], [0], [1], [0, 0, 1, 1], [], []>} : vector<50x150xf32>, vector<150x128xf32>, vector<50x128xf32> -> vector<50x128xf32>
    %c1 = arith.constant 1 : index
    %c0_4 = arith.constant 0 : index
    %c0_5 = arith.constant 0 : index
    %4 = vector.load %arg0[%c1, %c0_4, %c0_5] : memref<4x50x150xf32, #tpu.memory_space<vmem>>, vector<1x50x150xf32>
    %5 = vector.shape_cast %4 : vector<1x50x150xf32> to vector<50x150xf32>
    %cst_6 = arith.constant dense<0.000000e+00> : vector<50x128xf32>
    %6 = tpu.matmul %5, %0, %cst_6 {dimension_numbers = #tpu.dot_dimension_numbers<[1], [0], [0], [1], [0, 0, 1, 1], [], []>} : vector<50x150xf32>, vector<150x128xf32>, vector<50x128xf32> -> vector<50x128xf32>
    %7 = arith.maximumf %3, %6 : vector<50x128xf32>
    %c2 = arith.constant 2 : index
    %c0_7 = arith.constant 0 : index
    %c0_8 = arith.constant 0 : index
    %8 = vector.load %arg0[%c2, %c0_7, %c0_8] : memref<4x50x150xf32, #tpu.memory_space<vmem>>, vector<1x50x150xf32>
    %9 = vector.shape_cast %8 : vector<1x50x150xf32> to vector<50x150xf32>
    %cst_9 = arith.constant dense<0.000000e+00> : vector<50x128xf32>
    %10 = tpu.matmul %9, %0, %cst_9 {dimension_numbers = #tpu.dot_dimension_numbers<[1], [0], [0], [1], [0, 0, 1, 1], [], []>} : vector<50x150xf32>, vector<150x128xf32>, vector<50x128xf32> -> vector<50x128xf32>
    %c3 = arith.constant 3 : index
    %c0_10 = arith.constant 0 : index
    %c0_11 = arith.constant 0 : index
    %11 = vector.load %arg0[%c3, %c0_10, %c0_11] : memref<4x50x150xf32, #tpu.memory_space<vmem>>, vector<1x50x150xf32>
    %12 = vector.shape_cast %11 : vector<1x50x150xf32> to vector<50x150xf32>
    %cst_12 = arith.constant dense<0.000000e+00> : vector<50x128xf32>
    %13 = tpu.matmul %12, %0, %cst_12 {dimension_numbers = #tpu.dot_dimension_numbers<[1], [0], [0], [1], [0, 0, 1, 1], [], []>} : vector<50x150xf32>, vector<150x128xf32>, vector<50x128xf32> -> vector<50x128xf32>
    %14 = arith.maximumf %10, %13 : vector<50x128xf32>
    %15 = arith.maximumf %7, %14 : vector<50x128xf32>
    %c0_13 = arith.constant 0 : index
    %c0_14 = arith.constant 0 : index
    %16 = vector.load %arg2[%c0_13, %c0_14] : memref<1x128xf32, #tpu.memory_space<vmem>>, vector<1x128xf32>
    %17 = vector.broadcast %16 : vector<1x128xf32> to vector<50x128xf32>
    %18 = arith.addf %15, %17 : vector<50x128xf32>
    %cst_15 = arith.constant 0.000000e+00 : f32
    %19 = vector.broadcast %cst_15 : f32 to vector<50x128xf32>
    %20 = arith.maximumf %18, %19 : vector<50x128xf32>
    %c0_16 = arith.constant 0 : index
    %c0_17 = arith.constant 0 : index
    %21 = vector.load %arg3[%c0_16, %c0_17] : memref<50x128xf32, #tpu.memory_space<vmem>>, vector<50x128xf32>
    tpu.vector_store %arg3[%c0_16, %c0_17], %20 {strides = array<i32>} : memref<50x128xf32, #tpu.memory_space<vmem>>, vector<50x128xf32>,
    return
  }
}

module attributes {stable_mosaic.version = 11 : i64} {
  func.func @_fc_stack_kernel(%arg0: memref<2x3200xf32, #tpu.memory_space<vmem>>, %arg1: memref<3200x128xf32, #tpu.memory_space<vmem>>, %arg2: memref<1x128xf32, #tpu.memory_space<vmem>>, %arg3: memref<128x128xf32, #tpu.memory_space<vmem>>, %arg4: memref<1x128xf32, #tpu.memory_space<vmem>>, %arg5: memref<128x128xf32, #tpu.memory_space<vmem>>, %arg6: memref<1x128xf32, #tpu.memory_space<vmem>>, %arg7: memref<2x128xf32, #tpu.memory_space<vmem>>) attributes {dimension_semantics = [], scalar_prefetch = 0 : i64, scratch_operands = 0 : i64, tpu.core_type = #tpu.core_type<tc>} {
    %c0 = arith.constant 0 : index
    %c0_0 = arith.constant 0 : index
    %0 = vector.load %arg0[%c0, %c0_0] : memref<2x3200xf32, #tpu.memory_space<vmem>>, vector<2x3200xf32>
    %c0_1 = arith.constant 0 : index
    %c0_2 = arith.constant 0 : index
    %1 = vector.load %arg1[%c0_1, %c0_2] : memref<3200x128xf32, #tpu.memory_space<vmem>>, vector<3200x128xf32>
    %cst = arith.constant dense<0.000000e+00> : vector<2x128xf32>
    %2 = tpu.matmul %0, %1, %cst {dimension_numbers = #tpu.dot_dimension_numbers<[1], [0], [0], [1], [0, 0, 1, 1], [], []>} : vector<2x3200xf32>, vector<3200x128xf32>, vector<2x128xf32> -> vector<2x128xf32>
    %c0_3 = arith.constant 0 : index
    %c0_4 = arith.constant 0 : index
    %3 = vector.load %arg2[%c0_3, %c0_4] : memref<1x128xf32, #tpu.memory_space<vmem>>, vector<1x128xf32>
    %4 = vector.broadcast %3 : vector<1x128xf32> to vector<2x128xf32>
    %5 = arith.addf %2, %4 : vector<2x128xf32>
    %cst_5 = arith.constant 0.000000e+00 : f32
    %6 = vector.broadcast %cst_5 : f32 to vector<2x128xf32>
    %7 = arith.maximumf %5, %6 : vector<2x128xf32>
    %c0_6 = arith.constant 0 : index
    %c0_7 = arith.constant 0 : index
    %8 = vector.load %arg3[%c0_6, %c0_7] : memref<128x128xf32, #tpu.memory_space<vmem>>, vector<128x128xf32>
    %cst_8 = arith.constant dense<0.000000e+00> : vector<2x128xf32>
    %9 = tpu.matmul %7, %8, %cst_8 {dimension_numbers = #tpu.dot_dimension_numbers<[1], [0], [0], [1], [0, 0, 1, 1], [], []>} : vector<2x128xf32>, vector<128x128xf32>, vector<2x128xf32> -> vector<2x128xf32>
    %c0_9 = arith.constant 0 : index
    %c0_10 = arith.constant 0 : index
    %10 = vector.load %arg4[%c0_9, %c0_10] : memref<1x128xf32, #tpu.memory_space<vmem>>, vector<1x128xf32>
    %11 = vector.broadcast %10 : vector<1x128xf32> to vector<2x128xf32>
    %12 = arith.addf %9, %11 : vector<2x128xf32>
    %cst_11 = arith.constant 0.000000e+00 : f32
    %13 = vector.broadcast %cst_11 : f32 to vector<2x128xf32>
    %14 = arith.maximumf %12, %13 : vector<2x128xf32>
    %c0_12 = arith.constant 0 : index
    %c0_13 = arith.constant 0 : index
    %15 = vector.load %arg5[%c0_12, %c0_13] : memref<128x128xf32, #tpu.memory_space<vmem>>, vector<128x128xf32>
    %cst_14 = arith.constant dense<0.000000e+00> : vector<2x128xf32>
    %16 = tpu.matmul %14, %15, %cst_14 {dimension_numbers = #tpu.dot_dimension_numbers<[1], [0], [0], [1], [0, 0, 1, 1], [], []>} : vector<2x128xf32>, vector<128x128xf32>, vector<2x128xf32> -> vector<2x128xf32>
    %c0_15 = arith.constant 0 : index
    %c0_16 = arith.constant 0 : index
    %17 = vector.load %arg6[%c0_15, %c0_16] : memref<1x128xf32, #tpu.memory_space<vmem>>, vector<1x128xf32>
    %18 = vector.broadcast %17 : vector<1x128xf32> to vector<2x128xf32>
    %19 = arith.addf %16, %18 : vector<2x128xf32>
    %c0_17 = arith.constant 0 : index
    %c0_18 = arith.constant 0 : index
    %20 = vector.load %arg7[%c0_17, %c0_18] : memref<2x128xf32, #tpu.memory_space<vmem>>, vector<2x128xf32>
    tpu.vector_store %arg7[%c0_17, %c0_18], %19 {strides = array<i32>} : memref<2x128xf32, #tpu.memory_space<vmem>>, vector<2x128xf32>,
    return
  }
}

</mosaic_0001>

<llo_original>
// kernel: lenet_forward.3
$region0: #{lenet_forward.3}
  #allocation0 [shape = 'u32[]', space=smem, size = 0x4, offset = 0x4, fixed_abs, tag = 'smem constant byte address 0x4 - core index']
  #allocation1 [shape = 'u32[144,128]{1,0:T(1,128)}', space=vmem, size = 0x12000, scoped, tag = 'internal scratch']
  %s0 = inlined_call_operand.vmem [shape: f32[4,392,25], index: 0, kind: input, shape index: {}]
  %s1 = inlined_call_operand.vmem [shape: f32[25,128], index: 1, kind: input, shape index: {}]
  %s2 = inlined_call_operand.vmem [shape: f32[1,128], index: 2, kind: input, shape index: {}]
  %s3 = inlined_call_operand.vmem [shape: f32[392,128], index: 3, kind: output, shape index: {}]
  %s4 = sld [smem:[#allocation0]]
  $region22: #{lenet_forward.3} parent=0
    _
  %s6 = ssub.s32 1, %s4
  %s7 = scalar_select 0, %s6, %s4
  // Predicated region
  $region2: #{lenet_forward.3} parent=0 // pred_check
    _
  $region3: #{lenet_forward.3} parent=0 // pred_check_branch
    %9 = sbr.rel (0) target = $region5
  $region4: #{lenet_forward.3} parent=0 // pred_region
    _
  $region5: #{lenet_forward.3} parent=0 // pred_fallthru
    _
  // Predicated region
  $region6: #{lenet_forward.3} parent=0 // pred_check
    _
  $region7: #{lenet_forward.3} parent=0 // pred_check_branch
    %11 = sbr.rel (0) target = $region9
  $region8: #{lenet_forward.3} parent=0 // pred_region
    _
  $region9: #{lenet_forward.3} parent=0 // pred_fallthru
    _
  // Predicated region
  $region10: #{lenet_forward.3} parent=0 // pred_check
    _
  $region11: #{lenet_forward.3} parent=0 // pred_check_branch
    %13 = sbr.rel (0) target = $region13
  $region12: #{lenet_forward.3} parent=0 // pred_region
    _
  $region13: #{lenet_forward.3} parent=0 // pred_fallthru
    _
  %v14 = vld [vmem:[%s1] sm:$0xff]
  %v15 = vld [vmem:[%s1 + $0x8] sm:$0xff]
  %v16 = vld [vmem:[%s1 + $0x10] sm:$0xff]
  %v17 = vld [vmem:[%s1 + $0x18] sm:$0x1]
  %v18 = vld [vmem:[%s0] sm:$0xff]
  %v19 = vld [vmem:[%s0 + $0x8] sm:$0xff]
  %v20 = vld [vmem:[%s0 + $0x10] sm:$0xff]
  %v21 = vld [vmem:[%s0 + $0x18] sm:$0xff]
  %v22 = vld [vmem:[%s0 + $0x20] sm:$0xff]
  %v23 = vld [vmem:[%s0 + $0x28] sm:$0xff]
  %v24 = vld [vmem:[%s0 + $0x30] sm:$0xff]
  %v25 = vld [vmem:[%s0 + $0x38] sm:$0xff]
  %v26 = vld [vmem:[%s0 + $0x40] sm:$0xff]
  %v27 = vld [vmem:[%s0 + $0x48] sm:$0xff]
  %v28 = vld [vmem:[%s0 + $0x50] sm:$0xff]
  %v29 = vld [vmem:[%s0 + $0x58] sm:$0xff]
  %v30 = vld [vmem:[%s0 + $0x60] sm:$0xff]
  %v31 = vld [vmem:[%s0 + $0x68] sm:$0xff]
  %v32 = vld [vmem:[%s0 + $0x70] sm:$0xff]
  %v33 = vld [vmem:[%s0 + $0x78] sm:$0xff]
  %v34 = vld [vmem:[%s0 + $0x80] sm:$0xff]
  %v35 = vld [vmem:[%s0 + $0x88] sm:$0xff]
  %v36 = vld [vmem:[%s0 + $0x90] sm:$0xff]
  %v37 = vld [vmem:[%s0 + $0x98] sm:$0xff]
  %v38 = vld [vmem:[%s0 + $0xa0] sm:$0xff]
  %v39 = vld [vmem:[%s0 + $0xa8] sm:$0xff]
  %v40 = vld [vmem:[%s0 + $0xb0] sm:$0xff]
  %v41 = vld [vmem:[%s0 + $0xb8] sm:$0xff]
  %v42 = vld [vmem:[%s0 + $0xc0] sm:$0xff]
  %v43 = vld [vmem:[%s0 + $0xc8] sm:$0xff]
  %v44 = vld [vmem:[%s0 + $0xd0] sm:$0xff]
  %v45 = vld [vmem:[%s0 + $0xd8] sm:$0xff]
  %v46 = vld [vmem:[%s0 + $0xe0] sm:$0xff]
  %v47 = vld [vmem:[%s0 + $0xe8] sm:$0xff]
  %v48 = vld [vmem:[%s0 + $0xf0] sm:$0xff]
  %v49 = vld [vmem:[%s0 + $0xf8] sm:$0xff]
  %v50 = vld [vmem:[%s0 + $0x100] sm:$0xff]
  %v51 = vld [vmem:[%s0 + $0x108] sm:$0xff]
  %v52 = vld [vmem:[%s0 + $0x110] sm:$0xff]
  %v53 = vld [vmem:[%s0 + $0x118] sm:$0xff]
  %v54 = vld [vmem:[%s0 + $0x120] sm:$0xff]
  %v55 = vld [vmem:[%s0 + $0x128] sm:$0xff]
  %v56 = vld [vmem:[%s0 + $0x130] sm:$0xff]
  %v57 = vld [vmem:[%s0 + $0x138] sm:$0xff]
  %v58 = vld [vmem:[%s0 + $0x140] sm:$0xff]
  %v59 = vld [vmem:[%s0 + $0x148] sm:$0xff]
  %v60 = vld [vmem:[%s0 + $0x150] sm:$0xff]
  %v61 = vld [vmem:[%s0 + $0x158] sm:$0xff]
  %v62 = vld [vmem:[%s0 + $0x160] sm:$0xff]
  %v63 = vld [vmem:[%s0 + $0x168] sm:$0xff]
  %v64 = vld [vmem:[%s0 + $0x170] sm:$0xff]
  %v65 = vld [vmem:[%s0 + $0x178] sm:$0xff]
  %v66 = vld [vmem:[%s0 + $0x180] sm:$0xff]
  %vm67 = vcmask 203776
  %v69 = vsel %vm67, %v18, 0
  %v72 = vsel %vm67, %v19, 0
  %v75 = vsel %vm67, %v20, 0
  %v78 = vsel %vm67, %v21, 0
  %v81 = vsel %vm67, %v22, 0
  %v84 = vsel %vm67, %v23, 0
  %v87 = vsel %vm67, %v24, 0
  %v90 = vsel %vm67, %v25, 0
  %v93 = vsel %vm67, %v26, 0
  %v96 = vsel %vm67, %v27, 0
  %v99 = vsel %vm67, %v28, 0
  %v102 = vsel %vm67, %v29, 0
  %v105 = vsel %vm67, %v30, 0
  %v108 = vsel %vm67, %v31, 0
  %v111 = vsel %vm67, %v32, 0
  %v114 = vsel %vm67, %v33, 0
  %v117 = vsel %vm67, %v34, 0
  %v120 = vsel %vm67, %v35, 0
  %v123 = vsel %vm67, %v36, 0
  %v126 = vsel %vm67, %v37, 0
  %v129 = vsel %vm67, %v38, 0
  %v132 = vsel %vm67, %v39, 0
  %v135 = vsel %vm67, %v40, 0
  %v138 = vsel %vm67, %v41, 0
  %v141 = vsel %vm67, %v42, 0
  %v144 = vsel %vm67, %v43, 0
  %v147 = vsel %vm67, %v44, 0
  %v150 = vsel %vm67, %v45, 0
  %v153 = vsel %vm67, %v46, 0
  %v156 = vsel %vm67, %v47, 0
  %v159 = vsel %vm67, %v48, 0
  %v162 = vsel %vm67, %v49, 0
  %v165 = vsel %vm67, %v50, 0
  %v168 = vsel %vm67, %v51, 0
  %v171 = vsel %vm67, %v52, 0
  %v174 = vsel %vm67, %v53, 0
  %v177 = vsel %vm67, %v54, 0
  %v180 = vsel %vm67, %v55, 0
  %v183 = vsel %vm67, %v56, 0
  %v186 = vsel %vm67, %v57, 0
  %v189 = vsel %vm67, %v58, 0
  %v192 = vsel %vm67, %v59, 0
  %v195 = vsel %vm67, %v60, 0
  %v198 = vsel %vm67, %v61, 0
  %v201 = vsel %vm67, %v62, 0
  %v204 = vsel %vm67, %v63, 0
  %v207 = vsel %vm67, %v64, 0
  %v210 = vsel %vm67, %v65, 0
  %v213 = vsel %vm67, %v66, 0
  %vm215 = vcmask 1040384
  %v217 = vsel %vm215, %v17, 0
  %219 = vmatprep.subr.mxu0 0.0
  %220 = vmatpush1.msra.mxu0 0.0
  %221 = vmatprep.subr.mxu0 0.0
  %222 = vmatpush1.msra.mxu0 0.0
  %223 = vmatprep.subr.mxu0 0.0
  %224 = vmatpush1.msra.mxu0 0.0
  %225 = vmatprep.subr.mxu0 0.0
  %226 = vmatpush1.msra.mxu0 0.0
  %227 = vmatprep.subr.mxu0 0.0
  %228 = vmatpush1.msra.mxu0 0.0
  %229 = vmatprep.subr.mxu0 0.0
  %230 = vmatpush1.msra.mxu0 0.0
  %231 = vmatprep.subr.mxu0 0.0
  %232 = vmatpush1.msra.mxu0 0.0
  %233 = vmatprep.subr.mxu0 0.0
  %234 = vmatpush1.msra.mxu0 0.0
  %235 = vmatprep.subr.mxu0 0.0
  %236 = vmatpush1.msra.mxu0 0.0
  %237 = vmatprep.subr.mxu0 0.0
  %238 = vmatpush1.msra.mxu0 0.0
  %239 = vmatprep.subr.mxu0 0.0
  %240 = vmatpush1.msra.mxu0 0.0
  %241 = vmatprep.subr.mxu0 0.0
  %242 = vmatpush1.msra.mxu0 0.0
  %243 = vmatprep.subr.mxu0 0.0
  %244 = vmatpush1.msra.mxu0 %v217
  %245 = vmatprep.subr.mxu0 0.0
  %246 = vmatpush1.msra.mxu0 %v16
  %247 = vmatprep.subr.mxu0 0.0
  %248 = vmatpush1.msra.mxu0 %v15
  %249 = vmatprep.subr.mxu0 0.0
  %250 = vmatpush1.msra.mxu0 %v14
  %251 = vmatprep.subr.mxu0 0.0
  %252 = vmatpush2.msra.mxu0 0.0
  %253 = vmatprep.subr.mxu0 0.0
  %254 = vmatpush2.msra.mxu0 0.0
  %255 = vmatprep.subr.mxu0 0.0
  %256 = vmatpush2.msra.mxu0 0.0
  %257 = vmatprep.subr.mxu0 0.0
  %258 = vmatpush2.msra.mxu0 0.0
  %259 = vmatprep.subr.mxu0 0.0
  %260 = vmatpush2.msra.mxu0 0.0
  %261 = vmatprep.subr.mxu0 0.0
  %262 = vmatpush2.msra.mxu0 0.0
  %263 = vmatprep.subr.mxu0 0.0
  %264 = vmatpush2.msra.mxu0 0.0
  %265 = vmatprep.subr.mxu0 0.0
  %266 = vmatpush2.msra.mxu0 0.0
  %267 = vmatprep.subr.mxu0 0.0
  %268 = vmatpush2.msra.mxu0 0.0
  %269 = vmatprep.subr.mxu0 0.0
  %270 = vmatpush2.msra.mxu0 0.0
  %271 = vmatprep.subr.mxu0 0.0
  %272 = vmatpush2.msra.mxu0 0.0
  %273 = vmatprep.subr.mxu0 0.0
  %274 = vmatpush2.msra.mxu0 0.0
  %275 = vmatprep.subr.mxu0 0.0
  %276 = vmatpush2.msra.mxu0 0.0
  %277 = vmatprep.subr.mxu0 0.0
  %278 = vmatpush2.msra.mxu0 0.0
  %279 = vmatprep.subr.mxu0 0.0
  %280 = vmatpush2.msra.mxu0 0.0
  %281 = vmatprep.subr.mxu0 0.0
  %282 = vmatpush2.msra.mxu0 0.0
  %283 = vmatprep.mubr.f32.mxu0 0.0
  %284 = vmatmul.mubr.f32.gmra.mxu0 %v69
  %v285 = vpop.f32.mrf.mxu0
  %v286 = vadd.f32 0.0, %v285
  %v287 = vpop.f32.mrf.mxu0
  %288 = vmatprep.mubr.f32.mxu0 0.0
  %289 = vmatmul.mubr.f32.gmra.mxu0 %v72
  %v290 = vpop.f32.mrf.mxu0
  %v291 = vadd.f32 0.0, %v290
  %v292 = vpop.f32.mrf.mxu0
  %293 = vmatprep.mubr.f32.mxu0 0.0
  %294 = vmatmul.mubr.f32.gmra.mxu0 %v75
  %v295 = vpop.f32.mrf.mxu0
  %v296 = vadd.f32 0.0, %v295
  %v297 = vpop.f32.mrf.mxu0
  %298 = vmatprep.mubr.f32.mxu0 0.0
  %299 = vmatmul.mubr.f32.gmra.mxu0 %v78
  %v300 = vpop.f32.mrf.mxu0
  %v301 = vadd.f32 0.0, %v300
  %v302 = vpop.f32.mrf.mxu0
  %303 = vmatprep.mubr.f32.mxu0 0.0
  %304 = vmatmul.mubr.f32.gmra.mxu0 %v81
  %v305 = vpop.f32.mrf.mxu0
  %v306 = vadd.f32 0.0, %v305
  %v307 = vpop.f32.mrf.mxu0
  %308 = vmatprep.mubr.f32.mxu0 0.0
  %309 = vmatmul.mubr.f32.gmra.mxu0 %v84
  %v310 = vpop.f32.mrf.mxu0
  %v311 = vadd.f32 0.0, %v310
  %v312 = vpop.f32.mrf.mxu0
  %313 = vmatprep.mubr.f32.mxu0 0.0
  %314 = vmatmul.mubr.f32.gmra.mxu0 %v87
  %v315 = vpop.f32.mrf.mxu0
  %v316 = vadd.f32 0.0, %v315
  %v317 = vpop.f32.mrf.mxu0
  %318 = vmatprep.mubr.f32.mxu0 0.0
  %319 = vmatmul.mubr.f32.gmra.mxu0 %v90
  %v320 = vpop.f32.mrf.mxu0
  %v321 = vadd.f32 0.0, %v320
  %v322 = vpop.f32.mrf.mxu0
  %323 = vmatprep.mubr.f32.mxu0 0.0
  %324 = vmatmul.mubr.f32.gmra.mxu0 %v93
  %v325 = vpop.f32.mrf.mxu0
  %v326 = vadd.f32 0.0, %v325
  %v327 = vpop.f32.mrf.mxu0
  %328 = vmatprep.mubr.f32.mxu0 0.0
  %329 = vmatmul.mubr.f32.gmra.mxu0 %v96
  %v330 = vpop.f32.mrf.mxu0
  %v331 = vadd.f32 0.0, %v330
  %v332 = vpop.f32.mrf.mxu0
  %333 = vmatprep.mubr.f32.mxu0 0.0
  %334 = vmatmul.mubr.f32.gmra.mxu0 %v99
  %v335 = vpop.f32.mrf.mxu0
  %v336 = vadd.f32 0.0, %v335
  %v337 = vpop.f32.mrf.mxu0
  %338 = vmatprep.mubr.f32.mxu0 0.0
  %339 = vmatmul.mubr.f32.gmra.mxu0 %v102
  %v340 = vpop.f32.mrf.mxu0
  %v341 = vadd.f32 0.0, %v340
  %v342 = vpop.f32.mrf.mxu0
  %343 = vmatprep.mubr.f32.mxu0 0.0
  %344 = vmatmul.mubr.f32.gmra.mxu0 %v105
  %v345 = vpop.f32.mrf.mxu0
  %v346 = vadd.f32 0.0, %v345
  %v347 = vpop.f32.mrf.mxu0
  %348 = vmatprep.mubr.f32.mxu0 0.0
  %349 = vmatmul.mubr.f32.gmra.mxu0 %v108
  %v350 = vpop.f32.mrf.mxu0
  %v351 = vadd.f32 0.0, %v350
  %v352 = vpop.f32.mrf.mxu0
  %353 = vmatprep.mubr.f32.mxu0 0.0
  %354 = vmatmul.mubr.f32.gmra.mxu0 %v111
  %v355 = vpop.f32.mrf.mxu0
  %v356 = vadd.f32 0.0, %v355
  %v357 = vpop.f32.mrf.mxu0
  %358 = vmatprep.mubr.f32.mxu0 0.0
  %359 = vmatmul.mubr.f32.gmra.mxu0 %v114
  %v360 = vpop.f32.mrf.mxu0
  %v361 = vadd.f32 0.0, %v360
  %v362 = vpop.f32.mrf.mxu0
  %363 = vmatprep.mubr.f32.mxu0 0.0
  %364 = vmatmul.mubr.f32.gmra.mxu0 %v117
  %v365 = vpop.f32.mrf.mxu0
  %v366 = vadd.f32 0.0, %v365
  %v367 = vpop.f32.mrf.mxu0
  %368 = vmatprep.mubr.f32.mxu0 0.0
  %369 = vmatmul.mubr.f32.gmra.mxu0 %v120
  %v370 = vpop.f32.mrf.mxu0
  %v371 = vadd.f32 0.0, %v370
  %v372 = vpop.f32.mrf.mxu0
  %373 = vmatprep.mubr.f32.mxu0 0.0
  %374 = vmatmul.mubr.f32.gmra.mxu0 %v123
  %v375 = vpop.f32.mrf.mxu0
  %v376 = vadd.f32 0.0, %v375
  %v377 = vpop.f32.mrf.mxu0
  %378 = vmatprep.mubr.f32.mxu0 0.0
  %379 = vmatmul.mubr.f32.gmra.mxu0 %v126
  %v380 = vpop.f32.mrf.mxu0
  %v381 = vadd.f32 0.0, %v380
  %v382 = vpop.f32.mrf.mxu0
  %383 = vmatprep.mubr.f32.mxu0 0.0
  %384 = vmatmul.mubr.f32.gmra.mxu0 %v129
  %v385 = vpop.f32.mrf.mxu0
  %v386 = vadd.f32 0.0, %v385
  %v387 = vpop.f32.mrf.mxu0
  %388 = vmatprep.mubr.f32.mxu0 0.0
  %389 = vmatmul.mubr.f32.gmra.mxu0 %v132
  %v390 = vpop.f32.mrf.mxu0
  %v391 = vadd.f32 0.0, %v390
  %v392 = vpop.f32.mrf.mxu0
  %393 = vmatprep.mubr.f32.mxu0 0.0
  %394 = vmatmul.mubr.f32.gmra.mxu0 %v135
  %v395 = vpop.f32.mrf.mxu0
  %v396 = vadd.f32 0.0, %v395
  %v397 = vpop.f32.mrf.mxu0
  %398 = vmatprep.mubr.f32.mxu0 0.0
  %399 = vmatmul.mubr.f32.gmra.mxu0 %v138
  %v400 = vpop.f32.mrf.mxu0
  %v401 = vadd.f32 0.0, %v400
  %v402 = vpop.f32.mrf.mxu0
  %403 = vmatprep.mubr.f32.mxu0 0.0
  %404 = vmatmul.mubr.f32.gmra.mxu0 %v141
  %v405 = vpop.f32.mrf.mxu0
  %v406 = vadd.f32 0.0, %v405
  %v407 = vpop.f32.mrf.mxu0
  %408 = vmatprep.mubr.f32.mxu0 0.0
  %409 = vmatmul.mubr.f32.gmra.mxu0 %v144
  %v410 = vpop.f32.mrf.mxu0
  %v411 = vadd.f32 0.0, %v410
  %v412 = vpop.f32.mrf.mxu0
  %413 = vmatprep.mubr.f32.mxu0 0.0
  %414 = vmatmul.mubr.f32.gmra.mxu0 %v147
  %v415 = vpop.f32.mrf.mxu0
  %v416 = vadd.f32 0.0, %v415
  %v417 = vpop.f32.mrf.mxu0
  %418 = vmatprep.mubr.f32.mxu0 0.0
  %419 = vmatmul.mubr.f32.gmra.mxu0 %v150
  %v420 = vpop.f32.mrf.mxu0
  %v421 = vadd.f32 0.0, %v420
  %v422 = vpop.f32.mrf.mxu0
  %423 = vmatprep.mubr.f32.mxu0 0.0
  %424 = vmatmul.mubr.f32.gmra.mxu0 %v153
  %v425 = vpop.f32.mrf.mxu0
  %v426 = vadd.f32 0.0, %v425
  %v427 = vpop.f32.mrf.mxu0
  %428 = vmatprep.mubr.f32.mxu0 0.0
  %429 = vmatmul.mubr.f32.gmra.mxu0 %v156
  %v430 = vpop.f32.mrf.mxu0
  %v431 = vadd.f32 0.0, %v430
  %v432 = vpop.f32.mrf.mxu0
  %433 = vmatprep.mubr.f32.mxu0 0.0
  %434 = vmatmul.mubr.f32.gmra.mxu0 %v159
  %v435 = vpop.f32.mrf.mxu0
  %v436 = vadd.f32 0.0, %v435
  %v437 = vpop.f32.mrf.mxu0
  %438 = vmatprep.mubr.f32.mxu0 0.0
  %439 = vmatmul.mubr.f32.gmra.mxu0 %v162
  %v440 = vpop.f32.mrf.mxu0
  %v441 = vadd.f32 0.0, %v440
  %v442 = vpop.f32.mrf.mxu0
  %443 = vmatprep.mubr.f32.mxu0 0.0
  %444 = vmatmul.mubr.f32.gmra.mxu0 %v165
  %v445 = vpop.f32.mrf.mxu0
  %v446 = vadd.f32 0.0, %v445
  %v447 = vpop.f32.mrf.mxu0
  %448 = vmatprep.mubr.f32.mxu0 0.0
  %449 = vmatmul.mubr.f32.gmra.mxu0 %v168
  %v450 = vpop.f32.mrf.mxu0
  %v451 = vadd.f32 0.0, %v450
  %v452 = vpop.f32.mrf.mxu0
  %453 = vmatprep.mubr.f32.mxu0 0.0
  %454 = vmatmul.mubr.f32.gmra.mxu0 %v171
  %v455 = vpop.f32.mrf.mxu0
  %v456 = vadd.f32 0.0, %v455
  %v457 = vpop.f32.mrf.mxu0
  %458 = vmatprep.mubr.f32.mxu0 0.0
  %459 = vmatmul.mubr.f32.gmra.mxu0 %v174
  %v460 = vpop.f32.mrf.mxu0
  %v461 = vadd.f32 0.0, %v460
  %v462 = vpop.f32.mrf.mxu0
  %463 = vmatprep.mubr.f32.mxu0 0.0
  %464 = vmatmul.mubr.f32.gmra.mxu0 %v177
  %v465 = vpop.f32.mrf.mxu0
  %v466 = vadd.f32 0.0, %v465
  %v467 = vpop.f32.mrf.mxu0
  %468 = vmatprep.mubr.f32.mxu0 0.0
  %469 = vmatmul.mubr.f32.gmra.mxu0 %v180
  %v470 = vpop.f32.mrf.mxu0
  %v471 = vadd.f32 0.0, %v470
  %v472 = vpop.f32.mrf.mxu0
  %473 = vmatprep.mubr.f32.mxu0 0.0
  %474 = vmatmul.mubr.f32.gmra.mxu0 %v183
  %v475 = vpop.f32.mrf.mxu0
  %v476 = vadd.f32 0.0, %v475
  %v477 = vpop.f32.mrf.mxu0
  %478 = vmatprep.mubr.f32.mxu0 0.0
  %479 = vmatmul.mubr.f32.gmra.mxu0 %v186
  %v480 = vpop.f32.mrf.mxu0
  %v481 = vadd.f32 0.0, %v480
  %v482 = vpop.f32.mrf.mxu0
  %483 = vmatprep.mubr.f32.mxu0 0.0
  %484 = vmatmul.mubr.f32.gmra.mxu0 %v189
  %v485 = vpop.f32.mrf.mxu0
  %v486 = vadd.f32 0.0, %v485
  %v487 = vpop.f32.mrf.mxu0
  %488 = vmatprep.mubr.f32.mxu0 0.0
  %489 = vmatmul.mubr.f32.gmra.mxu0 %v192
  %v490 = vpop.f32.mrf.mxu0
  %v491 = vadd.f32 0.0, %v490
  %v492 = vpop.f32.mrf.mxu0
  %493 = vmatprep.mubr.f32.mxu0 0.0
  %494 = vmatmul.mubr.f32.gmra.mxu0 %v195
  %v495 = vpop.f32.mrf.mxu0
  %v496 = vadd.f32 0.0, %v495
  %v497 = vpop.f32.mrf.mxu0
  %498 = vmatprep.mubr.f32.mxu0 0.0
  %499 = vmatmul.mubr.f32.gmra.mxu0 %v198
  %v500 = vpop.f32.mrf.mxu0
  %v501 = vadd.f32 0.0, %v500
  %v502 = vpop.f32.mrf.mxu0
  %503 = vmatprep.mubr.f32.mxu0 0.0
  %504 = vmatmul.mubr.f32.gmra.mxu0 %v201
  %v505 = vpop.f32.mrf.mxu0
  %v506 = vadd.f32 0.0, %v505
  %v507 = vpop.f32.mrf.mxu0
  %508 = vmatprep.mubr.f32.mxu0 0.0
  %509 = vmatmul.mubr.f32.gmra.mxu0 %v204
  %v510 = vpop.f32.mrf.mxu0
  %v511 = vadd.f32 0.0, %v510
  %v512 = vpop.f32.mrf.mxu0
  %513 = vmatprep.mubr.f32.mxu0 0.0
  %514 = vmatmul.mubr.f32.gmra.mxu0 %v207
  %v515 = vpop.f32.mrf.mxu0
  %v516 = vadd.f32 0.0, %v515
  %v517 = vpop.f32.mrf.mxu0
  %518 = vmatprep.mubr.f32.mxu0 0.0
  %519 = vmatmul.mubr.f32.gmra.mxu0 %v210
  %v520 = vpop.f32.mrf.mxu0
  %v521 = vadd.f32 0.0, %v520
  %v522 = vpop.f32.mrf.mxu0
  %523 = vmatprep.mubr.f32.mxu0 0.0
  %524 = vmatmul.mubr.f32.gmra.mxu0 %v213
  %v525 = vpop.f32.mrf.mxu0
  %v526 = vadd.f32 0.0, %v525
  %v527 = vpop.f32.mrf.mxu0
  %528 = vdwg.mxu0
  %s529 = scalar_lea.vmem %s0, 392
  %v530 = vld [vmem:[%s529] sm:$0xff]
  %v531 = vld [vmem:[%s529 + $0x8] sm:$0xff]
  %v532 = vld [vmem:[%s529 + $0x10] sm:$0xff]
  %v533 = vld [vmem:[%s529 + $0x18] sm:$0xff]
  %v534 = vld [vmem:[%s529 + $0x20] sm:$0xff]
  %v535 = vld [vmem:[%s529 + $0x28] sm:$0xff]
  %v536 = vld [vmem:[%s529 + $0x30] sm:$0xff]
  %v537 = vld [vmem:[%s529 + $0x38] sm:$0xff]
  %v538 = vld [vmem:[%s529 + $0x40] sm:$0xff]
  %v539 = vld [vmem:[%s529 + $0x48] sm:$0xff]
  %v540 = vld [vmem:[%s529 + $0x50] sm:$0xff]
  %v541 = vld [vmem:[%s529 + $0x58] sm:$0xff]
  %v542 = vld [vmem:[%s529 + $0x60] sm:$0xff]
  %v543 = vld [vmem:[%s529 + $0x68] sm:$0xff]
  %v544 = vld [vmem:[%s529 + $0x70] sm:$0xff]
  %v545 = vld [vmem:[%s529 + $0x78] sm:$0xff]
  %v546 = vld [vmem:[%s529 + $0x80] sm:$0xff]
  %v547 = vld [vmem:[%s529 + $0x88] sm:$0xff]
  %v548 = vld [vmem:[%s529 + $0x90] sm:$0xff]
  %v549 = vld [vmem:[%s529 + $0x98] sm:$0xff]
  %v550 = vld [vmem:[%s529 + $0xa0] sm:$0xff]
  %v551 = vld [vmem:[%s529 + $0xa8] sm:$0xff]
  %v552 = vld [vmem:[%s529 + $0xb0] sm:$0xff]
  %v553 = vld [vmem:[%s529 + $0xb8] sm:$0xff]
  %v554 = vld [vmem:[%s529 + $0xc0] sm:$0xff]
  %v555 = vld [vmem:[%s529 + $0xc8] sm:$0xff]
  %v556 = vld [vmem:[%s529 + $0xd0] sm:$0xff]
  %v557 = vld [vmem:[%s529 + $0xd8] sm:$0xff]
  %v558 = vld [vmem:[%s529 + $0xe0] sm:$0xff]
  %v559 = vld [vmem:[%s529 + $0xe8] sm:$0xff]
  %v560 = vld [vmem:[%s529 + $0xf0] sm:$0xff]
  %v561 = vld [vmem:[%s529 + $0xf8] sm:$0xff]
  %v562 = vld [vmem:[%s529 + $0x100] sm:$0xff]
  %v563 = vld [vmem:[%s529 + $0x108] sm:$0xff]
  %v564 = vld [vmem:[%s529 + $0x110] sm:$0xff]
  %v565 = vld [vmem:[%s529 + $0x118] sm:$0xff]
  %v566 = vld [vmem:[%s529 + $0x120] sm:$0xff]
  %v567 = vld [vmem:[%s529 + $0x128] sm:$0xff]
  %v568 = vld [vmem:[%s529 + $0x130] sm:$0xff]
  %v569 = vld [vmem:[%s529 + $0x138] sm:$0xff]
  %v570 = vld [vmem:[%s529 + $0x140] sm:$0xff]
  %v571 = vld [vmem:[%s529 + $0x148] sm:$0xff]
  %v572 = vld [vmem:[%s529 + $0x150] sm:$0xff]
  %v573 = vld [vmem:[%s529 + $0x158] sm:$0xff]
  %v574 = vld [vmem:[%s529 + $0x160] sm:$0xff]
  %v575 = vld [vmem:[%s529 + $0x168] sm:$0xff]
  %v576 = vld [vmem:[%s529 + $0x170] sm:$0xff]
  %v577 = vld [vmem:[%s529 + $0x178] sm:$0xff]
  %v578 = vld [vmem:[%s529 + $0x180] sm:$0xff]
  %v580 = vsel %vm67, %v530, 0
  %v583 = vsel %vm67, %v531, 0
  %v586 = vsel %vm67, %v532, 0
  %v589 = vsel %vm67, %v533, 0
  %v592 = vsel %vm67, %v534, 0
  %v595 = vsel %vm67, %v535, 0
  %v598 = vsel %vm67, %v536, 0
  %v601 = vsel %vm67, %v537, 0
  %v604 = vsel %vm67, %v538, 0
  %v607 = vsel %vm67, %v539, 0
  %v610 = vsel %vm67, %v540, 0
  %v613 = vsel %vm67, %v541, 0
  %v616 = vsel %vm67, %v542, 0
  %v619 = vsel %vm67, %v543, 0
  %v622 = vsel %vm67, %v544, 0
  %v625 = vsel %vm67, %v545, 0
  %v628 = vsel %vm67, %v546, 0
  %v631 = vsel %vm67, %v547, 0
  %v634 = vsel %vm67, %v548, 0
  %v637 = vsel %vm67, %v549, 0
  %v640 = vsel %vm67, %v550, 0
  %v643 = vsel %vm67, %v551, 0
  %v646 = vsel %vm67, %v552, 0
  %v649 = vsel %vm67, %v553, 0
  %v652 = vsel %vm67, %v554, 0
  %v655 = vsel %vm67, %v555, 0
  %v658 = vsel %vm67, %v556, 0
  %v661 = vsel %vm67, %v557, 0
  %v664 = vsel %vm67, %v558, 0
  %v667 = vsel %vm67, %v559, 0
  %v670 = vsel %vm67, %v560, 0
  %v673 = vsel %vm67, %v561, 0
  %v676 = vsel %vm67, %v562, 0
  %v679 = vsel %vm67, %v563, 0
  %v682 = vsel %vm67, %v564, 0
  %v685 = vsel %vm67, %v565, 0
  %v688 = vsel %vm67, %v566, 0
  %v691 = vsel %vm67, %v567, 0
  %v694 = vsel %vm67, %v568, 0
  %v697 = vsel %vm67, %v569, 0
  %v700 = vsel %vm67, %v570, 0
  %v703 = vsel %vm67, %v571, 0
  %v706 = vsel %vm67, %v572, 0
  %v709 = vsel %vm67, %v573, 0
  %v712 = vsel %vm67, %v574, 0
  %v715 = vsel %vm67, %v575, 0
  %v718 = vsel %vm67, %v576, 0
  %v721 = vsel %vm67, %v577, 0
  %v724 = vsel %vm67, %v578, 0
  %726 = vmatprep.subr.mxu0 0.0
  %727 = vmatpush1.msra.mxu0 0.0
  %728 = vmatprep.subr.mxu0 0.0
  %729 = vmatpush1.msra.mxu0 0.0
  %730 = vmatprep.subr.mxu0 0.0
  %731 = vmatpush1.msra.mxu0 0.0
  %732 = vmatprep.subr.mxu0 0.0
  %733 = vmatpush1.msra.mxu0 0.0
  %734 = vmatprep.subr.mxu0 0.0
  %735 = vmatpush1.msra.mxu0 0.0
  %736 = vmatprep.subr.mxu0 0.0
  %737 = vmatpush1.msra.mxu0 0.0
  %738 = vmatprep.subr.mxu0 0.0
  %739 = vmatpush1.msra.mxu0 0.0
  %740 = vmatprep.subr.mxu0 0.0
  %741 = vmatpush1.msra.mxu0 0.0
  %742 = vmatprep.subr.mxu0 0.0
  %743 = vmatpush1.msra.mxu0 0.0
  %744 = vmatprep.subr.mxu0 0.0
  %745 = vmatpush1.msra.mxu0 0.0
  %746 = vmatprep.subr.mxu0 0.0
  %747 = vmatpush1.msra.mxu0 0.0
  %748 = vmatprep.subr.mxu0 0.0
  %749 = vmatpush1.msra.mxu0 0.0
  %750 = vmatprep.subr.mxu0 0.0
  %751 = vmatpush1.msra.mxu0 %v217
  %752 = vmatprep.subr.mxu0 0.0
  %753 = vmatpush1.msra.mxu0 %v16
  %754 = vmatprep.subr.mxu0 0.0
  %755 = vmatpush1.msra.mxu0 %v15
  %756 = vmatprep.subr.mxu0 0.0
  %757 = vmatpush1.msra.mxu0 %v14
  %758 = vmatprep.subr.mxu0 0.0
  %759 = vmatpush2.msra.mxu0 0.0
  %760 = vmatprep.subr.mxu0 0.0
  %761 = vmatpush2.msra.mxu0 0.0
  %762 = vmatprep.subr.mxu0 0.0
  %763 = vmatpush2.msra.mxu0 0.0
  %764 = vmatprep.subr.mxu0 0.0
  %765 = vmatpush2.msra.mxu0 0.0
  %766 = vmatprep.subr.mxu0 0.0
  %767 = vmatpush2.msra.mxu0 0.0
  %768 = vmatprep.subr.mxu0 0.0
  %769 = vmatpush2.msra.mxu0 0.0
  %770 = vmatprep.subr.mxu0 0.0
  %771 = vmatpush2.msra.mxu0 0.0
  %772 = vmatprep.subr.mxu0 0.0
  %773 = vmatpush2.msra.mxu0 0.0
  %774 = vmatprep.subr.mxu0 0.0
  %775 = vmatpush2.msra.mxu0 0.0
  %776 = vmatprep.subr.mxu0 0.0
  %777 = vmatpush2.msra.mxu0 0.0
  %778 = vmatprep.subr.mxu0 0.0
  %779 = vmatpush2.msra.mxu0 0.0
  %780 = vmatprep.subr.mxu0 0.0
  %781 = vmatpush2.msra.mxu0 0.0
  %782 = vmatprep.subr.mxu0 0.0
  %783 = vmatpush2.msra.mxu0 0.0
  %784 = vmatprep.subr.mxu0 0.0
  %785 = vmatpush2.msra.mxu0 0.0
  %786 = vmatprep.subr.mxu0 0.0
  %787 = vmatpush2.msra.mxu0 0.0
  %788 = vmatprep.subr.mxu0 0.0
  %789 = vmatpush2.msra.mxu0 0.0
  %790 = vmatprep.mubr.f32.mxu0 0.0
  %791 = vmatmul.mubr.f32.gmra.mxu0 %v580
  %v792 = vpop.f32.mrf.mxu0
  %v793 = vadd.f32 0.0, %v792
  %v794 = vpop.f32.mrf.mxu0
  %795 = vmatprep.mubr.f32.mxu0 0.0
  %796 = vmatmul.mubr.f32.gmra.mxu0 %v583
  %v797 = vpop.f32.mrf.mxu0
  %v798 = vadd.f32 0.0, %v797
  %v799 = vpop.f32.mrf.mxu0
  %800 = vmatprep.mubr.f32.mxu0 0.0
  %801 = vmatmul.mubr.f32.gmra.mxu0 %v586
  %v802 = vpop.f32.mrf.mxu0
  %v803 = vadd.f32 0.0, %v802
  %v804 = vpop.f32.mrf.mxu0
  %805 = vmatprep.mubr.f32.mxu0 0.0
  %806 = vmatmul.mubr.f32.gmra.mxu0 %v589
  %v807 = vpop.f32.mrf.mxu0
  %v808 = vadd.f32 0.0, %v807
  %v809 = vpop.f32.mrf.mxu0
  %810 = vmatprep.mubr.f32.mxu0 0.0
  %811 = vmatmul.mubr.f32.gmra.mxu0 %v592
  %v812 = vpop.f32.mrf.mxu0
  %v813 = vadd.f32 0.0, %v812
  %v814 = vpop.f32.mrf.mxu0
  %815 = vmatprep.mubr.f32.mxu0 0.0
  %816 = vmatmul.mubr.f32.gmra.mxu0 %v595
  %v817 = vpop.f32.mrf.mxu0
  %v818 = vadd.f32 0.0, %v817
  %v819 = vpop.f32.mrf.mxu0
  %820 = vmatprep.mubr.f32.mxu0 0.0
  %821 = vmatmul.mubr.f32.gmra.mxu0 %v598
  %v822 = vpop.f32.mrf.mxu0
  %v823 = vadd.f32 0.0, %v822
  %v824 = vpop.f32.mrf.mxu0
  %825 = vmatprep.mubr.f32.mxu0 0.0
  %826 = vmatmul.mubr.f32.gmra.mxu0 %v601
  %v827 = vpop.f32.mrf.mxu0
  %v828 = vadd.f32 0.0, %v827
  %v829 = vpop.f32.mrf.mxu0
  %830 = vmatprep.mubr.f32.mxu0 0.0
  %831 = vmatmul.mubr.f32.gmra.mxu0 %v604
  %v832 = vpop.f32.mrf.mxu0
  %v833 = vadd.f32 0.0, %v832
  %v834 = vpop.f32.mrf.mxu0
  %835 = vmatprep.mubr.f32.mxu0 0.0
  %836 = vmatmul.mubr.f32.gmra.mxu0 %v607
  %v837 = vpop.f32.mrf.mxu0
  %v838 = vadd.f32 0.0, %v837
  %v839 = vpop.f32.mrf.mxu0
  %840 = vmatprep.mubr.f32.mxu0 0.0
  %841 = vmatmul.mubr.f32.gmra.mxu0 %v610
  %v842 = vpop.f32.mrf.mxu0
  %v843 = vadd.f32 0.0, %v842
  %v844 = vpop.f32.mrf.mxu0
  %845 = vmatprep.mubr.f32.mxu0 0.0
  %846 = vmatmul.mubr.f32.gmra.mxu0 %v613
  %v847 = vpop.f32.mrf.mxu0
  %v848 = vadd.f32 0.0, %v847
  %v849 = vpop.f32.mrf.mxu0
  %850 = vmatprep.mubr.f32.mxu0 0.0
  %851 = vmatmul.mubr.f32.gmra.mxu0 %v616
  %v852 = vpop.f32.mrf.mxu0
  %v853 = vadd.f32 0.0, %v852
  %v854 = vpop.f32.mrf.mxu0
  %855 = vmatprep.mubr.f32.mxu0 0.0
  %856 = vmatmul.mubr.f32.gmra.mxu0 %v619
  %v857 = vpop.f32.mrf.mxu0
  %v858 = vadd.f32 0.0, %v857
  %v859 = vpop.f32.mrf.mxu0
  %860 = vmatprep.mubr.f32.mxu0 0.0
  %861 = vmatmul.mubr.f32.gmra.mxu0 %v622
  %v862 = vpop.f32.mrf.mxu0
  %v863 = vadd.f32 0.0, %v862
  %v864 = vpop.f32.mrf.mxu0
  %865 = vmatprep.mubr.f32.mxu0 0.0
  %866 = vmatmul.mubr.f32.gmra.mxu0 %v625
  %v867 = vpop.f32.mrf.mxu0
  %v868 = vadd.f32 0.0, %v867
  %v869 = vpop.f32.mrf.mxu0
  %870 = vmatprep.mubr.f32.mxu0 0.0
  %871 = vmatmul.mubr.f32.gmra.mxu0 %v628
  %v872 = vpop.f32.mrf.mxu0
  %v873 = vadd.f32 0.0, %v872
  %v874 = vpop.f32.mrf.mxu0
  %875 = vmatprep.mubr.f32.mxu0 0.0
  %876 = vmatmul.mubr.f32.gmra.mxu0 %v631
  %v877 = vpop.f32.mrf.mxu0
  %v878 = vadd.f32 0.0, %v877
  %v879 = vpop.f32.mrf.mxu0
  %880 = vmatprep.mubr.f32.mxu0 0.0
  %881 = vmatmul.mubr.f32.gmra.mxu0 %v634
  %v882 = vpop.f32.mrf.mxu0
  %v883 = vadd.f32 0.0, %v882
  %v884 = vpop.f32.mrf.mxu0
  %885 = vmatprep.mubr.f32.mxu0 0.0
  %886 = vmatmul.mubr.f32.gmra.mxu0 %v637
  %v887 = vpop.f32.mrf.mxu0
  %v888 = vadd.f32 0.0, %v887
  %v889 = vpop.f32.mrf.mxu0
  %890 = vmatprep.mubr.f32.mxu0 0.0
  %891 = vmatmul.mubr.f32.gmra.mxu0 %v640
  %v892 = vpop.f32.mrf.mxu0
  %v893 = vadd.f32 0.0, %v892
  %v894 = vpop.f32.mrf.mxu0
  %895 = vmatprep.mubr.f32.mxu0 0.0
  %896 = vmatmul.mubr.f32.gmra.mxu0 %v643
  %v897 = vpop.f32.mrf.mxu0
  %v898 = vadd.f32 0.0, %v897
  %v899 = vpop.f32.mrf.mxu0
  %900 = vmatprep.mubr.f32.mxu0 0.0
  %901 = vmatmul.mubr.f32.gmra.mxu0 %v646
  %v902 = vpop.f32.mrf.mxu0
  %v903 = vadd.f32 0.0, %v902
  %v904 = vpop.f32.mrf.mxu0
  %905 = vmatprep.mubr.f32.mxu0 0.0
  %906 = vmatmul.mubr.f32.gmra.mxu0 %v649
  %v907 = vpop.f32.mrf.mxu0
  %v908 = vadd.f32 0.0, %v907
  %v909 = vpop.f32.mrf.mxu0
  %910 = vmatprep.mubr.f32.mxu0 0.0
  %911 = vmatmul.mubr.f32.gmra.mxu0 %v652
  %v912 = vpop.f32.mrf.mxu0
  %v913 = vadd.f32 0.0, %v912
  %v914 = vpop.f32.mrf.mxu0
  %915 = vmatprep.mubr.f32.mxu0 0.0
  %916 = vmatmul.mubr.f32.gmra.mxu0 %v655
  %v917 = vpop.f32.mrf.mxu0
  %v918 = vadd.f32 0.0, %v917
  %v919 = vpop.f32.mrf.mxu0
  %920 = vmatprep.mubr.f32.mxu0 0.0
  %921 = vmatmul.mubr.f32.gmra.mxu0 %v658
  %v922 = vpop.f32.mrf.mxu0
  %v923 = vadd.f32 0.0, %v922
  %v924 = vpop.f32.mrf.mxu0
  %925 = vmatprep.mubr.f32.mxu0 0.0
  %926 = vmatmul.mubr.f32.gmra.mxu0 %v661
  %v927 = vpop.f32.mrf.mxu0
  %v928 = vadd.f32 0.0, %v927
  %v929 = vpop.f32.mrf.mxu0
  %930 = vmatprep.mubr.f32.mxu0 0.0
  %931 = vmatmul.mubr.f32.gmra.mxu0 %v664
  %v932 = vpop.f32.mrf.mxu0
  %v933 = vadd.f32 0.0, %v932
  %v934 = vpop.f32.mrf.mxu0
  %935 = vmatprep.mubr.f32.mxu0 0.0
  %936 = vmatmul.mubr.f32.gmra.mxu0 %v667
  %v937 = vpop.f32.mrf.mxu0
  %v938 = vadd.f32 0.0, %v937
  %v939 = vpop.f32.mrf.mxu0
  %940 = vmatprep.mubr.f32.mxu0 0.0
  %941 = vmatmul.mubr.f32.gmra.mxu0 %v670
  %v942 = vpop.f32.mrf.mxu0
  %v943 = vadd.f32 0.0, %v942
  %v944 = vpop.f32.mrf.mxu0
  %945 = vmatprep.mubr.f32.mxu0 0.0
  %946 = vmatmul.mubr.f32.gmra.mxu0 %v673
  %v947 = vpop.f32.mrf.mxu0
  %v948 = vadd.f32 0.0, %v947
  %v949 = vpop.f32.mrf.mxu0
  %950 = vmatprep.mubr.f32.mxu0 0.0
  %951 = vmatmul.mubr.f32.gmra.mxu0 %v676
  %v952 = vpop.f32.mrf.mxu0
  %v953 = vadd.f32 0.0, %v952
  %v954 = vpop.f32.mrf.mxu0
  %955 = vmatprep.mubr.f32.mxu0 0.0
  %956 = vmatmul.mubr.f32.gmra.mxu0 %v679
  %v957 = vpop.f32.mrf.mxu0
  %v958 = vadd.f32 0.0, %v957
  %v959 = vpop.f32.mrf.mxu0
  %960 = vmatprep.mubr.f32.mxu0 0.0
  %961 = vmatmul.mubr.f32.gmra.mxu0 %v682
  %v962 = vpop.f32.mrf.mxu0
  %v963 = vadd.f32 0.0, %v962
  %v964 = vpop.f32.mrf.mxu0
  %965 = vmatprep.mubr.f32.mxu0 0.0
  %966 = vmatmul.mubr.f32.gmra.mxu0 %v685
  %v967 = vpop.f32.mrf.mxu0
  %v968 = vadd.f32 0.0, %v967
  %v969 = vpop.f32.mrf.mxu0
  %970 = vmatprep.mubr.f32.mxu0 0.0
  %971 = vmatmul.mubr.f32.gmra.mxu0 %v688
  %v972 = vpop.f32.mrf.mxu0
  %v973 = vadd.f32 0.0, %v972
  %v974 = vpop.f32.mrf.mxu0
  %975 = vmatprep.mubr.f32.mxu0 0.0
  %976 = vmatmul.mubr.f32.gmra.mxu0 %v691
  %v977 = vpop.f32.mrf.mxu0
  %v978 = vadd.f32 0.0, %v977
  %v979 = vpop.f32.mrf.mxu0
  %980 = vmatprep.mubr.f32.mxu0 0.0
  %981 = vmatmul.mubr.f32.gmra.mxu0 %v694
  %v982 = vpop.f32.mrf.mxu0
  %v983 = vadd.f32 0.0, %v982
  %v984 = vpop.f32.mrf.mxu0
  %985 = vmatprep.mubr.f32.mxu0 0.0
  %986 = vmatmul.mubr.f32.gmra.mxu0 %v697
  %v987 = vpop.f32.mrf.mxu0
  %v988 = vadd.f32 0.0, %v987
  %v989 = vpop.f32.mrf.mxu0
  %990 = vmatprep.mubr.f32.mxu0 0.0
  %991 = vmatmul.mubr.f32.gmra.mxu0 %v700
  %v992 = vpop.f32.mrf.mxu0
  %v993 = vadd.f32 0.0, %v992
  %v994 = vpop.f32.mrf.mxu0
  %995 = vmatprep.mubr.f32.mxu0 0.0
  %996 = vmatmul.mubr.f32.gmra.mxu0 %v703
  %v997 = vpop.f32.mrf.mxu0
  %v998 = vadd.f32 0.0, %v997
  %v999 = vpop.f32.mrf.mxu0
  %1000 = vmatprep.mubr.f32.mxu0 0.0
  %1001 = vmatmul.mubr.f32.gmra.mxu0 %v706
  %v1002 = vpop.f32.mrf.mxu0
  %v1003 = vadd.f32 0.0, %v1002
  %v1004 = vpop.f32.mrf.mxu0
  %1005 = vmatprep.mubr.f32.mxu0 0.0
  %1006 = vmatmul.mubr.f32.gmra.mxu0 %v709
  %v1007 = vpop.f32.mrf.mxu0
  %v1008 = vadd.f32 0.0, %v1007
  %v1009 = vpop.f32.mrf.mxu0
  %1010 = vmatprep.mubr.f32.mxu0 0.0
  %1011 = vmatmul.mubr.f32.gmra.mxu0 %v712
  %v1012 = vpop.f32.mrf.mxu0
  %v1013 = vadd.f32 0.0, %v1012
  %v1014 = vpop.f32.mrf.mxu0
  %1015 = vmatprep.mubr.f32.mxu0 0.0
  %1016 = vmatmul.mubr.f32.gmra.mxu0 %v715
  %v1017 = vpop.f32.mrf.mxu0
  %v1018 = vadd.f32 0.0, %v1017
  %v1019 = vpop.f32.mrf.mxu0
  %1020 = vmatprep.mubr.f32.mxu0 0.0
  %1021 = vmatmul.mubr.f32.gmra.mxu0 %v718
  %v1022 = vpop.f32.mrf.mxu0
  %v1023 = vadd.f32 0.0, %v1022
  %v1024 = vpop.f32.mrf.mxu0
  %1025 = vmatprep.mubr.f32.mxu0 0.0
  %1026 = vmatmul.mubr.f32.gmra.mxu0 %v721
  %v1027 = vpop.f32.mrf.mxu0
  %v1028 = vadd.f32 0.0, %v1027
  %v1029 = vpop.f32.mrf.mxu0
  %1030 = vmatprep.mubr.f32.mxu0 0.0
  %1031 = vmatmul.mubr.f32.gmra.mxu0 %v724
  %v1032 = vpop.f32.mrf.mxu0
  %v1033 = vadd.f32 0.0, %v1032
  %v1034 = vpop.f32.mrf.mxu0
  %1035 = vdwg.mxu0
  %v1036 = vmax.f32 %v286, %v793
  %v1037 = vmax.f32 %v291, %v798
  %v1038 = vmax.f32 %v296, %v803
  %v1039 = vmax.f32 %v301, %v808
  %v1040 = vmax.f32 %v306, %v813
  %v1041 = vmax.f32 %v311, %v818
  %v1042 = vmax.f32 %v316, %v823
  %v1043 = vmax.f32 %v321, %v828
  %v1044 = vmax.f32 %v326, %v833
  %v1045 = vmax.f32 %v331, %v838
  %v1046 = vmax.f32 %v336, %v843
  %v1047 = vmax.f32 %v341, %v848
  %v1048 = vmax.f32 %v346, %v853
  %v1049 = vmax.f32 %v351, %v858
  %v1050 = vmax.f32 %v356, %v863
  %v1051 = vmax.f32 %v361, %v868
  %v1052 = vmax.f32 %v366, %v873
  %v1053 = vmax.f32 %v371, %v878
  %v1054 = vmax.f32 %v376, %v883
  %v1055 = vmax.f32 %v381, %v888
  %v1056 = vmax.f32 %v386, %v893
  %v1057 = vmax.f32 %v391, %v898
  %v1058 = vmax.f32 %v396, %v903
  %v1059 = vmax.f32 %v401, %v908
  %v1060 = vmax.f32 %v406, %v913
  %v1061 = vmax.f32 %v411, %v918
  %v1062 = vmax.f32 %v416, %v923
  %v1063 = vmax.f32 %v421, %v928
  %v1064 = vmax.f32 %v426, %v933
  %v1065 = vmax.f32 %v431, %v938
  %v1066 = vmax.f32 %v436, %v943
  %v1067 = vmax.f32 %v441, %v948
  %v1068 = vmax.f32 %v446, %v953
  %v1069 = vmax.f32 %v451, %v958
  %v1070 = vmax.f32 %v456, %v963
  %v1071 = vmax.f32 %v461, %v968
  %v1072 = vmax.f32 %v466, %v973
  %v1073 = vmax.f32 %v471, %v978
  %v1074 = vmax.f32 %v476, %v983
  %v1075 = vmax.f32 %v481, %v988
  %v1076 = vmax.f32 %v486, %v993
  %v1077 = vmax.f32 %v491, %v998
  %v1078 = vmax.f32 %v496, %v1003
  %v1079 = vmax.f32 %v501, %v1008
  %v1080 = vmax.f32 %v506, %v1013
  %v1081 = vmax.f32 %v511, %v1018
  %v1082 = vmax.f32 %v516, %v1023
  %v1083 = vmax.f32 %v521, %v1028
  %v1084 = vmax.f32 %v526, %v1033
  %s1085 = scalar_lea.vmem %s0, 784
  %v1086 = vld [vmem:[%s1085] sm:$0xff]
  %v1087 = vld [vmem:[%s1085 + $0x8] sm:$0xff]
  %v1088 = vld [vmem:[%s1085 + $0x10] sm:$0xff]
  %v1089 = vld [vmem:[%s1085 + $0x18] sm:$0xff]
  %v1090 = vld [vmem:[%s1085 + $0x20] sm:$0xff]
  %v1091 = vld [vmem:[%s1085 + $0x28] sm:$0xff]
  %v1092 = vld [vmem:[%s1085 + $0x30] sm:$0xff]
  %v1093 = vld [vmem:[%s1085 + $0x38] sm:$0xff]
  %v1094 = vld [vmem:[%s1085 + $0x40] sm:$0xff]
  %v1095 = vld [vmem:[%s1085 + $0x48] sm:$0xff]
  %v1096 = vld [vmem:[%s1085 + $0x50] sm:$0xff]
  %v1097 = vld [vmem:[%s1085 + $0x58] sm:$0xff]
  %v1098 = vld [vmem:[%s1085 + $0x60] sm:$0xff]
  %v1099 = vld [vmem:[%s1085 + $0x68] sm:$0xff]
  %v1100 = vld [vmem:[%s1085 + $0x70] sm:$0xff]
  %v1101 = vld [vmem:[%s1085 + $0x78] sm:$0xff]
  %v1102 = vld [vmem:[%s1085 + $0x80] sm:$0xff]
  %v1103 = vld [vmem:[%s1085 + $0x88] sm:$0xff]
  %v1104 = vld [vmem:[%s1085 + $0x90] sm:$0xff]
  %v1105 = vld [vmem:[%s1085 + $0x98] sm:$0xff]
  %v1106 = vld [vmem:[%s1085 + $0xa0] sm:$0xff]
  %v1107 = vld [vmem:[%s1085 + $0xa8] sm:$0xff]
  %v1108 = vld [vmem:[%s1085 + $0xb0] sm:$0xff]
  %v1109 = vld [vmem:[%s1085 + $0xb8] sm:$0xff]
  %v1110 = vld [vmem:[%s1085 + $0xc0] sm:$0xff]
  %v1111 = vld [vmem:[%s1085 + $0xc8] sm:$0xff]
  %v1112 = vld [vmem:[%s1085 + $0xd0] sm:$0xff]
  %v1113 = vld [vmem:[%s1085 + $0xd8] sm:$0xff]
  %v1114 = vld [vmem:[%s1085 + $0xe0] sm:$0xff]
  %v1115 = vld [vmem:[%s1085 + $0xe8] sm:$0xff]
  %v1116 = vld [vmem:[%s1085 + $0xf0] sm:$0xff]
  %v1117 = vld [vmem:[%s1085 + $0xf8] sm:$0xff]
  %v1118 = vld [vmem:[%s1085 + $0x100] sm:$0xff]
  %v1119 = vld [vmem:[%s1085 + $0x108] sm:$0xff]
  %v1120 = vld [vmem:[%s1085 + $0x110] sm:$0xff]
  %v1121 = vld [vmem:[%s1085 + $0x118] sm:$0xff]
  %v1122 = vld [vmem:[%s1085 + $0x120] sm:$0xff]
  %v1123 = vld [vmem:[%s1085 + $0x128] sm:$0xff]
  %v1124 = vld [vmem:[%s1085 + $0x130] sm:$0xff]
  %v1125 = vld [vmem:[%s1085 + $0x138] sm:$0xff]
  %v1126 = vld [vmem:[%s1085 + $0x140] sm:$0xff]
  %v1127 = vld [vmem:[%s1085 + $0x148] sm:$0xff]
  %v1128 = vld [vmem:[%s1085 + $0x150] sm:$0xff]
  %v1129 = vld [vmem:[%s1085 + $0x158] sm:$0xff]
  %v1130 = vld [vmem:[%s1085 + $0x160] sm:$0xff]
  %v1131 = vld [vmem:[%s1085 + $0x168] sm:$0xff]
  %v1132 = vld [vmem:[%s1085 + $0x170] sm:$0xff]
  %v1133 = vld [vmem:[%s1085 + $0x178] sm:$0xff]
  %v1134 = vld [vmem:[%s1085 + $0x180] sm:$0xff]
  %v1136 = vsel %vm67, %v1086, 0
  %v1139 = vsel %vm67, %v1087, 0
  %v1142 = vsel %vm67, %v1088, 0
  %v1145 = vsel %vm67, %v1089, 0
  %v1148 = vsel %vm67, %v1090, 0
  %v1151 = vsel %vm67, %v1091, 0
  %v1154 = vsel %vm67, %v1092, 0
  %v1157 = vsel %vm67, %v1093, 0
  %v1160 = vsel %vm67, %v1094, 0
  %v1163 = vsel %vm67, %v1095, 0
  %v1166 = vsel %vm67, %v1096, 0
  %v1169 = vsel %vm67, %v1097, 0
  %v1172 = vsel %vm67, %v1098, 0
  %v1175 = vsel %vm67, %v1099, 0
  %v1178 = vsel %vm67, %v1100, 0
  %v1181 = vsel %vm67, %v1101, 0
  %v1184 = vsel %vm67, %v1102, 0
  %v1187 = vsel %vm67, %v1103, 0
  %v1190 = vsel %vm67, %v1104, 0
  %v1193 = vsel %vm67, %v1105, 0
  %v1196 = vsel %vm67, %v1106, 0
  %v1199 = vsel %vm67, %v1107, 0
  %v1202 = vsel %vm67, %v1108, 0
  %v1205 = vsel %vm67, %v1109, 0
  %v1208 = vsel %vm67, %v1110, 0
  %v1211 = vsel %vm67, %v1111, 0
  %v1214 = vsel %vm67, %v1112, 0
  %v1217 = vsel %vm67, %v1113, 0
  %v1220 = vsel %vm67, %v1114, 0
  %v1223 = vsel %vm67, %v1115, 0
  %v1226 = vsel %vm67, %v1116, 0
  %v1229 = vsel %vm67, %v1117, 0
  %v1232 = vsel %vm67, %v1118, 0
  %v1235 = vsel %vm67, %v1119, 0
  %v1238 = vsel %vm67, %v1120, 0
  %v1241 = vsel %vm67, %v1121, 0
  %v1244 = vsel %vm67, %v1122, 0
  %v1247 = vsel %vm67, %v1123, 0
  %v1250 = vsel %vm67, %v1124, 0
  %v1253 = vsel %vm67, %v1125, 0
  %v1256 = vsel %vm67, %v1126, 0
  %v1259 = vsel %vm67, %v1127, 0
  %v1262 = vsel %vm67, %v1128, 0
  %v1265 = vsel %vm67, %v1129, 0
  %v1268 = vsel %vm67, %v1130, 0
  %v1271 = vsel %vm67, %v1131, 0
  %v1274 = vsel %vm67, %v1132, 0
  %v1277 = vsel %vm67, %v1133, 0
  %v1280 = vsel %vm67, %v1134, 0
  %1282 = vmatprep.subr.mxu0 0.0
  %1283 = vmatpush1.msra.mxu0 0.0
  %1284 = vmatprep.subr.mxu0 0.0
  %1285 = vmatpush1.msra.mxu0 0.0
  %1286 = vmatprep.subr.mxu0 0.0
  %1287 = vmatpush1.msra.mxu0 0.0
  %1288 = vmatprep.subr.mxu0 0.0
  %1289 = vmatpush1.msra.mxu0 0.0
  %1290 = vmatprep.subr.mxu0 0.0
  %1291 = vmatpush1.msra.mxu0 0.0
  %1292 = vmatprep.subr.mxu0 0.0
  %1293 = vmatpush1.msra.mxu0 0.0
  %1294 = vmatprep.subr.mxu0 0.0
  %1295 = vmatpush1.msra.mxu0 0.0
  %1296 = vmatprep.subr.mxu0 0.0
  %1297 = vmatpush1.msra.mxu0 0.0
  %1298 = vmatprep.subr.mxu0 0.0
  %1299 = vmatpush1.msra.mxu0 0.0
  %1300 = vmatprep.subr.mxu0 0.0
  %1301 = vmatpush1.msra.mxu0 0.0
  %1302 = vmatprep.subr.mxu0 0.0
  %1303 = vmatpush1.msra.mxu0 0.0
  %1304 = vmatprep.subr.mxu0 0.0
  %1305 = vmatpush1.msra.mxu0 0.0
  %1306 = vmatprep.subr.mxu0 0.0
  %1307 = vmatpush1.msra.mxu0 %v217
  %1308 = vmatprep.subr.mxu0 0.0
  %1309 = vmatpush1.msra.mxu0 %v16
  %1310 = vmatprep.subr.mxu0 0.0
  %1311 = vmatpush1.msra.mxu0 %v15
  %1312 = vmatprep.subr.mxu0 0.0
  %1313 = vmatpush1.msra.mxu0 %v14
  %1314 = vmatprep.subr.mxu0 0.0
  %1315 = vmatpush2.msra.mxu0 0.0
  %1316 = vmatprep.subr.mxu0 0.0
  %1317 = vmatpush2.msra.mxu0 0.0
  %1318 = vmatprep.subr.mxu0 0.0
  %1319 = vmatpush2.msra.mxu0 0.0
  %1320 = vmatprep.subr.mxu0 0.0
  %1321 = vmatpush2.msra.mxu0 0.0
  %1322 = vmatprep.subr.mxu0 0.0
  %1323 = vmatpush2.msra.mxu0 0.0
  %1324 = vmatprep.subr.mxu0 0.0
  %1325 = vmatpush2.msra.mxu0 0.0
  %1326 = vmatprep.subr.mxu0 0.0
  %1327 = vmatpush2.msra.mxu0 0.0
  %1328 = vmatprep.subr.mxu0 0.0
  %1329 = vmatpush2.msra.mxu0 0.0
  %1330 = vmatprep.subr.mxu0 0.0
  %1331 = vmatpush2.msra.mxu0 0.0
  %1332 = vmatprep.subr.mxu0 0.0
  %1333 = vmatpush2.msra.mxu0 0.0
  %1334 = vmatprep.subr.mxu0 0.0
  %1335 = vmatpush2.msra.mxu0 0.0
  %1336 = vmatprep.subr.mxu0 0.0
  %1337 = vmatpush2.msra.mxu0 0.0
  %1338 = vmatprep.subr.mxu0 0.0
  %1339 = vmatpush2.msra.mxu0 0.0
  %1340 = vmatprep.subr.mxu0 0.0
  %1341 = vmatpush2.msra.mxu0 0.0
  %1342 = vmatprep.subr.mxu0 0.0
  %1343 = vmatpush2.msra.mxu0 0.0
  %1344 = vmatprep.subr.mxu0 0.0
  %1345 = vmatpush2.msra.mxu0 0.0
  %1346 = vmatprep.mubr.f32.mxu0 0.0
  %1347 = vmatmul.mubr.f32.gmra.mxu0 %v1136
  %v1348 = vpop.f32.mrf.mxu0
  %v1349 = vadd.f32 0.0, %v1348
  %v1350 = vpop.f32.mrf.mxu0
  %1351 = vmatprep.mubr.f32.mxu0 0.0
  %1352 = vmatmul.mubr.f32.gmra.mxu0 %v1139
  %v1353 = vpop.f32.mrf.mxu0
  %v1354 = vadd.f32 0.0, %v1353
  %v1355 = vpop.f32.mrf.mxu0
  %1356 = vmatprep.mubr.f32.mxu0 0.0
  %1357 = vmatmul.mubr.f32.gmra.mxu0 %v1142
  %v1358 = vpop.f32.mrf.mxu0
  %v1359 = vadd.f32 0.0, %v1358
  %v1360 = vpop.f32.mrf.mxu0
  %1361 = vmatprep.mubr.f32.mxu0 0.0
  %1362 = vmatmul.mubr.f32.gmra.mxu0 %v1145
  %v1363 = vpop.f32.mrf.mxu0
  %v1364 = vadd.f32 0.0, %v1363
  %v1365 = vpop.f32.mrf.mxu0
  %1366 = vmatprep.mubr.f32.mxu0 0.0
  %1367 = vmatmul.mubr.f32.gmra.mxu0 %v1148
  %v1368 = vpop.f32.mrf.mxu0
  %v1369 = vadd.f32 0.0, %v1368
  %v1370 = vpop.f32.mrf.mxu0
  %1371 = vmatprep.mubr.f32.mxu0 0.0
  %1372 = vmatmul.mubr.f32.gmra.mxu0 %v1151
  %v1373 = vpop.f32.mrf.mxu0
  %v1374 = vadd.f32 0.0, %v1373
  %v1375 = vpop.f32.mrf.mxu0
  %1376 = vmatprep.mubr.f32.mxu0 0.0
  %1377 = vmatmul.mubr.f32.gmra.mxu0 %v1154
  %v1378 = vpop.f32.mrf.mxu0
  %v1379 = vadd.f32 0.0, %v1378
  %v1380 = vpop.f32.mrf.mxu0
  %1381 = vmatprep.mubr.f32.mxu0 0.0
  %1382 = vmatmul.mubr.f32.gmra.mxu0 %v1157
  %v1383 = vpop.f32.mrf.mxu0
  %v1384 = vadd.f32 0.0, %v1383
  %v1385 = vpop.f32.mrf.mxu0
  %1386 = vmatprep.mubr.f32.mxu0 0.0
  %1387 = vmatmul.mubr.f32.gmra.mxu0 %v1160
  %v1388 = vpop.f32.mrf.mxu0
  %v1389 = vadd.f32 0.0, %v1388
  %v1390 = vpop.f32.mrf.mxu0
  %1391 = vmatprep.mubr.f32.mxu0 0.0
  %1392 = vmatmul.mubr.f32.gmra.mxu0 %v1163
  %v1393 = vpop.f32.mrf.mxu0
  %v1394 = vadd.f32 0.0, %v1393
  %v1395 = vpop.f32.mrf.mxu0
  %1396 = vmatprep.mubr.f32.mxu0 0.0
  %1397 = vmatmul.mubr.f32.gmra.mxu0 %v1166
  %v1398 = vpop.f32.mrf.mxu0
  %v1399 = vadd.f32 0.0, %v1398
  %v1400 = vpop.f32.mrf.mxu0
  %1401 = vmatprep.mubr.f32.mxu0 0.0
  %1402 = vmatmul.mubr.f32.gmra.mxu0 %v1169
  %v1403 = vpop.f32.mrf.mxu0
  %v1404 = vadd.f32 0.0, %v1403
  %v1405 = vpop.f32.mrf.mxu0
  %1406 = vmatprep.mubr.f32.mxu0 0.0
  %1407 = vmatmul.mubr.f32.gmra.mxu0 %v1172
  %v1408 = vpop.f32.mrf.mxu0
  %v1409 = vadd.f32 0.0, %v1408
  %v1410 = vpop.f32.mrf.mxu0
  %1411 = vmatprep.mubr.f32.mxu0 0.0
  %1412 = vmatmul.mubr.f32.gmra.mxu0 %v1175
  %v1413 = vpop.f32.mrf.mxu0
  %v1414 = vadd.f32 0.0, %v1413
  %v1415 = vpop.f32.mrf.mxu0
  %1416 = vmatprep.mubr.f32.mxu0 0.0
  %1417 = vmatmul.mubr.f32.gmra.mxu0 %v1178
  %v1418 = vpop.f32.mrf.mxu0
  %v1419 = vadd.f32 0.0, %v1418
  %v1420 = vpop.f32.mrf.mxu0
  %1421 = vmatprep.mubr.f32.mxu0 0.0
  %1422 = vmatmul.mubr.f32.gmra.mxu0 %v1181
  %v1423 = vpop.f32.mrf.mxu0
  %v1424 = vadd.f32 0.0, %v1423
  %v1425 = vpop.f32.mrf.mxu0
  %1426 = vmatprep.mubr.f32.mxu0 0.0
  %1427 = vmatmul.mubr.f32.gmra.mxu0 %v1184
  %v1428 = vpop.f32.mrf.mxu0
  %v1429 = vadd.f32 0.0, %v1428
  %v1430 = vpop.f32.mrf.mxu0
  %1431 = vmatprep.mubr.f32.mxu0 0.0
  %1432 = vmatmul.mubr.f32.gmra.mxu0 %v1187
  %v1433 = vpop.f32.mrf.mxu0
  %v1434 = vadd.f32 0.0, %v1433
  %v1435 = vpop.f32.mrf.mxu0
  %1436 = vmatprep.mubr.f32.mxu0 0.0
  %1437 = vmatmul.mubr.f32.gmra.mxu0 %v1190
  %v1438 = vpop.f32.mrf.mxu0
  %v1439 = vadd.f32 0.0, %v1438
  %v1440 = vpop.f32.mrf.mxu0
  %1441 = vmatprep.mubr.f32.mxu0 0.0
  %1442 = vmatmul.mubr.f32.gmra.mxu0 %v1193
  %v1443 = vpop.f32.mrf.mxu0
  %v1444 = vadd.f32 0.0, %v1443
  %v1445 = vpop.f32.mrf.mxu0
  %1446 = vmatprep.mubr.f32.mxu0 0.0
  %1447 = vmatmul.mubr.f32.gmra.mxu0 %v1196
  %v1448 = vpop.f32.mrf.mxu0
  %v1449 = vadd.f32 0.0, %v1448
  %v1450 = vpop.f32.mrf.mxu0
  %1451 = vmatprep.mubr.f32.mxu0 0.0
  %1452 = vmatmul.mubr.f32.gmra.mxu0 %v1199
  %v1453 = vpop.f32.mrf.mxu0
  %v1454 = vadd.f32 0.0, %v1453
  %v1455 = vpop.f32.mrf.mxu0
  %1456 = vmatprep.mubr.f32.mxu0 0.0
  %1457 = vmatmul.mubr.f32.gmra.mxu0 %v1202
  %v1458 = vpop.f32.mrf.mxu0
  %v1459 = vadd.f32 0.0, %v1458
  %v1460 = vpop.f32.mrf.mxu0
  %1461 = vmatprep.mubr.f32.mxu0 0.0
  %1462 = vmatmul.mubr.f32.gmra.mxu0 %v1205
  %v1463 = vpop.f32.mrf.mxu0
  %v1464 = vadd.f32 0.0, %v1463
  %v1465 = vpop.f32.mrf.mxu0
  %1466 = vmatprep.mubr.f32.mxu0 0.0
  %1467 = vmatmul.mubr.f32.gmra.mxu0 %v1208
  %v1468 = vpop.f32.mrf.mxu0
  %v1469 = vadd.f32 0.0, %v1468
  %v1470 = vpop.f32.mrf.mxu0
  %1471 = vmatprep.mubr.f32.mxu0 0.0
  %1472 = vmatmul.mubr.f32.gmra.mxu0 %v1211
  %v1473 = vpop.f32.mrf.mxu0
  %v1474 = vadd.f32 0.0, %v1473
  %v1475 = vpop.f32.mrf.mxu0
  %1476 = vmatprep.mubr.f32.mxu0 0.0
  %1477 = vmatmul.mubr.f32.gmra.mxu0 %v1214
  %v1478 = vpop.f32.mrf.mxu0
  %v1479 = vadd.f32 0.0, %v1478
  %v1480 = vpop.f32.mrf.mxu0
  %1481 = vmatprep.mubr.f32.mxu0 0.0
  %1482 = vmatmul.mubr.f32.gmra.mxu0 %v1217
  %v1483 = vpop.f32.mrf.mxu0
  %v1484 = vadd.f32 0.0, %v1483
  %v1485 = vpop.f32.mrf.mxu0
  %1486 = vmatprep.mubr.f32.mxu0 0.0
  %1487 = vmatmul.mubr.f32.gmra.mxu0 %v1220
  %v1488 = vpop.f32.mrf.mxu0
  %v1489 = vadd.f32 0.0, %v1488
  %v1490 = vpop.f32.mrf.mxu0
  %1491 = vmatprep.mubr.f32.mxu0 0.0
  %1492 = vmatmul.mubr.f32.gmra.mxu0 %v1223
  %v1493 = vpop.f32.mrf.mxu0
  %v1494 = vadd.f32 0.0, %v1493
  %v1495 = vpop.f32.mrf.mxu0
  %1496 = vmatprep.mubr.f32.mxu0 0.0
  %1497 = vmatmul.mubr.f32.gmra.mxu0 %v1226
  %v1498 = vpop.f32.mrf.mxu0
  %v1499 = vadd.f32 0.0, %v1498
  %v1500 = vpop.f32.mrf.mxu0
  %1501 = vmatprep.mubr.f32.mxu0 0.0
  %1502 = vmatmul.mubr.f32.gmra.mxu0 %v1229
  %v1503 = vpop.f32.mrf.mxu0
  %v1504 = vadd.f32 0.0, %v1503
  %v1505 = vpop.f32.mrf.mxu0
  %1506 = vmatprep.mubr.f32.mxu0 0.0
  %1507 = vmatmul.mubr.f32.gmra.mxu0 %v1232
  %v1508 = vpop.f32.mrf.mxu0
  %v1509 = vadd.f32 0.0, %v1508
  %v1510 = vpop.f32.mrf.mxu0
  %1511 = vmatprep.mubr.f32.mxu0 0.0
  %1512 = vmatmul.mubr.f32.gmra.mxu0 %v1235
  %v1513 = vpop.f32.mrf.mxu0
  %v1514 = vadd.f32 0.0, %v1513
  %v1515 = vpop.f32.mrf.mxu0
  %1516 = vmatprep.mubr.f32.mxu0 0.0
  %1517 = vmatmul.mubr.f32.gmra.mxu0 %v1238
  %v1518 = vpop.f32.mrf.mxu0
  %v1519 = vadd.f32 0.0, %v1518
  %v1520 = vpop.f32.mrf.mxu0
  %1521 = vmatprep.mubr.f32.mxu0 0.0
  %1522 = vmatmul.mubr.f32.gmra.mxu0 %v1241
  %v1523 = vpop.f32.mrf.mxu0
  %v1524 = vadd.f32 0.0, %v1523
  %v1525 = vpop.f32.mrf.mxu0
  %1526 = vmatprep.mubr.f32.mxu0 0.0
  %1527 = vmatmul.mubr.f32.gmra.mxu0 %v1244
  %v1528 = vpop.f32.mrf.mxu0
  %v1529 = vadd.f32 0.0, %v1528
  %v1530 = vpop.f32.mrf.mxu0
  %1531 = vmatprep.mubr.f32.mxu0 0.0
  %1532 = vmatmul.mubr.f32.gmra.mxu0 %v1247
  %v1533 = vpop.f32.mrf.mxu0
  %v1534 = vadd.f32 0.0, %v1533
  %v1535 = vpop.f32.mrf.mxu0
  %1536 = vmatprep.mubr.f32.mxu0 0.0
  %1537 = vmatmul.mubr.f32.gmra.mxu0 %v1250
  %v1538 = vpop.f32.mrf.mxu0
  %v1539 = vadd.f32 0.0, %v1538
  %v1540 = vpop.f32.mrf.mxu0
  %1541 = vmatprep.mubr.f32.mxu0 0.0
  %1542 = vmatmul.mubr.f32.gmra.mxu0 %v1253
  %v1543 = vpop.f32.mrf.mxu0
  %v1544 = vadd.f32 0.0, %v1543
  %v1545 = vpop.f32.mrf.mxu0
  %1546 = vmatprep.mubr.f32.mxu0 0.0
  %1547 = vmatmul.mubr.f32.gmra.mxu0 %v1256
  %v1548 = vpop.f32.mrf.mxu0
  %v1549 = vadd.f32 0.0, %v1548
  %v1550 = vpop.f32.mrf.mxu0
  %1551 = vmatprep.mubr.f32.mxu0 0.0
  %1552 = vmatmul.mubr.f32.gmra.mxu0 %v1259
  %v1553 = vpop.f32.mrf.mxu0
  %v1554 = vadd.f32 0.0, %v1553
  %v1555 = vpop.f32.mrf.mxu0
  %1556 = vmatprep.mubr.f32.mxu0 0.0
  %1557 = vmatmul.mubr.f32.gmra.mxu0 %v1262
  %v1558 = vpop.f32.mrf.mxu0
  %v1559 = vadd.f32 0.0, %v1558
  %v1560 = vpop.f32.mrf.mxu0
  %1561 = vmatprep.mubr.f32.mxu0 0.0
  %1562 = vmatmul.mubr.f32.gmra.mxu0 %v1265
  %v1563 = vpop.f32.mrf.mxu0
  %v1564 = vadd.f32 0.0, %v1563
  %v1565 = vpop.f32.mrf.mxu0
  %1566 = vmatprep.mubr.f32.mxu0 0.0
  %1567 = vmatmul.mubr.f32.gmra.mxu0 %v1268
  %v1568 = vpop.f32.mrf.mxu0
  %v1569 = vadd.f32 0.0, %v1568
  %v1570 = vpop.f32.mrf.mxu0
  %1571 = vmatprep.mubr.f32.mxu0 0.0
  %1572 = vmatmul.mubr.f32.gmra.mxu0 %v1271
  %v1573 = vpop.f32.mrf.mxu0
  %v1574 = vadd.f32 0.0, %v1573
  %v1575 = vpop.f32.mrf.mxu0
  %1576 = vmatprep.mubr.f32.mxu0 0.0
  %1577 = vmatmul.mubr.f32.gmra.mxu0 %v1274
  %v1578 = vpop.f32.mrf.mxu0
  %v1579 = vadd.f32 0.0, %v1578
  %v1580 = vpop.f32.mrf.mxu0
  %1581 = vmatprep.mubr.f32.mxu0 0.0
  %1582 = vmatmul.mubr.f32.gmra.mxu0 %v1277
  %v1583 = vpop.f32.mrf.mxu0
  %v1584 = vadd.f32 0.0, %v1583
  %v1585 = vpop.f32.mrf.mxu0
  %1586 = vmatprep.mubr.f32.mxu0 0.0
  %1587 = vmatmul.mubr.f32.gmra.mxu0 %v1280
  %v1588 = vpop.f32.mrf.mxu0
  %v1589 = vadd.f32 0.0, %v1588
  %v1590 = vpop.f32.mrf.mxu0
  %1591 = vdwg.mxu0
  %s1592 = scalar_lea.vmem %s0, 1176
  %v1593 = vld [vmem:[%s1592] sm:$0xff]
  %v1594 = vld [vmem:[%s1592 + $0x8] sm:$0xff]
  %v1595 = vld [vmem:[%s1592 + $0x10] sm:$0xff]
  %v1596 = vld [vmem:[%s1592 + $0x18] sm:$0xff]
  %v1597 = vld [vmem:[%s1592 + $0x20] sm:$0xff]
  %v1598 = vld [vmem:[%s1592 + $0x28] sm:$0xff]
  %v1599 = vld [vmem:[%s1592 + $0x30] sm:$0xff]
  %v1600 = vld [vmem:[%s1592 + $0x38] sm:$0xff]
  %v1601 = vld [vmem:[%s1592 + $0x40] sm:$0xff]
  %v1602 = vld [vmem:[%s1592 + $0x48] sm:$0xff]
  %v1603 = vld [vmem:[%s1592 + $0x50] sm:$0xff]
  %v1604 = vld [vmem:[%s1592 + $0x58] sm:$0xff]
  %v1605 = vld [vmem:[%s1592 + $0x60] sm:$0xff]
  %v1606 = vld [vmem:[%s1592 + $0x68] sm:$0xff]
  %v1607 = vld [vmem:[%s1592 + $0x70] sm:$0xff]
  %v1608 = vld [vmem:[%s1592 + $0x78] sm:$0xff]
  %v1609 = vld [vmem:[%s1592 + $0x80] sm:$0xff]
  %v1610 = vld [vmem:[%s1592 + $0x88] sm:$0xff]
  %v1611 = vld [vmem:[%s1592 + $0x90] sm:$0xff]
  %v1612 = vld [vmem:[%s1592 + $0x98] sm:$0xff]
  %v1613 = vld [vmem:[%s1592 + $0xa0] sm:$0xff]
  %v1614 = vld [vmem:[%s1592 + $0xa8] sm:$0xff]
  %v1615 = vld [vmem:[%s1592 + $0xb0] sm:$0xff]
  %v1616 = vld [vmem:[%s1592 + $0xb8] sm:$0xff]
  %v1617 = vld [vmem:[%s1592 + $0xc0] sm:$0xff]
  %v1618 = vld [vmem:[%s1592 + $0xc8] sm:$0xff]
  %v1619 = vld [vmem:[%s1592 + $0xd0] sm:$0xff]
  %v1620 = vld [vmem:[%s1592 + $0xd8] sm:$0xff]
  %v1621 = vld [vmem:[%s1592 + $0xe0] sm:$0xff]
  %v1622 = vld [vmem:[%s1592 + $0xe8] sm:$0xff]
  %v1623 = vld [vmem:[%s1592 + $0xf0] sm:$0xff]
  %v1624 = vld [vmem:[%s1592 + $0xf8] sm:$0xff]
  %v1625 = vld [vmem:[%s1592 + $0x100] sm:$0xff]
  %v1626 = vld [vmem:[%s1592 + $0x108] sm:$0xff]
  %v1627 = vld [vmem:[%s1592 + $0x110] sm:$0xff]
  %v1628 = vld [vmem:[%s1592 + $0x118] sm:$0xff]
  %v1629 = vld [vmem:[%s1592 + $0x120] sm:$0xff]
  %v1630 = vld [vmem:[%s1592 + $0x128] sm:$0xff]
  %v1631 = vld [vmem:[%s1592 + $0x130] sm:$0xff]
  %v1632 = vld [vmem:[%s1592 + $0x138] sm:$0xff]
  %v1633 = vld [vmem:[%s1592 + $0x140] sm:$0xff]
  %v1634 = vld [vmem:[%s1592 + $0x148] sm:$0xff]
  %v1635 = vld [vmem:[%s1592 + $0x150] sm:$0xff]
  %v1636 = vld [vmem:[%s1592 + $0x158] sm:$0xff]
  %v1637 = vld [vmem:[%s1592 + $0x160] sm:$0xff]
  %v1638 = vld [vmem:[%s1592 + $0x168] sm:$0xff]
  %v1639 = vld [vmem:[%s1592 + $0x170] sm:$0xff]
  %v1640 = vld [vmem:[%s1592 + $0x178] sm:$0xff]
  %v1641 = vld [vmem:[%s1592 + $0x180] sm:$0xff]
  %v1643 = vsel %vm67, %v1593, 0
  %v1646 = vsel %vm67, %v1594, 0
  %v1649 = vsel %vm67, %v1595, 0
  %v1652 = vsel %vm67, %v1596, 0
  %v1655 = vsel %vm67, %v1597, 0
  %v1658 = vsel %vm67, %v1598, 0
  %v1661 = vsel %vm67, %v1599, 0
  %v1664 = vsel %vm67, %v1600, 0
  %v1667 = vsel %vm67, %v1601, 0
  %v1670 = vsel %vm67, %v1602, 0
  %v1673 = vsel %vm67, %v1603, 0
  %v1676 = vsel %vm67, %v1604, 0
  %v1679 = vsel %vm67, %v1605, 0
  %v1682 = vsel %vm67, %v1606, 0
  %v1685 = vsel %vm67, %v1607, 0
  %v1688 = vsel %vm67, %v1608, 0
  %v1691 = vsel %vm67, %v1609, 0
  %v1694 = vsel %vm67, %v1610, 0
  %v1697 = vsel %vm67, %v1611, 0
  %v1700 = vsel %vm67, %v1612, 0
  %v1703 = vsel %vm67, %v1613, 0
  %v1706 = vsel %vm67, %v1614, 0
  %v1709 = vsel %vm67, %v1615, 0
  %v1712 = vsel %vm67, %v1616, 0
  %v1715 = vsel %vm67, %v1617, 0
  %v1718 = vsel %vm67, %v1618, 0
  %v1721 = vsel %vm67, %v1619, 0
  %v1724 = vsel %vm67, %v1620, 0
  %v1727 = vsel %vm67, %v1621, 0
  %v1730 = vsel %vm67, %v1622, 0
  %v1733 = vsel %vm67, %v1623, 0
  %v1736 = vsel %vm67, %v1624, 0
  %v1739 = vsel %vm67, %v1625, 0
  %v1742 = vsel %vm67, %v1626, 0
  %v1745 = vsel %vm67, %v1627, 0
  %v1748 = vsel %vm67, %v1628, 0
  %v1751 = vsel %vm67, %v1629, 0
  %v1754 = vsel %vm67, %v1630, 0
  %v1757 = vsel %vm67, %v1631, 0
  %v1760 = vsel %vm67, %v1632, 0
  %v1763 = vsel %vm67, %v1633, 0
  %v1766 = vsel %vm67, %v1634, 0
  %v1769 = vsel %vm67, %v1635, 0
  %v1772 = vsel %vm67, %v1636, 0
  %v1775 = vsel %vm67, %v1637, 0
  %v1778 = vsel %vm67, %v1638, 0
  %v1781 = vsel %vm67, %v1639, 0
  %v1784 = vsel %vm67, %v1640, 0
  %v1787 = vsel %vm67, %v1641, 0
  %1789 = vmatprep.subr.mxu0 0.0
  %1790 = vmatpush1.msra.mxu0 0.0
  %1791 = vmatprep.subr.mxu0 0.0
  %1792 = vmatpush1.msra.mxu0 0.0
  %1793 = vmatprep.subr.mxu0 0.0
  %1794 = vmatpush1.msra.mxu0 0.0
  %1795 = vmatprep.subr.mxu0 0.0
  %1796 = vmatpush1.msra.mxu0 0.0
  %1797 = vmatprep.subr.mxu0 0.0
  %1798 = vmatpush1.msra.mxu0 0.0
  %1799 = vmatprep.subr.mxu0 0.0
  %1800 = vmatpush1.msra.mxu0 0.0
  %1801 = vmatprep.subr.mxu0 0.0
  %1802 = vmatpush1.msra.mxu0 0.0
  %1803 = vmatprep.subr.mxu0 0.0
  %1804 = vmatpush1.msra.mxu0 0.0
  %1805 = vmatprep.subr.mxu0 0.0
  %1806 = vmatpush1.msra.mxu0 0.0
  %1807 = vmatprep.subr.mxu0 0.0
  %1808 = vmatpush1.msra.mxu0 0.0
  %1809 = vmatprep.subr.mxu0 0.0
  %1810 = vmatpush1.msra.mxu0 0.0
  %1811 = vmatprep.subr.mxu0 0.0
  %1812 = vmatpush1.msra.mxu0 0.0
  %1813 = vmatprep.subr.mxu0 0.0
  %1814 = vmatpush1.msra.mxu0 %v217
  %1815 = vmatprep.subr.mxu0 0.0
  %1816 = vmatpush1.msra.mxu0 %v16
  %1817 = vmatprep.subr.mxu0 0.0
  %1818 = vmatpush1.msra.mxu0 %v15
  %1819 = vmatprep.subr.mxu0 0.0
  %1820 = vmatpush1.msra.mxu0 %v14
  %1821 = vmatprep.subr.mxu0 0.0
  %1822 = vmatpush2.msra.mxu0 0.0
  %1823 = vmatprep.subr.mxu0 0.0
  %1824 = vmatpush2.msra.mxu0 0.0
  %1825 = vmatprep.subr.mxu0 0.0
  %1826 = vmatpush2.msra.mxu0 0.0
  %1827 = vmatprep.subr.mxu0 0.0
  %1828 = vmatpush2.msra.mxu0 0.0
  %1829 = vmatprep.subr.mxu0 0.0
  %1830 = vmatpush2.msra.mxu0 0.0
  %1831 = vmatprep.subr.mxu0 0.0
  %1832 = vmatpush2.msra.mxu0 0.0
  %1833 = vmatprep.subr.mxu0 0.0
  %1834 = vmatpush2.msra.mxu0 0.0
  %1835 = vmatprep.subr.mxu0 0.0
  %1836 = vmatpush2.msra.mxu0 0.0
  %1837 = vmatprep.subr.mxu0 0.0
  %1838 = vmatpush2.msra.mxu0 0.0
  %1839 = vmatprep.subr.mxu0 0.0
  %1840 = vmatpush2.msra.mxu0 0.0
  %1841 = vmatprep.subr.mxu0 0.0
  %1842 = vmatpush2.msra.mxu0 0.0
  %1843 = vmatprep.subr.mxu0 0.0
  %1844 = vmatpush2.msra.mxu0 0.0
  %1845 = vmatprep.subr.mxu0 0.0
  %1846 = vmatpush2.msra.mxu0 0.0
  %1847 = vmatprep.subr.mxu0 0.0
  %1848 = vmatpush2.msra.mxu0 0.0
  %1849 = vmatprep.subr.mxu0 0.0
  %1850 = vmatpush2.msra.mxu0 0.0
  %1851 = vmatprep.subr.mxu0 0.0
  %1852 = vmatpush2.msra.mxu0 0.0
  %1853 = vmatprep.mubr.f32.mxu0 0.0
  %1854 = vmatmul.mubr.f32.gmra.mxu0 %v1643
  %v1855 = vpop.f32.mrf.mxu0
  %v1856 = vadd.f32 0.0, %v1855
  %v1857 = vpop.f32.mrf.mxu0
  %1858 = vmatprep.mubr.f32.mxu0 0.0
  %1859 = vmatmul.mubr.f32.gmra.mxu0 %v1646
  %v1860 = vpop.f32.mrf.mxu0
  %v1861 = vadd.f32 0.0, %v1860
  %v1862 = vpop.f32.mrf.mxu0
  %1863 = vmatprep.mubr.f32.mxu0 0.0
  %1864 = vmatmul.mubr.f32.gmra.mxu0 %v1649
  %v1865 = vpop.f32.mrf.mxu0
  %v1866 = vadd.f32 0.0, %v1865
  %v1867 = vpop.f32.mrf.mxu0
  %1868 = vmatprep.mubr.f32.mxu0 0.0
  %1869 = vmatmul.mubr.f32.gmra.mxu0 %v1652
  %v1870 = vpop.f32.mrf.mxu0
  %v1871 = vadd.f32 0.0, %v1870
  %v1872 = vpop.f32.mrf.mxu0
  %1873 = vmatprep.mubr.f32.mxu0 0.0
  %1874 = vmatmul.mubr.f32.gmra.mxu0 %v1655
  %v1875 = vpop.f32.mrf.mxu0
  %v1876 = vadd.f32 0.0, %v1875
  %v1877 = vpop.f32.mrf.mxu0
  %1878 = vmatprep.mubr.f32.mxu0 0.0
  %1879 = vmatmul.mubr.f32.gmra.mxu0 %v1658
  %v1880 = vpop.f32.mrf.mxu0
  %v1881 = vadd.f32 0.0, %v1880
  %v1882 = vpop.f32.mrf.mxu0
  %1883 = vmatprep.mubr.f32.mxu0 0.0
  %1884 = vmatmul.mubr.f32.gmra.mxu0 %v1661
  %v1885 = vpop.f32.mrf.mxu0
  %v1886 = vadd.f32 0.0, %v1885
  %v1887 = vpop.f32.mrf.mxu0
  %1888 = vmatprep.mubr.f32.mxu0 0.0
  %1889 = vmatmul.mubr.f32.gmra.mxu0 %v1664
  %v1890 = vpop.f32.mrf.mxu0
  %v1891 = vadd.f32 0.0, %v1890
  %v1892 = vpop.f32.mrf.mxu0
  %1893 = vmatprep.mubr.f32.mxu0 0.0
  %1894 = vmatmul.mubr.f32.gmra.mxu0 %v1667
  %v1895 = vpop.f32.mrf.mxu0
  %v1896 = vadd.f32 0.0, %v1895
  %v1897 = vpop.f32.mrf.mxu0
  %1898 = vmatprep.mubr.f32.mxu0 0.0
  %1899 = vmatmul.mubr.f32.gmra.mxu0 %v1670
  %v1900 = vpop.f32.mrf.mxu0
  %v1901 = vadd.f32 0.0, %v1900
  %v1902 = vpop.f32.mrf.mxu0
  %1903 = vmatprep.mubr.f32.mxu0 0.0
  %1904 = vmatmul.mubr.f32.gmra.mxu0 %v1673
  %v1905 = vpop.f32.mrf.mxu0
  %v1906 = vadd.f32 0.0, %v1905
  %v1907 = vpop.f32.mrf.mxu0
  %1908 = vmatprep.mubr.f32.mxu0 0.0
  %1909 = vmatmul.mubr.f32.gmra.mxu0 %v1676
  %v1910 = vpop.f32.mrf.mxu0
  %v1911 = vadd.f32 0.0, %v1910
  %v1912 = vpop.f32.mrf.mxu0
  %1913 = vmatprep.mubr.f32.mxu0 0.0
  %1914 = vmatmul.mubr.f32.gmra.mxu0 %v1679
  %v1915 = vpop.f32.mrf.mxu0
  %v1916 = vadd.f32 0.0, %v1915
  %v1917 = vpop.f32.mrf.mxu0
  %1918 = vmatprep.mubr.f32.mxu0 0.0
  %1919 = vmatmul.mubr.f32.gmra.mxu0 %v1682
  %v1920 = vpop.f32.mrf.mxu0
  %v1921 = vadd.f32 0.0, %v1920
  %v1922 = vpop.f32.mrf.mxu0
  %1923 = vmatprep.mubr.f32.mxu0 0.0
  %1924 = vmatmul.mubr.f32.gmra.mxu0 %v1685
  %v1925 = vpop.f32.mrf.mxu0
  %v1926 = vadd.f32 0.0, %v1925
  %v1927 = vpop.f32.mrf.mxu0
  %1928 = vmatprep.mubr.f32.mxu0 0.0
  %1929 = vmatmul.mubr.f32.gmra.mxu0 %v1688
  %v1930 = vpop.f32.mrf.mxu0
  %v1931 = vadd.f32 0.0, %v1930
  %v1932 = vpop.f32.mrf.mxu0
  %1933 = vmatprep.mubr.f32.mxu0 0.0
  %1934 = vmatmul.mubr.f32.gmra.mxu0 %v1691
  %v1935 = vpop.f32.mrf.mxu0
  %v1936 = vadd.f32 0.0, %v1935
  %v1937 = vpop.f32.mrf.mxu0
  %1938 = vmatprep.mubr.f32.mxu0 0.0
  %1939 = vmatmul.mubr.f32.gmra.mxu0 %v1694
  %v1940 = vpop.f32.mrf.mxu0
  %v1941 = vadd.f32 0.0, %v1940
  %v1942 = vpop.f32.mrf.mxu0
  %1943 = vmatprep.mubr.f32.mxu0 0.0
  %1944 = vmatmul.mubr.f32.gmra.mxu0 %v1697
  %v1945 = vpop.f32.mrf.mxu0
  %v1946 = vadd.f32 0.0, %v1945
  %v1947 = vpop.f32.mrf.mxu0
  %1948 = vmatprep.mubr.f32.mxu0 0.0
  %1949 = vmatmul.mubr.f32.gmra.mxu0 %v1700
  %v1950 = vpop.f32.mrf.mxu0
  %v1951 = vadd.f32 0.0, %v1950
  %v1952 = vpop.f32.mrf.mxu0
  %1953 = vmatprep.mubr.f32.mxu0 0.0
  %1954 = vmatmul.mubr.f32.gmra.mxu0 %v1703
  %v1955 = vpop.f32.mrf.mxu0
  %v1956 = vadd.f32 0.0, %v1955
  %v1957 = vpop.f32.mrf.mxu0
  %1958 = vmatprep.mubr.f32.mxu0 0.0
  %1959 = vmatmul.mubr.f32.gmra.mxu0 %v1706
  %v1960 = vpop.f32.mrf.mxu0
  %v1961 = vadd.f32 0.0, %v1960
  %v1962 = vpop.f32.mrf.mxu0
  %1963 = vmatprep.mubr.f32.mxu0 0.0
  %1964 = vmatmul.mubr.f32.gmra.mxu0 %v1709
  %v1965 = vpop.f32.mrf.mxu0
  %v1966 = vadd.f32 0.0, %v1965
  %v1967 = vpop.f32.mrf.mxu0
  %1968 = vmatprep.mubr.f32.mxu0 0.0
  %1969 = vmatmul.mubr.f32.gmra.mxu0 %v1712
  %v1970 = vpop.f32.mrf.mxu0
  %v1971 = vadd.f32 0.0, %v1970
  %v1972 = vpop.f32.mrf.mxu0
  %1973 = vmatprep.mubr.f32.mxu0 0.0
  %1974 = vmatmul.mubr.f32.gmra.mxu0 %v1715
  %v1975 = vpop.f32.mrf.mxu0
  %v1976 = vadd.f32 0.0, %v1975
  %v1977 = vpop.f32.mrf.mxu0
  %1978 = vmatprep.mubr.f32.mxu0 0.0
  %1979 = vmatmul.mubr.f32.gmra.mxu0 %v1718
  %v1980 = vpop.f32.mrf.mxu0
  %v1981 = vadd.f32 0.0, %v1980
  %v1982 = vpop.f32.mrf.mxu0
  %1983 = vmatprep.mubr.f32.mxu0 0.0
  %1984 = vmatmul.mubr.f32.gmra.mxu0 %v1721
  %v1985 = vpop.f32.mrf.mxu0
  %v1986 = vadd.f32 0.0, %v1985
  %v1987 = vpop.f32.mrf.mxu0
  %1988 = vmatprep.mubr.f32.mxu0 0.0
  %1989 = vmatmul.mubr.f32.gmra.mxu0 %v1724
  %v1990 = vpop.f32.mrf.mxu0
  %v1991 = vadd.f32 0.0, %v1990
  %v1992 = vpop.f32.mrf.mxu0
  %1993 = vmatprep.mubr.f32.mxu0 0.0
  %1994 = vmatmul.mubr.f32.gmra.mxu0 %v1727
  %v1995 = vpop.f32.mrf.mxu0
  %v1996 = vadd.f32 0.0, %v1995
  %v1997 = vpop.f32.mrf.mxu0
  %1998 = vmatprep.mubr.f32.mxu0 0.0
  %1999 = vmatmul.mubr.f32.gmra.mxu0 %v1730
  %v2000 = vpop.f32.mrf.mxu0
  %v2001 = vadd.f32 0.0, %v2000
  %v2002 = vpop.f32.mrf.mxu0
  %2003 = vmatprep.mubr.f32.mxu0 0.0
  %2004 = vmatmul.mubr.f32.gmra.mxu0 %v1733
  %v2005 = vpop.f32.mrf.mxu0
  %v2006 = vadd.f32 0.0, %v2005
  %v2007 = vpop.f32.mrf.mxu0
  %2008 = vmatprep.mubr.f32.mxu0 0.0
  %2009 = vmatmul.mubr.f32.gmra.mxu0 %v1736
  %v2010 = vpop.f32.mrf.mxu0
  %v2011 = vadd.f32 0.0, %v2010
  %v2012 = vpop.f32.mrf.mxu0
  %2013 = vmatprep.mubr.f32.mxu0 0.0
  %2014 = vmatmul.mubr.f32.gmra.mxu0 %v1739
  %v2015 = vpop.f32.mrf.mxu0
  %v2016 = vadd.f32 0.0, %v2015
  %v2017 = vpop.f32.mrf.mxu0
  %2018 = vmatprep.mubr.f32.mxu0 0.0
  %2019 = vmatmul.mubr.f32.gmra.mxu0 %v1742
  %v2020 = vpop.f32.mrf.mxu0
  %v2021 = vadd.f32 0.0, %v2020
  %v2022 = vpop.f32.mrf.mxu0
  %2023 = vmatprep.mubr.f32.mxu0 0.0
  %2024 = vmatmul.mubr.f32.gmra.mxu0 %v1745
  %v2025 = vpop.f32.mrf.mxu0
  %v2026 = vadd.f32 0.0, %v2025
  %v2027 = vpop.f32.mrf.mxu0
  %2028 = vmatprep.mubr.f32.mxu0 0.0
  %2029 = vmatmul.mubr.f32.gmra.mxu0 %v1748
  %v2030 = vpop.f32.mrf.mxu0
  %v2031 = vadd.f32 0.0, %v2030
  %v2032 = vpop.f32.mrf.mxu0
  %2033 = vmatprep.mubr.f32.mxu0 0.0
  %2034 = vmatmul.mubr.f32.gmra.mxu0 %v1751
  %v2035 = vpop.f32.mrf.mxu0
  %v2036 = vadd.f32 0.0, %v2035
  %v2037 = vpop.f32.mrf.mxu0
  %2038 = vmatprep.mubr.f32.mxu0 0.0
  %2039 = vmatmul.mubr.f32.gmra.mxu0 %v1754
  %v2040 = vpop.f32.mrf.mxu0
  %v2041 = vadd.f32 0.0, %v2040
  %v2042 = vpop.f32.mrf.mxu0
  %2043 = vmatprep.mubr.f32.mxu0 0.0
  %2044 = vmatmul.mubr.f32.gmra.mxu0 %v1757
  %v2045 = vpop.f32.mrf.mxu0
  %v2046 = vadd.f32 0.0, %v2045
  %v2047 = vpop.f32.mrf.mxu0
  %2048 = vmatprep.mubr.f32.mxu0 0.0
  %2049 = vmatmul.mubr.f32.gmra.mxu0 %v1760
  %v2050 = vpop.f32.mrf.mxu0
  %v2051 = vadd.f32 0.0, %v2050
  %v2052 = vpop.f32.mrf.mxu0
  %2053 = vmatprep.mubr.f32.mxu0 0.0
  %2054 = vmatmul.mubr.f32.gmra.mxu0 %v1763
  %v2055 = vpop.f32.mrf.mxu0
  %v2056 = vadd.f32 0.0, %v2055
  %v2057 = vpop.f32.mrf.mxu0
  %2058 = vmatprep.mubr.f32.mxu0 0.0
  %2059 = vmatmul.mubr.f32.gmra.mxu0 %v1766
  %v2060 = vpop.f32.mrf.mxu0
  %v2061 = vadd.f32 0.0, %v2060
  %v2062 = vpop.f32.mrf.mxu0
  %2063 = vmatprep.mubr.f32.mxu0 0.0
  %2064 = vmatmul.mubr.f32.gmra.mxu0 %v1769
  %v2065 = vpop.f32.mrf.mxu0
  %v2066 = vadd.f32 0.0, %v2065
  %v2067 = vpop.f32.mrf.mxu0
  %2068 = vmatprep.mubr.f32.mxu0 0.0
  %2069 = vmatmul.mubr.f32.gmra.mxu0 %v1772
  %v2070 = vpop.f32.mrf.mxu0
  %v2071 = vadd.f32 0.0, %v2070
  %v2072 = vpop.f32.mrf.mxu0
  %2073 = vmatprep.mubr.f32.mxu0 0.0
  %2074 = vmatmul.mubr.f32.gmra.mxu0 %v1775
  %v2075 = vpop.f32.mrf.mxu0
  %v2076 = vadd.f32 0.0, %v2075
  %v2077 = vpop.f32.mrf.mxu0
  %2078 = vmatprep.mubr.f32.mxu0 0.0
  %2079 = vmatmul.mubr.f32.gmra.mxu0 %v1778
  %v2080 = vpop.f32.mrf.mxu0
  %v2081 = vadd.f32 0.0, %v2080
  %v2082 = vpop.f32.mrf.mxu0
  %2083 = vmatprep.mubr.f32.mxu0 0.0
  %2084 = vmatmul.mubr.f32.gmra.mxu0 %v1781
  %v2085 = vpop.f32.mrf.mxu0
  %v2086 = vadd.f32 0.0, %v2085
  %v2087 = vpop.f32.mrf.mxu0
  %2088 = vmatprep.mubr.f32.mxu0 0.0
  %2089 = vmatmul.mubr.f32.gmra.mxu0 %v1784
  %v2090 = vpop.f32.mrf.mxu0
  %v2091 = vadd.f32 0.0, %v2090
  %v2092 = vpop.f32.mrf.mxu0
  %2093 = vmatprep.mubr.f32.mxu0 0.0
  %2094 = vmatmul.mubr.f32.gmra.mxu0 %v1787
  %v2095 = vpop.f32.mrf.mxu0
  %v2096 = vadd.f32 0.0, %v2095
  %v2097 = vpop.f32.mrf.mxu0
  %2098 = vdwg.mxu0
  %v2099 = vmax.f32 %v1349, %v1856
  %v2100 = vmax.f32 %v1354, %v1861
  %v2101 = vmax.f32 %v1359, %v1866
  %v2102 = vmax.f32 %v1364, %v1871
  %v2103 = vmax.f32 %v1369, %v1876
  %v2104 = vmax.f32 %v1374, %v1881
  %v2105 = vmax.f32 %v1379, %v1886
  %v2106 = vmax.f32 %v1384, %v1891
  %v2107 = vmax.f32 %v1389, %v1896
  %v2108 = vmax.f32 %v1394, %v1901
  %v2109 = vmax.f32 %v1399, %v1906
  %v2110 = vmax.f32 %v1404, %v1911
  %v2111 = vmax.f32 %v1409, %v1916
  %v2112 = vmax.f32 %v1414, %v1921
  %v2113 = vmax.f32 %v1419, %v1926
  %v2114 = vmax.f32 %v1424, %v1931
  %v2115 = vmax.f32 %v1429, %v1936
  %v2116 = vmax.f32 %v1434, %v1941
  %v2117 = vmax.f32 %v1439, %v1946
  %v2118 = vmax.f32 %v1444, %v1951
  %v2119 = vmax.f32 %v1449, %v1956
  %v2120 = vmax.f32 %v1454, %v1961
  %v2121 = vmax.f32 %v1459, %v1966
  %v2122 = vmax.f32 %v1464, %v1971
  %v2123 = vmax.f32 %v1469, %v1976
  %v2124 = vmax.f32 %v1474, %v1981
  %v2125 = vmax.f32 %v1479, %v1986
  %v2126 = vmax.f32 %v1484, %v1991
  %v2127 = vmax.f32 %v1489, %v1996
  %v2128 = vmax.f32 %v1494, %v2001
  %v2129 = vmax.f32 %v1499, %v2006
  %v2130 = vmax.f32 %v1504, %v2011
  %v2131 = vmax.f32 %v1509, %v2016
  %v2132 = vmax.f32 %v1514, %v2021
  %v2133 = vmax.f32 %v1519, %v2026
  %v2134 = vmax.f32 %v1524, %v2031
  %v2135 = vmax.f32 %v1529, %v2036
  %v2136 = vmax.f32 %v1534, %v2041
  %v2137 = vmax.f32 %v1539, %v2046
  %v2138 = vmax.f32 %v1544, %v2051
  %v2139 = vmax.f32 %v1549, %v2056
  %v2140 = vmax.f32 %v1554, %v2061
  %v2141 = vmax.f32 %v1559, %v2066
  %v2142 = vmax.f32 %v1564, %v2071
  %v2143 = vmax.f32 %v1569, %v2076
  %v2144 = vmax.f32 %v1574, %v2081
  %v2145 = vmax.f32 %v1579, %v2086
  %v2146 = vmax.f32 %v1584, %v2091
  %v2147 = vmax.f32 %v1589, %v2096
  %v2148 = vmax.f32 %v1036, %v2099
  %v2149 = vmax.f32 %v1037, %v2100
  %v2150 = vmax.f32 %v1038, %v2101
  %v2151 = vmax.f32 %v1039, %v2102
  %v2152 = vmax.f32 %v1040, %v2103
  %v2153 = vmax.f32 %v1041, %v2104
  %v2154 = vmax.f32 %v1042, %v2105
  %v2155 = vmax.f32 %v1043, %v2106
  %v2156 = vmax.f32 %v1044, %v2107
  %v2157 = vmax.f32 %v1045, %v2108
  %v2158 = vmax.f32 %v1046, %v2109
  %v2159 = vmax.f32 %v1047, %v2110
  %v2160 = vmax.f32 %v1048, %v2111
  %v2161 = vmax.f32 %v1049, %v2112
  %v2162 = vmax.f32 %v1050, %v2113
  %v2163 = vmax.f32 %v1051, %v2114
  %v2164 = vmax.f32 %v1052, %v2115
  %v2165 = vmax.f32 %v1053, %v2116
  %v2166 = vmax.f32 %v1054, %v2117
  %v2167 = vmax.f32 %v1055, %v2118
  %v2168 = vmax.f32 %v1056, %v2119
  %v2169 = vmax.f32 %v1057, %v2120
  %v2170 = vmax.f32 %v1058, %v2121
  %v2171 = vmax.f32 %v1059, %v2122
  %v2172 = vmax.f32 %v1060, %v2123
  %v2173 = vmax.f32 %v1061, %v2124
  %v2174 = vmax.f32 %v1062, %v2125
  %v2175 = vmax.f32 %v1063, %v2126
  %v2176 = vmax.f32 %v1064, %v2127
  %v2177 = vmax.f32 %v1065, %v2128
  %v2178 = vmax.f32 %v1066, %v2129
  %v2179 = vmax.f32 %v1067, %v2130
  %v2180 = vmax.f32 %v1068, %v2131
  %v2181 = vmax.f32 %v1069, %v2132
  %v2182 = vmax.f32 %v1070, %v2133
  %v2183 = vmax.f32 %v1071, %v2134
  %v2184 = vmax.f32 %v1072, %v2135
  %v2185 = vmax.f32 %v1073, %v2136
  %v2186 = vmax.f32 %v1074, %v2137
  %v2187 = vmax.f32 %v1075, %v2138
  %v2188 = vmax.f32 %v1076, %v2139
  %v2189 = vmax.f32 %v1077, %v2140
  %v2190 = vmax.f32 %v1078, %v2141
  %v2191 = vmax.f32 %v1079, %v2142
  %v2192 = vmax.f32 %v1080, %v2143
  %v2193 = vmax.f32 %v1081, %v2144
  %v2194 = vmax.f32 %v1082, %v2145
  %v2195 = vmax.f32 %v1083, %v2146
  %v2196 = vmax.f32 %v1084, %v2147
  %v2197 = vld [vmem:[%s2] sm:$0x1]
  %v2199 = vlaneseq
  %v2200 = vshrl.u32 %v2199, 7
  %v2201 = vsub.s32 0, %v2200
  %v2202 = vrot.slane %v2197, %v2201
  %v2204 = vadd.f32 %v2148, %v2202
  %v2205 = vadd.f32 %v2149, %v2202
  %v2206 = vadd.f32 %v2150, %v2202
  %v2207 = vadd.f32 %v2151, %v2202
  %v2208 = vadd.f32 %v2152, %v2202
  %v2209 = vadd.f32 %v2153, %v2202
  %v2210 = vadd.f32 %v2154, %v2202
  %v2211 = vadd.f32 %v2155, %v2202
  %v2212 = vadd.f32 %v2156, %v2202
  %v2213 = vadd.f32 %v2157, %v2202
  %v2214 = vadd.f32 %v2158, %v2202
  %v2215 = vadd.f32 %v2159, %v2202
  %v2216 = vadd.f32 %v2160, %v2202
  %v2217 = vadd.f32 %v2161, %v2202
  %v2218 = vadd.f32 %v2162, %v2202
  %v2219 = vadd.f32 %v2163, %v2202
  %v2220 = vadd.f32 %v2164, %v2202
  %v2221 = vadd.f32 %v2165, %v2202
  %v2222 = vadd.f32 %v2166, %v2202
  %v2223 = vadd.f32 %v2167, %v2202
  %v2224 = vadd.f32 %v2168, %v2202
  %v2225 = vadd.f32 %v2169, %v2202
  %v2226 = vadd.f32 %v2170, %v2202
  %v2227 = vadd.f32 %v2171, %v2202
  %v2228 = vadd.f32 %v2172, %v2202
  %v2229 = vadd.f32 %v2173, %v2202
  %v2230 = vadd.f32 %v2174, %v2202
  %v2231 = vadd.f32 %v2175, %v2202
  %v2232 = vadd.f32 %v2176, %v2202
  %v2233 = vadd.f32 %v2177, %v2202
  %v2234 = vadd.f32 %v2178, %v2202
  %v2235 = vadd.f32 %v2179, %v2202
  %v2236 = vadd.f32 %v2180, %v2202
  %v2237 = vadd.f32 %v2181, %v2202
  %v2238 = vadd.f32 %v2182, %v2202
  %v2239 = vadd.f32 %v2183, %v2202
  %v2240 = vadd.f32 %v2184, %v2202
  %v2241 = vadd.f32 %v2185, %v2202
  %v2242 = vadd.f32 %v2186, %v2202
  %v2243 = vadd.f32 %v2187, %v2202
  %v2244 = vadd.f32 %v2188, %v2202
  %v2245 = vadd.f32 %v2189, %v2202
  %v2246 = vadd.f32 %v2190, %v2202
  %v2247 = vadd.f32 %v2191, %v2202
  %v2248 = vadd.f32 %v2192, %v2202
  %v2249 = vadd.f32 %v2193, %v2202
  %v2250 = vadd.f32 %v2194, %v2202
  %v2251 = vadd.f32 %v2195, %v2202
  %v2252 = vadd.f32 %v2196, %v2202
  %v2253 = vmax.f32 %v2204, 0.0
  %v2254 = vmax.f32 %v2205, 0.0
  %v2255 = vmax.f32 %v2206, 0.0
  %v2256 = vmax.f32 %v2207, 0.0
  %v2257 = vmax.f32 %v2208, 0.0
  %v2258 = vmax.f32 %v2209, 0.0
  %v2259 = vmax.f32 %v2210, 0.0
  %v2260 = vmax.f32 %v2211, 0.0
  %v2261 = vmax.f32 %v2212, 0.0
  %v2262 = vmax.f32 %v2213, 0.0
  %v2263 = vmax.f32 %v2214, 0.0
  %v2264 = vmax.f32 %v2215, 0.0
  %v2265 = vmax.f32 %v2216, 0.0
  %v2266 = vmax.f32 %v2217, 0.0
  %v2267 = vmax.f32 %v2218, 0.0
  %v2268 = vmax.f32 %v2219, 0.0
  %v2269 = vmax.f32 %v2220, 0.0
  %v2270 = vmax.f32 %v2221, 0.0
  %v2271 = vmax.f32 %v2222, 0.0
  %v2272 = vmax.f32 %v2223, 0.0
  %v2273 = vmax.f32 %v2224, 0.0
  %v2274 = vmax.f32 %v2225, 0.0
  %v2275 = vmax.f32 %v2226, 0.0
  %v2276 = vmax.f32 %v2227, 0.0
  %v2277 = vmax.f32 %v2228, 0.0
  %v2278 = vmax.f32 %v2229, 0.0
  %v2279 = vmax.f32 %v2230, 0.0
  %v2280 = vmax.f32 %v2231, 0.0
  %v2281 = vmax.f32 %v2232, 0.0
  %v2282 = vmax.f32 %v2233, 0.0
  %v2283 = vmax.f32 %v2234, 0.0
  %v2284 = vmax.f32 %v2235, 0.0
  %v2285 = vmax.f32 %v2236, 0.0
  %v2286 = vmax.f32 %v2237, 0.0
  %v2287 = vmax.f32 %v2238, 0.0
  %v2288 = vmax.f32 %v2239, 0.0
  %v2289 = vmax.f32 %v2240, 0.0
  %v2290 = vmax.f32 %v2241, 0.0
  %v2291 = vmax.f32 %v2242, 0.0
  %v2292 = vmax.f32 %v2243, 0.0
  %v2293 = vmax.f32 %v2244, 0.0
  %v2294 = vmax.f32 %v2245, 0.0
  %v2295 = vmax.f32 %v2246, 0.0
  %v2296 = vmax.f32 %v2247, 0.0
  %v2297 = vmax.f32 %v2248, 0.0
  %v2298 = vmax.f32 %v2249, 0.0
  %v2299 = vmax.f32 %v2250, 0.0
  %v2300 = vmax.f32 %v2251, 0.0
  %v2301 = vmax.f32 %v2252, 0.0
  %2302 = vst [vmem:[%s3] sm:$0xff] %v2253
  %2303 = vst [vmem:[%s3 + $0x8] sm:$0xff] %v2254
  %2304 = vst [vmem:[%s3 + $0x10] sm:$0xff] %v2255
  %2305 = vst [vmem:[%s3 + $0x18] sm:$0xff] %v2256
  %2306 = vst [vmem:[%s3 + $0x20] sm:$0xff] %v2257
  %2307 = vst [vmem:[%s3 + $0x28] sm:$0xff] %v2258
  %2308 = vst [vmem:[%s3 + $0x30] sm:$0xff] %v2259
  %2309 = vst [vmem:[%s3 + $0x38] sm:$0xff] %v2260
  %2310 = vst [vmem:[%s3 + $0x40] sm:$0xff] %v2261
  %2311 = vst [vmem:[%s3 + $0x48] sm:$0xff] %v2262
  %2312 = vst [vmem:[%s3 + $0x50] sm:$0xff] %v2263
  %2313 = vst [vmem:[%s3 + $0x58] sm:$0xff] %v2264
  %2314 = vst [vmem:[%s3 + $0x60] sm:$0xff] %v2265
  %2315 = vst [vmem:[%s3 + $0x68] sm:$0xff] %v2266
  %2316 = vst [vmem:[%s3 + $0x70] sm:$0xff] %v2267
  %2317 = vst [vmem:[%s3 + $0x78] sm:$0xff] %v2268
  %2318 = vst [vmem:[%s3 + $0x80] sm:$0xff] %v2269
  %2319 = vst [vmem:[%s3 + $0x88] sm:$0xff] %v2270
  %2320 = vst [vmem:[%s3 + $0x90] sm:$0xff] %v2271
  %2321 = vst [vmem:[%s3 + $0x98] sm:$0xff] %v2272
  %2322 = vst [vmem:[%s3 + $0xa0] sm:$0xff] %v2273
  %2323 = vst [vmem:[%s3 + $0xa8] sm:$0xff] %v2274
  %2324 = vst [vmem:[%s3 + $0xb0] sm:$0xff] %v2275
  %2325 = vst [vmem:[%s3 + $0xb8] sm:$0xff] %v2276
  %2326 = vst [vmem:[%s3 + $0xc0] sm:$0xff] %v2277
  %2327 = vst [vmem:[%s3 + $0xc8] sm:$0xff] %v2278
  %2328 = vst [vmem:[%s3 + $0xd0] sm:$0xff] %v2279
  %2329 = vst [vmem:[%s3 + $0xd8] sm:$0xff] %v2280
  %2330 = vst [vmem:[%s3 + $0xe0] sm:$0xff] %v2281
  %2331 = vst [vmem:[%s3 + $0xe8] sm:$0xff] %v2282
  %2332 = vst [vmem:[%s3 + $0xf0] sm:$0xff] %v2283
  %2333 = vst [vmem:[%s3 + $0xf8] sm:$0xff] %v2284
  %2334 = vst [vmem:[%s3 + $0x100] sm:$0xff] %v2285
  %2335 = vst [vmem:[%s3 + $0x108] sm:$0xff] %v2286
  %2336 = vst [vmem:[%s3 + $0x110] sm:$0xff] %v2287
  %2337 = vst [vmem:[%s3 + $0x118] sm:$0xff] %v2288
  %2338 = vst [vmem:[%s3 + $0x120] sm:$0xff] %v2289
  %2339 = vst [vmem:[%s3 + $0x128] sm:$0xff] %v2290
  %2340 = vst [vmem:[%s3 + $0x130] sm:$0xff] %v2291
  %2341 = vst [vmem:[%s3 + $0x138] sm:$0xff] %v2292
  %2342 = vst [vmem:[%s3 + $0x140] sm:$0xff] %v2293
  %2343 = vst [vmem:[%s3 + $0x148] sm:$0xff] %v2294
  %2344 = vst [vmem:[%s3 + $0x150] sm:$0xff] %v2295
  %2345 = vst [vmem:[%s3 + $0x158] sm:$0xff] %v2296
  %2346 = vst [vmem:[%s3 + $0x160] sm:$0xff] %v2297
  %2347 = vst [vmem:[%s3 + $0x168] sm:$0xff] %v2298
  %2348 = vst [vmem:[%s3 + $0x170] sm:$0xff] %v2299
  %2349 = vst [vmem:[%s3 + $0x178] sm:$0xff] %v2300
  %2350 = vst [vmem:[%s3 + $0x180] sm:$0xff] %v2301
  // Predicated region
  $region14: #{lenet_forward.3} parent=0 // pred_check
    _
  $region15: #{lenet_forward.3} parent=0 // pred_check_branch
    %2352 = sbr.rel (0) target = $region17
  $region16: #{lenet_forward.3} parent=0 // pred_region
    _
  $region17: #{lenet_forward.3} parent=0 // pred_fallthru
    _
  // Predicated region
  $region18: #{lenet_forward.3} parent=0 // pred_check
    _
  $region19: #{lenet_forward.3} parent=0 // pred_check_branch
    %2354 = sbr.rel (0) target = $region21
  $region20: #{lenet_forward.3} parent=0 // pred_region
    _
  $region21: #{lenet_forward.3} parent=0 // pred_fallthru
    _

// kernel: lenet_forward.4
$region0: #{lenet_forward.4}
  #allocation0 [shape = 'u32[]', space=smem, size = 0x4, offset = 0x4, fixed_abs, tag = 'smem constant byte address 0x4 - core index']
  #allocation1 [shape = 'u32[144,128]{1,0:T(1,128)}', space=vmem, size = 0x12000, scoped, tag = 'internal scratch']
  %s0 = inlined_call_operand.vmem [shape: f32[4,50,150], index: 0, kind: input, shape index: {}]
  %s1 = inlined_call_operand.vmem [shape: f32[150,128], index: 1, kind: input, shape index: {}]
  %s2 = inlined_call_operand.vmem [shape: f32[1,128], index: 2, kind: input, shape index: {}]
  %s3 = inlined_call_operand.vmem [shape: f32[50,128], index: 3, kind: output, shape index: {}]
  %s4 = sld [smem:[#allocation0]]
  $region22: #{lenet_forward.4} parent=0
    _
  %s6 = ssub.s32 1, %s4
  %s7 = scalar_select 0, %s6, %s4
  // Predicated region
  $region2: #{lenet_forward.4} parent=0 // pred_check
    _
  $region3: #{lenet_forward.4} parent=0 // pred_check_branch
    %9 = sbr.rel (0) target = $region5
  $region4: #{lenet_forward.4} parent=0 // pred_region
    _
  $region5: #{lenet_forward.4} parent=0 // pred_fallthru
    _
  // Predicated region
  $region6: #{lenet_forward.4} parent=0 // pred_check
    _
  $region7: #{lenet_forward.4} parent=0 // pred_check_branch
    %11 = sbr.rel (0) target = $region9
  $region8: #{lenet_forward.4} parent=0 // pred_region
    _
  $region9: #{lenet_forward.4} parent=0 // pred_fallthru
    _
  // Predicated region
  $region10: #{lenet_forward.4} parent=0 // pred_check
    _
  $region11: #{lenet_forward.4} parent=0 // pred_check_branch
    %13 = sbr.rel (0) target = $region13
  $region12: #{lenet_forward.4} parent=0 // pred_region
    _
  $region13: #{lenet_forward.4} parent=0 // pred_fallthru
    _
  %v14 = vld [vmem:[%s1] sm:$0xff]
  %v15 = vld [vmem:[%s1 + $0x8] sm:$0xff]
  %v16 = vld [vmem:[%s1 + $0x10] sm:$0xff]
  %v17 = vld [vmem:[%s1 + $0x18] sm:$0xff]
  %v18 = vld [vmem:[%s1 + $0x20] sm:$0xff]
  %v19 = vld [vmem:[%s1 + $0x28] sm:$0xff]
  %v20 = vld [vmem:[%s1 + $0x30] sm:$0xff]
  %v21 = vld [vmem:[%s1 + $0x38] sm:$0xff]
  %v22 = vld [vmem:[%s1 + $0x40] sm:$0xff]
  %v23 = vld [vmem:[%s1 + $0x48] sm:$0xff]
  %v24 = vld [vmem:[%s1 + $0x50] sm:$0xff]
  %v25 = vld [vmem:[%s1 + $0x58] sm:$0xff]
  %v26 = vld [vmem:[%s1 + $0x60] sm:$0xff]
  %v27 = vld [vmem:[%s1 + $0x68] sm:$0xff]
  %v28 = vld [vmem:[%s1 + $0x70] sm:$0xff]
  %v29 = vld [vmem:[%s1 + $0x78] sm:$0xff]
  %v30 = vld [vmem:[%s1 + $0x80] sm:$0xff]
  %v31 = vld [vmem:[%s1 + $0x88] sm:$0xff]
  %v32 = vld [vmem:[%s1 + $0x90] sm:$0x3f]
  %v33 = vld [vmem:[%s0] sm:$0xff]
  %v34 = vld [vmem:[%s0 + $0x8] sm:$0xff]
  %v35 = vld [vmem:[%s0 + $0x10] sm:$0xff]
  %v36 = vld [vmem:[%s0 + $0x18] sm:$0xff]
  %v37 = vld [vmem:[%s0 + $0x20] sm:$0xff]
  %v38 = vld [vmem:[%s0 + $0x28] sm:$0xff]
  %v39 = vld [vmem:[%s0 + $0x30] sm:$0xff]
  %v40 = vld [vmem:[%s0 + $0x38] sm:$0xff]
  %v41 = vld [vmem:[%s0 + $0x40] sm:$0xff]
  %v42 = vld [vmem:[%s0 + $0x48] sm:$0xff]
  %v43 = vld [vmem:[%s0 + $0x50] sm:$0xff]
  %v44 = vld [vmem:[%s0 + $0x58] sm:$0xff]
  %v45 = vld [vmem:[%s0 + $0x60] sm:$0x3]
  %v46 = vld [vmem:[%s0 + $0x68] sm:$0x3]
  %vm47 = vcmask 179200
  %v49 = vsel %vm47, %v34, 0
  %v52 = vsel %vm47, %v36, 0
  %v55 = vsel %vm47, %v38, 0
  %v58 = vsel %vm47, %v40, 0
  %v61 = vsel %vm47, %v42, 0
  %v64 = vsel %vm47, %v44, 0
  %v67 = vsel %vm47, %v46, 0
  %vm69 = vcmask 1045504
  %v71 = vsel %vm69, %v32, 0
  %73 = vmatprep.subr.mxu0 0.0
  %74 = vmatpush1.msra.mxu0 %v29
  %75 = vmatprep.subr.mxu0 0.0
  %76 = vmatpush1.msra.mxu0 %v28
  %77 = vmatprep.subr.mxu0 0.0
  %78 = vmatpush1.msra.mxu0 %v27
  %79 = vmatprep.subr.mxu0 0.0
  %80 = vmatpush1.msra.mxu0 %v26
  %81 = vmatprep.subr.mxu0 0.0
  %82 = vmatpush1.msra.mxu0 %v25
  %83 = vmatprep.subr.mxu0 0.0
  %84 = vmatpush1.msra.mxu0 %v24
  %85 = vmatprep.subr.mxu0 0.0
  %86 = vmatpush1.msra.mxu0 %v23
  %87 = vmatprep.subr.mxu0 0.0
  %88 = vmatpush1.msra.mxu0 %v22
  %89 = vmatprep.subr.mxu0 0.0
  %90 = vmatpush1.msra.mxu0 %v21
  %91 = vmatprep.subr.mxu0 0.0
  %92 = vmatpush1.msra.mxu0 %v20
  %93 = vmatprep.subr.mxu0 0.0
  %94 = vmatpush1.msra.mxu0 %v19
  %95 = vmatprep.subr.mxu0 0.0
  %96 = vmatpush1.msra.mxu0 %v18
  %97 = vmatprep.subr.mxu0 0.0
  %98 = vmatpush1.msra.mxu0 %v17
  %99 = vmatprep.subr.mxu0 0.0
  %100 = vmatpush1.msra.mxu0 %v16
  %101 = vmatprep.subr.mxu0 0.0
  %102 = vmatpush1.msra.mxu0 %v15
  %103 = vmatprep.subr.mxu0 0.0
  %104 = vmatpush1.msra.mxu0 %v14
  %105 = vmatprep.subr.mxu0 0.0
  %106 = vmatpush2.msra.mxu0 0.0
  %107 = vmatprep.subr.mxu0 0.0
  %108 = vmatpush2.msra.mxu0 0.0
  %109 = vmatprep.subr.mxu0 0.0
  %110 = vmatpush2.msra.mxu0 0.0
  %111 = vmatprep.subr.mxu0 0.0
  %112 = vmatpush2.msra.mxu0 0.0
  %113 = vmatprep.subr.mxu0 0.0
  %114 = vmatpush2.msra.mxu0 0.0
  %115 = vmatprep.subr.mxu0 0.0
  %116 = vmatpush2.msra.mxu0 0.0
  %117 = vmatprep.subr.mxu0 0.0
  %118 = vmatpush2.msra.mxu0 0.0
  %119 = vmatprep.subr.mxu0 0.0
  %120 = vmatpush2.msra.mxu0 0.0
  %121 = vmatprep.subr.mxu0 0.0
  %122 = vmatpush2.msra.mxu0 0.0
  %123 = vmatprep.subr.mxu0 0.0
  %124 = vmatpush2.msra.mxu0 0.0
  %125 = vmatprep.subr.mxu0 0.0
  %126 = vmatpush2.msra.mxu0 0.0
  %127 = vmatprep.subr.mxu0 0.0
  %128 = vmatpush2.msra.mxu0 0.0
  %129 = vmatprep.subr.mxu0 0.0
  %130 = vmatpush2.msra.mxu0 0.0
  %131 = vmatprep.subr.mxu0 0.0
  %132 = vmatpush2.msra.mxu0 %v71
  %133 = vmatprep.subr.mxu0 0.0
  %134 = vmatpush2.msra.mxu0 %v31
  %135 = vmatprep.subr.mxu0 0.0
  %136 = vmatpush2.msra.mxu0 %v30
  %137 = vmatprep.mubr.f32.mxu0 %v49
  %138 = vmatmul.mubr.f32.gmra.mxu0 %v33
  %v139 = vpop.f32.mrf.mxu0
  %v140 = vadd.f32 0.0, %v139
  %v141 = vpop.f32.mrf.mxu0
  %142 = vmatprep.mubr.f32.mxu0 %v52
  %143 = vmatmul.mubr.f32.gmra.mxu0 %v35
  %v144 = vpop.f32.mrf.mxu0
  %v145 = vadd.f32 0.0, %v144
  %v146 = vpop.f32.mrf.mxu0
  %147 = vmatprep.mubr.f32.mxu0 %v55
  %148 = vmatmul.mubr.f32.gmra.mxu0 %v37
  %v149 = vpop.f32.mrf.mxu0
  %v150 = vadd.f32 0.0, %v149
  %v151 = vpop.f32.mrf.mxu0
  %152 = vmatprep.mubr.f32.mxu0 %v58
  %153 = vmatmul.mubr.f32.gmra.mxu0 %v39
  %v154 = vpop.f32.mrf.mxu0
  %v155 = vadd.f32 0.0, %v154
  %v156 = vpop.f32.mrf.mxu0
  %157 = vmatprep.mubr.f32.mxu0 %v61
  %158 = vmatmul.mubr.f32.gmra.mxu0 %v41
  %v159 = vpop.f32.mrf.mxu0
  %v160 = vadd.f32 0.0, %v159
  %v161 = vpop.f32.mrf.mxu0
  %162 = vmatprep.mubr.f32.mxu0 %v64
  %163 = vmatmul.mubr.f32.gmra.mxu0 %v43
  %v164 = vpop.f32.mrf.mxu0
  %v165 = vadd.f32 0.0, %v164
  %v166 = vpop.f32.mrf.mxu0
  %167 = vmatprep.mubr.f32.mxu0 %v67
  %168 = vmatmul.mubr.f32.gmra.mxu0 %v45
  %v169 = vpop.f32.mrf.mxu0
  %v170 = vadd.f32 0.0, %v169
  %v171 = vpop.f32.mrf.mxu0
  %172 = vdwg.mxu0
  %s173 = scalar_lea.vmem %s0, 112
  %v174 = vld [vmem:[%s173] sm:$0xff]
  %v175 = vld [vmem:[%s173 + $0x8] sm:$0xff]
  %v176 = vld [vmem:[%s173 + $0x10] sm:$0xff]
  %v177 = vld [vmem:[%s173 + $0x18] sm:$0xff]
  %v178 = vld [vmem:[%s173 + $0x20] sm:$0xff]
  %v179 = vld [vmem:[%s173 + $0x28] sm:$0xff]
  %v180 = vld [vmem:[%s173 + $0x30] sm:$0xff]
  %v181 = vld [vmem:[%s173 + $0x38] sm:$0xff]
  %v182 = vld [vmem:[%s173 + $0x40] sm:$0xff]
  %v183 = vld [vmem:[%s173 + $0x48] sm:$0xff]
  %v184 = vld [vmem:[%s173 + $0x50] sm:$0xff]
  %v185 = vld [vmem:[%s173 + $0x58] sm:$0xff]
  %v186 = vld [vmem:[%s173 + $0x60] sm:$0x3]
  %v187 = vld [vmem:[%s173 + $0x68] sm:$0x3]
  %v189 = vsel %vm47, %v175, 0
  %v192 = vsel %vm47, %v177, 0
  %v195 = vsel %vm47, %v179, 0
  %v198 = vsel %vm47, %v181, 0
  %v201 = vsel %vm47, %v183, 0
  %v204 = vsel %vm47, %v185, 0
  %v207 = vsel %vm47, %v187, 0
  %209 = vmatprep.subr.mxu0 0.0
  %210 = vmatpush1.msra.mxu0 %v29
  %211 = vmatprep.subr.mxu0 0.0
  %212 = vmatpush1.msra.mxu0 %v28
  %213 = vmatprep.subr.mxu0 0.0
  %214 = vmatpush1.msra.mxu0 %v27
  %215 = vmatprep.subr.mxu0 0.0
  %216 = vmatpush1.msra.mxu0 %v26
  %217 = vmatprep.subr.mxu0 0.0
  %218 = vmatpush1.msra.mxu0 %v25
  %219 = vmatprep.subr.mxu0 0.0
  %220 = vmatpush1.msra.mxu0 %v24
  %221 = vmatprep.subr.mxu0 0.0
  %222 = vmatpush1.msra.mxu0 %v23
  %223 = vmatprep.subr.mxu0 0.0
  %224 = vmatpush1.msra.mxu0 %v22
  %225 = vmatprep.subr.mxu0 0.0
  %226 = vmatpush1.msra.mxu0 %v21
  %227 = vmatprep.subr.mxu0 0.0
  %228 = vmatpush1.msra.mxu0 %v20
  %229 = vmatprep.subr.mxu0 0.0
  %230 = vmatpush1.msra.mxu0 %v19
  %231 = vmatprep.subr.mxu0 0.0
  %232 = vmatpush1.msra.mxu0 %v18
  %233 = vmatprep.subr.mxu0 0.0
  %234 = vmatpush1.msra.mxu0 %v17
  %235 = vmatprep.subr.mxu0 0.0
  %236 = vmatpush1.msra.mxu0 %v16
  %237 = vmatprep.subr.mxu0 0.0
  %238 = vmatpush1.msra.mxu0 %v15
  %239 = vmatprep.subr.mxu0 0.0
  %240 = vmatpush1.msra.mxu0 %v14
  %241 = vmatprep.subr.mxu0 0.0
  %242 = vmatpush2.msra.mxu0 0.0
  %243 = vmatprep.subr.mxu0 0.0
  %244 = vmatpush2.msra.mxu0 0.0
  %245 = vmatprep.subr.mxu0 0.0
  %246 = vmatpush2.msra.mxu0 0.0
  %247 = vmatprep.subr.mxu0 0.0
  %248 = vmatpush2.msra.mxu0 0.0
  %249 = vmatprep.subr.mxu0 0.0
  %250 = vmatpush2.msra.mxu0 0.0
  %251 = vmatprep.subr.mxu0 0.0
  %252 = vmatpush2.msra.mxu0 0.0
  %253 = vmatprep.subr.mxu0 0.0
  %254 = vmatpush2.msra.mxu0 0.0
  %255 = vmatprep.subr.mxu0 0.0
  %256 = vmatpush2.msra.mxu0 0.0
  %257 = vmatprep.subr.mxu0 0.0
  %258 = vmatpush2.msra.mxu0 0.0
  %259 = vmatprep.subr.mxu0 0.0
  %260 = vmatpush2.msra.mxu0 0.0
  %261 = vmatprep.subr.mxu0 0.0
  %262 = vmatpush2.msra.mxu0 0.0
  %263 = vmatprep.subr.mxu0 0.0
  %264 = vmatpush2.msra.mxu0 0.0
  %265 = vmatprep.subr.mxu0 0.0
  %266 = vmatpush2.msra.mxu0 0.0
  %267 = vmatprep.subr.mxu0 0.0
  %268 = vmatpush2.msra.mxu0 %v71
  %269 = vmatprep.subr.mxu0 0.0
  %270 = vmatpush2.msra.mxu0 %v31
  %271 = vmatprep.subr.mxu0 0.0
  %272 = vmatpush2.msra.mxu0 %v30
  %273 = vmatprep.mubr.f32.mxu0 %v189
  %274 = vmatmul.mubr.f32.gmra.mxu0 %v174
  %v275 = vpop.f32.mrf.mxu0
  %v276 = vadd.f32 0.0, %v275
  %v277 = vpop.f32.mrf.mxu0
  %278 = vmatprep.mubr.f32.mxu0 %v192
  %279 = vmatmul.mubr.f32.gmra.mxu0 %v176
  %v280 = vpop.f32.mrf.mxu0
  %v281 = vadd.f32 0.0, %v280
  %v282 = vpop.f32.mrf.mxu0
  %283 = vmatprep.mubr.f32.mxu0 %v195
  %284 = vmatmul.mubr.f32.gmra.mxu0 %v178
  %v285 = vpop.f32.mrf.mxu0
  %v286 = vadd.f32 0.0, %v285
  %v287 = vpop.f32.mrf.mxu0
  %288 = vmatprep.mubr.f32.mxu0 %v198
  %289 = vmatmul.mubr.f32.gmra.mxu0 %v180
  %v290 = vpop.f32.mrf.mxu0
  %v291 = vadd.f32 0.0, %v290
  %v292 = vpop.f32.mrf.mxu0
  %293 = vmatprep.mubr.f32.mxu0 %v201
  %294 = vmatmul.mubr.f32.gmra.mxu0 %v182
  %v295 = vpop.f32.mrf.mxu0
  %v296 = vadd.f32 0.0, %v295
  %v297 = vpop.f32.mrf.mxu0
  %298 = vmatprep.mubr.f32.mxu0 %v204
  %299 = vmatmul.mubr.f32.gmra.mxu0 %v184
  %v300 = vpop.f32.mrf.mxu0
  %v301 = vadd.f32 0.0, %v300
  %v302 = vpop.f32.mrf.mxu0
  %303 = vmatprep.mubr.f32.mxu0 %v207
  %304 = vmatmul.mubr.f32.gmra.mxu0 %v186
  %v305 = vpop.f32.mrf.mxu0
  %v306 = vadd.f32 0.0, %v305
  %v307 = vpop.f32.mrf.mxu0
  %308 = vdwg.mxu0
  %v309 = vmax.f32 %v140, %v276
  %v310 = vmax.f32 %v145, %v281
  %v311 = vmax.f32 %v150, %v286
  %v312 = vmax.f32 %v155, %v291
  %v313 = vmax.f32 %v160, %v296
  %v314 = vmax.f32 %v165, %v301
  %v315 = vmax.f32 %v170, %v306
  %s316 = scalar_lea.vmem %s0, 224
  %v317 = vld [vmem:[%s316] sm:$0xff]
  %v318 = vld [vmem:[%s316 + $0x8] sm:$0xff]
  %v319 = vld [vmem:[%s316 + $0x10] sm:$0xff]
  %v320 = vld [vmem:[%s316 + $0x18] sm:$0xff]
  %v321 = vld [vmem:[%s316 + $0x20] sm:$0xff]
  %v322 = vld [vmem:[%s316 + $0x28] sm:$0xff]
  %v323 = vld [vmem:[%s316 + $0x30] sm:$0xff]
  %v324 = vld [vmem:[%s316 + $0x38] sm:$0xff]
  %v325 = vld [vmem:[%s316 + $0x40] sm:$0xff]
  %v326 = vld [vmem:[%s316 + $0x48] sm:$0xff]
  %v327 = vld [vmem:[%s316 + $0x50] sm:$0xff]
  %v328 = vld [vmem:[%s316 + $0x58] sm:$0xff]
  %v329 = vld [vmem:[%s316 + $0x60] sm:$0x3]
  %v330 = vld [vmem:[%s316 + $0x68] sm:$0x3]
  %v332 = vsel %vm47, %v318, 0
  %v335 = vsel %vm47, %v320, 0
  %v338 = vsel %vm47, %v322, 0
  %v341 = vsel %vm47, %v324, 0
  %v344 = vsel %vm47, %v326, 0
  %v347 = vsel %vm47, %v328, 0
  %v350 = vsel %vm47, %v330, 0
  %352 = vmatprep.subr.mxu0 0.0
  %353 = vmatpush1.msra.mxu0 %v29
  %354 = vmatprep.subr.mxu0 0.0
  %355 = vmatpush1.msra.mxu0 %v28
  %356 = vmatprep.subr.mxu0 0.0
  %357 = vmatpush1.msra.mxu0 %v27
  %358 = vmatprep.subr.mxu0 0.0
  %359 = vmatpush1.msra.mxu0 %v26
  %360 = vmatprep.subr.mxu0 0.0
  %361 = vmatpush1.msra.mxu0 %v25
  %362 = vmatprep.subr.mxu0 0.0
  %363 = vmatpush1.msra.mxu0 %v24
  %364 = vmatprep.subr.mxu0 0.0
  %365 = vmatpush1.msra.mxu0 %v23
  %366 = vmatprep.subr.mxu0 0.0
  %367 = vmatpush1.msra.mxu0 %v22
  %368 = vmatprep.subr.mxu0 0.0
  %369 = vmatpush1.msra.mxu0 %v21
  %370 = vmatprep.subr.mxu0 0.0
  %371 = vmatpush1.msra.mxu0 %v20
  %372 = vmatprep.subr.mxu0 0.0
  %373 = vmatpush1.msra.mxu0 %v19
  %374 = vmatprep.subr.mxu0 0.0
  %375 = vmatpush1.msra.mxu0 %v18
  %376 = vmatprep.subr.mxu0 0.0
  %377 = vmatpush1.msra.mxu0 %v17
  %378 = vmatprep.subr.mxu0 0.0
  %379 = vmatpush1.msra.mxu0 %v16
  %380 = vmatprep.subr.mxu0 0.0
  %381 = vmatpush1.msra.mxu0 %v15
  %382 = vmatprep.subr.mxu0 0.0
  %383 = vmatpush1.msra.mxu0 %v14
  %384 = vmatprep.subr.mxu0 0.0
  %385 = vmatpush2.msra.mxu0 0.0
  %386 = vmatprep.subr.mxu0 0.0
  %387 = vmatpush2.msra.mxu0 0.0
  %388 = vmatprep.subr.mxu0 0.0
  %389 = vmatpush2.msra.mxu0 0.0
  %390 = vmatprep.subr.mxu0 0.0
  %391 = vmatpush2.msra.mxu0 0.0
  %392 = vmatprep.subr.mxu0 0.0
  %393 = vmatpush2.msra.mxu0 0.0
  %394 = vmatprep.subr.mxu0 0.0
  %395 = vmatpush2.msra.mxu0 0.0
  %396 = vmatprep.subr.mxu0 0.0
  %397 = vmatpush2.msra.mxu0 0.0
  %398 = vmatprep.subr.mxu0 0.0
  %399 = vmatpush2.msra.mxu0 0.0
  %400 = vmatprep.subr.mxu0 0.0
  %401 = vmatpush2.msra.mxu0 0.0
  %402 = vmatprep.subr.mxu0 0.0
  %403 = vmatpush2.msra.mxu0 0.0
  %404 = vmatprep.subr.mxu0 0.0
  %405 = vmatpush2.msra.mxu0 0.0
  %406 = vmatprep.subr.mxu0 0.0
  %407 = vmatpush2.msra.mxu0 0.0
  %408 = vmatprep.subr.mxu0 0.0
  %409 = vmatpush2.msra.mxu0 0.0
  %410 = vmatprep.subr.mxu0 0.0
  %411 = vmatpush2.msra.mxu0 %v71
  %412 = vmatprep.subr.mxu0 0.0
  %413 = vmatpush2.msra.mxu0 %v31
  %414 = vmatprep.subr.mxu0 0.0
  %415 = vmatpush2.msra.mxu0 %v30
  %416 = vmatprep.mubr.f32.mxu0 %v332
  %417 = vmatmul.mubr.f32.gmra.mxu0 %v317
  %v418 = vpop.f32.mrf.mxu0
  %v419 = vadd.f32 0.0, %v418
  %v420 = vpop.f32.mrf.mxu0
  %421 = vmatprep.mubr.f32.mxu0 %v335
  %422 = vmatmul.mubr.f32.gmra.mxu0 %v319
  %v423 = vpop.f32.mrf.mxu0
  %v424 = vadd.f32 0.0, %v423
  %v425 = vpop.f32.mrf.mxu0
  %426 = vmatprep.mubr.f32.mxu0 %v338
  %427 = vmatmul.mubr.f32.gmra.mxu0 %v321
  %v428 = vpop.f32.mrf.mxu0
  %v429 = vadd.f32 0.0, %v428
  %v430 = vpop.f32.mrf.mxu0
  %431 = vmatprep.mubr.f32.mxu0 %v341
  %432 = vmatmul.mubr.f32.gmra.mxu0 %v323
  %v433 = vpop.f32.mrf.mxu0
  %v434 = vadd.f32 0.0, %v433
  %v435 = vpop.f32.mrf.mxu0
  %436 = vmatprep.mubr.f32.mxu0 %v344
  %437 = vmatmul.mubr.f32.gmra.mxu0 %v325
  %v438 = vpop.f32.mrf.mxu0
  %v439 = vadd.f32 0.0, %v438
  %v440 = vpop.f32.mrf.mxu0
  %441 = vmatprep.mubr.f32.mxu0 %v347
  %442 = vmatmul.mubr.f32.gmra.mxu0 %v327
  %v443 = vpop.f32.mrf.mxu0
  %v444 = vadd.f32 0.0, %v443
  %v445 = vpop.f32.mrf.mxu0
  %446 = vmatprep.mubr.f32.mxu0 %v350
  %447 = vmatmul.mubr.f32.gmra.mxu0 %v329
  %v448 = vpop.f32.mrf.mxu0
  %v449 = vadd.f32 0.0, %v448
  %v450 = vpop.f32.mrf.mxu0
  %451 = vdwg.mxu0
  %s452 = scalar_lea.vmem %s0, 336
  %v453 = vld [vmem:[%s452] sm:$0xff]
  %v454 = vld [vmem:[%s452 + $0x8] sm:$0xff]
  %v455 = vld [vmem:[%s452 + $0x10] sm:$0xff]
  %v456 = vld [vmem:[%s452 + $0x18] sm:$0xff]
  %v457 = vld [vmem:[%s452 + $0x20] sm:$0xff]
  %v458 = vld [vmem:[%s452 + $0x28] sm:$0xff]
  %v459 = vld [vmem:[%s452 + $0x30] sm:$0xff]
  %v460 = vld [vmem:[%s452 + $0x38] sm:$0xff]
  %v461 = vld [vmem:[%s452 + $0x40] sm:$0xff]
  %v462 = vld [vmem:[%s452 + $0x48] sm:$0xff]
  %v463 = vld [vmem:[%s452 + $0x50] sm:$0xff]
  %v464 = vld [vmem:[%s452 + $0x58] sm:$0xff]
  %v465 = vld [vmem:[%s452 + $0x60] sm:$0x3]
  %v466 = vld [vmem:[%s452 + $0x68] sm:$0x3]
  %v468 = vsel %vm47, %v454, 0
  %v471 = vsel %vm47, %v456, 0
  %v474 = vsel %vm47, %v458, 0
  %v477 = vsel %vm47, %v460, 0
  %v480 = vsel %vm47, %v462, 0
  %v483 = vsel %vm47, %v464, 0
  %v486 = vsel %vm47, %v466, 0
  %488 = vmatprep.subr.mxu0 0.0
  %489 = vmatpush1.msra.mxu0 %v29
  %490 = vmatprep.subr.mxu0 0.0
  %491 = vmatpush1.msra.mxu0 %v28
  %492 = vmatprep.subr.mxu0 0.0
  %493 = vmatpush1.msra.mxu0 %v27
  %494 = vmatprep.subr.mxu0 0.0
  %495 = vmatpush1.msra.mxu0 %v26
  %496 = vmatprep.subr.mxu0 0.0
  %497 = vmatpush1.msra.mxu0 %v25
  %498 = vmatprep.subr.mxu0 0.0
  %499 = vmatpush1.msra.mxu0 %v24
  %500 = vmatprep.subr.mxu0 0.0
  %501 = vmatpush1.msra.mxu0 %v23
  %502 = vmatprep.subr.mxu0 0.0
  %503 = vmatpush1.msra.mxu0 %v22
  %504 = vmatprep.subr.mxu0 0.0
  %505 = vmatpush1.msra.mxu0 %v21
  %506 = vmatprep.subr.mxu0 0.0
  %507 = vmatpush1.msra.mxu0 %v20
  %508 = vmatprep.subr.mxu0 0.0
  %509 = vmatpush1.msra.mxu0 %v19
  %510 = vmatprep.subr.mxu0 0.0
  %511 = vmatpush1.msra.mxu0 %v18
  %512 = vmatprep.subr.mxu0 0.0
  %513 = vmatpush1.msra.mxu0 %v17
  %514 = vmatprep.subr.mxu0 0.0
  %515 = vmatpush1.msra.mxu0 %v16
  %516 = vmatprep.subr.mxu0 0.0
  %517 = vmatpush1.msra.mxu0 %v15
  %518 = vmatprep.subr.mxu0 0.0
  %519 = vmatpush1.msra.mxu0 %v14
  %520 = vmatprep.subr.mxu0 0.0
  %521 = vmatpush2.msra.mxu0 0.0
  %522 = vmatprep.subr.mxu0 0.0
  %523 = vmatpush2.msra.mxu0 0.0
  %524 = vmatprep.subr.mxu0 0.0
  %525 = vmatpush2.msra.mxu0 0.0
  %526 = vmatprep.subr.mxu0 0.0
  %527 = vmatpush2.msra.mxu0 0.0
  %528 = vmatprep.subr.mxu0 0.0
  %529 = vmatpush2.msra.mxu0 0.0
  %530 = vmatprep.subr.mxu0 0.0
  %531 = vmatpush2.msra.mxu0 0.0
  %532 = vmatprep.subr.mxu0 0.0
  %533 = vmatpush2.msra.mxu0 0.0
  %534 = vmatprep.subr.mxu0 0.0
  %535 = vmatpush2.msra.mxu0 0.0
  %536 = vmatprep.subr.mxu0 0.0
  %537 = vmatpush2.msra.mxu0 0.0
  %538 = vmatprep.subr.mxu0 0.0
  %539 = vmatpush2.msra.mxu0 0.0
  %540 = vmatprep.subr.mxu0 0.0
  %541 = vmatpush2.msra.mxu0 0.0
  %542 = vmatprep.subr.mxu0 0.0
  %543 = vmatpush2.msra.mxu0 0.0
  %544 = vmatprep.subr.mxu0 0.0
  %545 = vmatpush2.msra.mxu0 0.0
  %546 = vmatprep.subr.mxu0 0.0
  %547 = vmatpush2.msra.mxu0 %v71
  %548 = vmatprep.subr.mxu0 0.0
  %549 = vmatpush2.msra.mxu0 %v31
  %550 = vmatprep.subr.mxu0 0.0
  %551 = vmatpush2.msra.mxu0 %v30
  %552 = vmatprep.mubr.f32.mxu0 %v468
  %553 = vmatmul.mubr.f32.gmra.mxu0 %v453
  %v554 = vpop.f32.mrf.mxu0
  %v555 = vadd.f32 0.0, %v554
  %v556 = vpop.f32.mrf.mxu0
  %557 = vmatprep.mubr.f32.mxu0 %v471
  %558 = vmatmul.mubr.f32.gmra.mxu0 %v455
  %v559 = vpop.f32.mrf.mxu0
  %v560 = vadd.f32 0.0, %v559
  %v561 = vpop.f32.mrf.mxu0
  %562 = vmatprep.mubr.f32.mxu0 %v474
  %563 = vmatmul.mubr.f32.gmra.mxu0 %v457
  %v564 = vpop.f32.mrf.mxu0
  %v565 = vadd.f32 0.0, %v564
  %v566 = vpop.f32.mrf.mxu0
  %567 = vmatprep.mubr.f32.mxu0 %v477
  %568 = vmatmul.mubr.f32.gmra.mxu0 %v459
  %v569 = vpop.f32.mrf.mxu0
  %v570 = vadd.f32 0.0, %v569
  %v571 = vpop.f32.mrf.mxu0
  %572 = vmatprep.mubr.f32.mxu0 %v480
  %573 = vmatmul.mubr.f32.gmra.mxu0 %v461
  %v574 = vpop.f32.mrf.mxu0
  %v575 = vadd.f32 0.0, %v574
  %v576 = vpop.f32.mrf.mxu0
  %577 = vmatprep.mubr.f32.mxu0 %v483
  %578 = vmatmul.mubr.f32.gmra.mxu0 %v463
  %v579 = vpop.f32.mrf.mxu0
  %v580 = vadd.f32 0.0, %v579
  %v581 = vpop.f32.mrf.mxu0
  %582 = vmatprep.mubr.f32.mxu0 %v486
  %583 = vmatmul.mubr.f32.gmra.mxu0 %v465
  %v584 = vpop.f32.mrf.mxu0
  %v585 = vadd.f32 0.0, %v584
  %v586 = vpop.f32.mrf.mxu0
  %587 = vdwg.mxu0
  %v588 = vmax.f32 %v419, %v555
  %v589 = vmax.f32 %v424, %v560
  %v590 = vmax.f32 %v429, %v565
  %v591 = vmax.f32 %v434, %v570
  %v592 = vmax.f32 %v439, %v575
  %v593 = vmax.f32 %v444, %v580
  %v594 = vmax.f32 %v449, %v585
  %v595 = vmax.f32 %v309, %v588
  %v596 = vmax.f32 %v310, %v589
  %v597 = vmax.f32 %v311, %v590
  %v598 = vmax.f32 %v312, %v591
  %v599 = vmax.f32 %v313, %v592
  %v600 = vmax.f32 %v314, %v593
  %v601 = vmax.f32 %v315, %v594
  %v602 = vld [vmem:[%s2] sm:$0x1]
  %v604 = vlaneseq
  %v605 = vshrl.u32 %v604, 7
  %v606 = vsub.s32 0, %v605
  %v607 = vrot.slane %v602, %v606
  %v609 = vadd.f32 %v595, %v607
  %v610 = vadd.f32 %v596, %v607
  %v611 = vadd.f32 %v597, %v607
  %v612 = vadd.f32 %v598, %v607
  %v613 = vadd.f32 %v599, %v607
  %v614 = vadd.f32 %v600, %v607
  %v615 = vadd.f32 %v601, %v607
  %v616 = vmax.f32 %v609, 0.0
  %v617 = vmax.f32 %v610, 0.0
  %v618 = vmax.f32 %v611, 0.0
  %v619 = vmax.f32 %v612, 0.0
  %v620 = vmax.f32 %v613, 0.0
  %v621 = vmax.f32 %v614, 0.0
  %v622 = vmax.f32 %v615, 0.0
  %623 = vst [vmem:[%s3] sm:$0xff] %v616
  %624 = vst [vmem:[%s3 + $0x8] sm:$0xff] %v617
  %625 = vst [vmem:[%s3 + $0x10] sm:$0xff] %v618
  %626 = vst [vmem:[%s3 + $0x18] sm:$0xff] %v619
  %627 = vst [vmem:[%s3 + $0x20] sm:$0xff] %v620
  %628 = vst [vmem:[%s3 + $0x28] sm:$0xff] %v621
  %629 = vst [vmem:[%s3 + $0x30] sm:$0x3] %v622
  // Predicated region
  $region14: #{lenet_forward.4} parent=0 // pred_check
    _
  $region15: #{lenet_forward.4} parent=0 // pred_check_branch
    %631 = sbr.rel (0) target = $region17
  $region16: #{lenet_forward.4} parent=0 // pred_region
    _
  $region17: #{lenet_forward.4} parent=0 // pred_fallthru
    _
  // Predicated region
  $region18: #{lenet_forward.4} parent=0 // pred_check
    _
  $region19: #{lenet_forward.4} parent=0 // pred_check_branch
    %633 = sbr.rel (0) target = $region21
  $region20: #{lenet_forward.4} parent=0 // pred_region
    _
  $region21: #{lenet_forward.4} parent=0 // pred_fallthru
    _

// kernel: lenet_forward.5
$region0: #{lenet_forward.5}
  #allocation0 [shape = 'u32[]', space=smem, size = 0x4, offset = 0x4, fixed_abs, tag = 'smem constant byte address 0x4 - core index']
  #allocation1 [shape = 'u32[144,128]{1,0:T(1,128)}', space=vmem, size = 0x12000, scoped, tag = 'internal scratch']
  %s0 = inlined_call_operand.vmem [shape: f32[2,3200], index: 0, kind: input, shape index: {}]
  %s1 = inlined_call_operand.vmem [shape: f32[3200,128], index: 1, kind: input, shape index: {}]
  %s2 = inlined_call_operand.vmem [shape: f32[1,128], index: 2, kind: input, shape index: {}]
  %s3 = inlined_call_operand.vmem [shape: f32[128,128], index: 3, kind: input, shape index: {}]
  %s4 = inlined_call_operand.vmem [shape: f32[1,128], index: 4, kind: input, shape index: {}]
  %s5 = inlined_call_operand.vmem [shape: f32[128,128], index: 5, kind: input, shape index: {}]
  %s6 = inlined_call_operand.vmem [shape: f32[1,128], index: 6, kind: input, shape index: {}]
  %s7 = inlined_call_operand.hbm [shape: f32[2,128], index: 7, kind: output, shape index: {}]
  %s8 = sld [smem:[#allocation0]]
  $region38: #{lenet_forward.5} parent=0
    _
  %s10 = ssub.s32 1, %s8
  %s11 = scalar_select 0, %s10, %s8
  $region1: #{lenet_forward.5} parent=0
    #allocation2 [shape = 'u8[1024]{0}', space=vmem, size = 0x400, scoped, tag = 'output window, operand 0, single buffered']
    #allocation3 [shape = 's32[1]{0}', space=sflag, size = 0x4, scoped, tag = 'scoped memory for lenet_forward.5']
    %12 = vsyncpa [#allocation3], 0
    // Predicated region
    $region2: #{lenet_forward.5} parent=1 // pred_check
      _
    $region3: #{lenet_forward.5} parent=1 // pred_check_branch
      %14 = sbr.rel (0) target = $region5
    $region4: #{lenet_forward.5} parent=1 // pred_region
      _
    $region5: #{lenet_forward.5} parent=1 // pred_fallthru
      _
    // Predicated region
    $region6: #{lenet_forward.5} parent=1 // pred_check
      _
    $region7: #{lenet_forward.5} parent=1 // pred_check_branch
      %16 = sbr.rel (0) target = $region9
    $region8: #{lenet_forward.5} parent=1 // pred_region
      _
    $region9: #{lenet_forward.5} parent=1 // pred_fallthru
      _
    // Predicated region
    $region10: #{lenet_forward.5} parent=1 // pred_check
      _
    $region11: #{lenet_forward.5} parent=1 // pred_check_branch
      %18 = sbr.rel (0) target = $region13
    $region12: #{lenet_forward.5} parent=1 // pred_region
      _
    $region13: #{lenet_forward.5} parent=1 // pred_fallthru
      _
    // Predicated region
    $region14: #{lenet_forward.5} parent=1 // pred_check
      _
    $region15: #{lenet_forward.5} parent=1 // pred_check_branch
      %20 = sbr.rel (0) target = $region17
    $region16: #{lenet_forward.5} parent=1 // pred_region
      _
    $region17: #{lenet_forward.5} parent=1 // pred_fallthru
      _
    // Predicated region
    $region18: #{lenet_forward.5} parent=1 // pred_check
      _
    $region19: #{lenet_forward.5} parent=1 // pred_check_branch
      %22 = sbr.rel (0) target = $region21
    $region20: #{lenet_forward.5} parent=1 // pred_region
      _
    $region21: #{lenet_forward.5} parent=1 // pred_fallthru
      _
    // Predicated region
    $region22: #{lenet_forward.5} parent=1 // pred_check
      _
    $region23: #{lenet_forward.5} parent=1 // pred_check_branch
      %24 = sbr.rel (0) target = $region25
    $region24: #{lenet_forward.5} parent=1 // pred_region
      _
    $region25: #{lenet_forward.5} parent=1 // pred_fallthru
      _
    // Predicated region
    $region26: #{lenet_forward.5} parent=1 // pred_check
      _
    $region27: #{lenet_forward.5} parent=1 // pred_check_branch
      %26 = sbr.rel (0) target = $region29
    $region28: #{lenet_forward.5} parent=1 // pred_region
      _
    $region29: #{lenet_forward.5} parent=1 // pred_fallthru
      _
    %v27 = vld [vmem:[%s0] sm:$0xff]
    %v28 = vld [vmem:[%s0 + $0x8] sm:$0xff]
    %v29 = vld [vmem:[%s0 + $0x10] sm:$0xff]
    %v30 = vld [vmem:[%s0 + $0x18] sm:$0xff]
    %v31 = vld [vmem:[%s0 + $0x20] sm:$0xff]
    %v32 = vld [vmem:[%s0 + $0x28] sm:$0xff]
    %v33 = vld [vmem:[%s0 + $0x30] sm:$0x3]
    %v34 = vld [vmem:[%s1] sm:$0xff]
    %v35 = vld [vmem:[%s1 + $0x8] sm:$0xff]
    %v36 = vld [vmem:[%s1 + $0x10] sm:$0xff]
    %v37 = vld [vmem:[%s1 + $0x18] sm:$0xff]
    %v38 = vld [vmem:[%s1 + $0x20] sm:$0xff]
    %v39 = vld [vmem:[%s1 + $0x28] sm:$0xff]
    %v40 = vld [vmem:[%s1 + $0x30] sm:$0xff]
    %v41 = vld [vmem:[%s1 + $0x38] sm:$0xff]
    %v42 = vld [vmem:[%s1 + $0x40] sm:$0xff]
    %v43 = vld [vmem:[%s1 + $0x48] sm:$0xff]
    %v44 = vld [vmem:[%s1 + $0x50] sm:$0xff]
    %v45 = vld [vmem:[%s1 + $0x58] sm:$0xff]
    %v46 = vld [vmem:[%s1 + $0x60] sm:$0xff]
    %v47 = vld [vmem:[%s1 + $0x68] sm:$0xff]
    %v48 = vld [vmem:[%s1 + $0x70] sm:$0xff]
    %v49 = vld [vmem:[%s1 + $0x78] sm:$0xff]
    %v50 = vld [vmem:[%s1 + $0x80] sm:$0xff]
    %v51 = vld [vmem:[%s1 + $0x88] sm:$0xff]
    %v52 = vld [vmem:[%s1 + $0x90] sm:$0xff]
    %v53 = vld [vmem:[%s1 + $0x98] sm:$0xff]
    %v54 = vld [vmem:[%s1 + $0xa0] sm:$0xff]
    %v55 = vld [vmem:[%s1 + $0xa8] sm:$0xff]
    %v56 = vld [vmem:[%s1 + $0xb0] sm:$0xff]
    %v57 = vld [vmem:[%s1 + $0xb8] sm:$0xff]
    %v58 = vld [vmem:[%s1 + $0xc0] sm:$0xff]
    %v59 = vld [vmem:[%s1 + $0xc8] sm:$0xff]
    %v60 = vld [vmem:[%s1 + $0xd0] sm:$0xff]
    %v61 = vld [vmem:[%s1 + $0xd8] sm:$0xff]
    %v62 = vld [vmem:[%s1 + $0xe0] sm:$0xff]
    %v63 = vld [vmem:[%s1 + $0xe8] sm:$0xff]
    %v64 = vld [vmem:[%s1 + $0xf0] sm:$0xff]
    %v65 = vld [vmem:[%s1 + $0xf8] sm:$0xff]
    %v66 = vld [vmem:[%s1 + $0x100] sm:$0xff]
    %v67 = vld [vmem:[%s1 + $0x108] sm:$0xff]
    %v68 = vld [vmem:[%s1 + $0x110] sm:$0xff]
    %v69 = vld [vmem:[%s1 + $0x118] sm:$0xff]
    %v70 = vld [vmem:[%s1 + $0x120] sm:$0xff]
    %v71 = vld [vmem:[%s1 + $0x128] sm:$0xff]
    %v72 = vld [vmem:[%s1 + $0x130] sm:$0xff]
    %v73 = vld [vmem:[%s1 + $0x138] sm:$0xff]
    %v74 = vld [vmem:[%s1 + $0x140] sm:$0xff]
    %v75 = vld [vmem:[%s1 + $0x148] sm:$0xff]
    %v76 = vld [vmem:[%s1 + $0x150] sm:$0xff]
    %v77 = vld [vmem:[%s1 + $0x158] sm:$0xff]
    %v78 = vld [vmem:[%s1 + $0x160] sm:$0xff]
    %v79 = vld [vmem:[%s1 + $0x168] sm:$0xff]
    %v80 = vld [vmem:[%s1 + $0x170] sm:$0xff]
    %v81 = vld [vmem:[%s1 + $0x178] sm:$0xff]
    %v82 = vld [vmem:[%s1 + $0x180] sm:$0xff]
    %v83 = vld [vmem:[%s1 + $0x188] sm:$0xff]
    %v84 = vld [vmem:[%s1 + $0x190] sm:$0xff]
    %v85 = vld [vmem:[%s1 + $0x198] sm:$0xff]
    %v86 = vld [vmem:[%s1 + $0x1a0] sm:$0xff]
    %v87 = vld [vmem:[%s1 + $0x1a8] sm:$0xff]
    %v88 = vld [vmem:[%s1 + $0x1b0] sm:$0xff]
    %v89 = vld [vmem:[%s1 + $0x1b8] sm:$0xff]
    %v90 = vld [vmem:[%s1 + $0x1c0] sm:$0xff]
    %v91 = vld [vmem:[%s1 + $0x1c8] sm:$0xff]
    %v92 = vld [vmem:[%s1 + $0x1d0] sm:$0xff]
    %v93 = vld [vmem:[%s1 + $0x1d8] sm:$0xff]
    %v94 = vld [vmem:[%s1 + $0x1e0] sm:$0xff]
    %v95 = vld [vmem:[%s1 + $0x1e8] sm:$0xff]
    %v96 = vld [vmem:[%s1 + $0x1f0] sm:$0xff]
    %v97 = vld [vmem:[%s1 + $0x1f8] sm:$0xff]
    %v98 = vld [vmem:[%s1 + $0x200] sm:$0xff]
    %v99 = vld [vmem:[%s1 + $0x208] sm:$0xff]
    %v100 = vld [vmem:[%s1 + $0x210] sm:$0xff]
    %v101 = vld [vmem:[%s1 + $0x218] sm:$0xff]
    %v102 = vld [vmem:[%s1 + $0x220] sm:$0xff]
    %v103 = vld [vmem:[%s1 + $0x228] sm:$0xff]
    %v104 = vld [vmem:[%s1 + $0x230] sm:$0xff]
    %v105 = vld [vmem:[%s1 + $0x238] sm:$0xff]
    %v106 = vld [vmem:[%s1 + $0x240] sm:$0xff]
    %v107 = vld [vmem:[%s1 + $0x248] sm:$0xff]
    %v108 = vld [vmem:[%s1 + $0x250] sm:$0xff]
    %v109 = vld [vmem:[%s1 + $0x258] sm:$0xff]
    %v110 = vld [vmem:[%s1 + $0x260] sm:$0xff]
    %v111 = vld [vmem:[%s1 + $0x268] sm:$0xff]
    %v112 = vld [vmem:[%s1 + $0x270] sm:$0xff]
    %v113 = vld [vmem:[%s1 + $0x278] sm:$0xff]
    %v114 = vld [vmem:[%s1 + $0x280] sm:$0xff]
    %v115 = vld [vmem:[%s1 + $0x288] sm:$0xff]
    %v116 = vld [vmem:[%s1 + $0x290] sm:$0xff]
    %v117 = vld [vmem:[%s1 + $0x298] sm:$0xff]
    %v118 = vld [vmem:[%s1 + $0x2a0] sm:$0xff]
    %v119 = vld [vmem:[%s1 + $0x2a8] sm:$0xff]
    %v120 = vld [vmem:[%s1 + $0x2b0] sm:$0xff]
    %v121 = vld [vmem:[%s1 + $0x2b8] sm:$0xff]
    %v122 = vld [vmem:[%s1 + $0x2c0] sm:$0xff]
    %v123 = vld [vmem:[%s1 + $0x2c8] sm:$0xff]
    %v124 = vld [vmem:[%s1 + $0x2d0] sm:$0xff]
    %v125 = vld [vmem:[%s1 + $0x2d8] sm:$0xff]
    %v126 = vld [vmem:[%s1 + $0x2e0] sm:$0xff]
    %v127 = vld [vmem:[%s1 + $0x2e8] sm:$0xff]
    %v128 = vld [vmem:[%s1 + $0x2f0] sm:$0xff]
    %v129 = vld [vmem:[%s1 + $0x2f8] sm:$0xff]
    %v130 = vld [vmem:[%s1 + $0x300] sm:$0xff]
    %v131 = vld [vmem:[%s1 + $0x308] sm:$0xff]
    %v132 = vld [vmem:[%s1 + $0x310] sm:$0xff]
    %v133 = vld [vmem:[%s1 + $0x318] sm:$0xff]
    %v134 = vld [vmem:[%s1 + $0x320] sm:$0xff]
    %v135 = vld [vmem:[%s1 + $0x328] sm:$0xff]
    %v136 = vld [vmem:[%s1 + $0x330] sm:$0xff]
    %v137 = vld [vmem:[%s1 + $0x338] sm:$0xff]
    %v138 = vld [vmem:[%s1 + $0x340] sm:$0xff]
    %v139 = vld [vmem:[%s1 + $0x348] sm:$0xff]
    %v140 = vld [vmem:[%s1 + $0x350] sm:$0xff]
    %v141 = vld [vmem:[%s1 + $0x358] sm:$0xff]
    %v142 = vld [vmem:[%s1 + $0x360] sm:$0xff]
    %v143 = vld [vmem:[%s1 + $0x368] sm:$0xff]
    %v144 = vld [vmem:[%s1 + $0x370] sm:$0xff]
    %v145 = vld [vmem:[%s1 + $0x378] sm:$0xff]
    %v146 = vld [vmem:[%s1 + $0x380] sm:$0xff]
    %v147 = vld [vmem:[%s1 + $0x388] sm:$0xff]
    %v148 = vld [vmem:[%s1 + $0x390] sm:$0xff]
    %v149 = vld [vmem:[%s1 + $0x398] sm:$0xff]
    %v150 = vld [vmem:[%s1 + $0x3a0] sm:$0xff]
    %v151 = vld [vmem:[%s1 + $0x3a8] sm:$0xff]
    %v152 = vld [vmem:[%s1 + $0x3b0] sm:$0xff]
    %v153 = vld [vmem:[%s1 + $0x3b8] sm:$0xff]
    %v154 = vld [vmem:[%s1 + $0x3c0] sm:$0xff]
    %v155 = vld [vmem:[%s1 + $0x3c8] sm:$0xff]
    %v156 = vld [vmem:[%s1 + $0x3d0] sm:$0xff]
    %v157 = vld [vmem:[%s1 + $0x3d8] sm:$0xff]
    %v158 = vld [vmem:[%s1 + $0x3e0] sm:$0xff]
    %v159 = vld [vmem:[%s1 + $0x3e8] sm:$0xff]
    %v160 = vld [vmem:[%s1 + $0x3f0] sm:$0xff]
    %v161 = vld [vmem:[%s1 + $0x3f8] sm:$0xff]
    %v162 = vld [vmem:[%s1 + $0x400] sm:$0xff]
    %v163 = vld [vmem:[%s1 + $0x408] sm:$0xff]
    %v164 = vld [vmem:[%s1 + $0x410] sm:$0xff]
    %v165 = vld [vmem:[%s1 + $0x418] sm:$0xff]
    %v166 = vld [vmem:[%s1 + $0x420] sm:$0xff]
    %v167 = vld [vmem:[%s1 + $0x428] sm:$0xff]
    %v168 = vld [vmem:[%s1 + $0x430] sm:$0xff]
    %v169 = vld [vmem:[%s1 + $0x438] sm:$0xff]
    %v170 = vld [vmem:[%s1 + $0x440] sm:$0xff]
    %v171 = vld [vmem:[%s1 + $0x448] sm:$0xff]
    %v172 = vld [vmem:[%s1 + $0x450] sm:$0xff]
    %v173 = vld [vmem:[%s1 + $0x458] sm:$0xff]
    %v174 = vld [vmem:[%s1 + $0x460] sm:$0xff]
    %v175 = vld [vmem:[%s1 + $0x468] sm:$0xff]
    %v176 = vld [vmem:[%s1 + $0x470] sm:$0xff]
    %v177 = vld [vmem:[%s1 + $0x478] sm:$0xff]
    %v178 = vld [vmem:[%s1 + $0x480] sm:$0xff]
    %v179 = vld [vmem:[%s1 + $0x488] sm:$0xff]
    %v180 = vld [vmem:[%s1 + $0x490] sm:$0xff]
    %v181 = vld [vmem:[%s1 + $0x498] sm:$0xff]
    %v182 = vld [vmem:[%s1 + $0x4a0] sm:$0xff]
    %v183 = vld [vmem:[%s1 + $0x4a8] sm:$0xff]
    %v184 = vld [vmem:[%s1 + $0x4b0] sm:$0xff]
    %v185 = vld [vmem:[%s1 + $0x4b8] sm:$0xff]
    %v186 = vld [vmem:[%s1 + $0x4c0] sm:$0xff]
    %v187 = vld [vmem:[%s1 + $0x4c8] sm:$0xff]
    %v188 = vld [vmem:[%s1 + $0x4d0] sm:$0xff]
    %v189 = vld [vmem:[%s1 + $0x4d8] sm:$0xff]
    %v190 = vld [vmem:[%s1 + $0x4e0] sm:$0xff]
    %v191 = vld [vmem:[%s1 + $0x4e8] sm:$0xff]
    %v192 = vld [vmem:[%s1 + $0x4f0] sm:$0xff]
    %v193 = vld [vmem:[%s1 + $0x4f8] sm:$0xff]
    %v194 = vld [vmem:[%s1 + $0x500] sm:$0xff]
    %v195 = vld [vmem:[%s1 + $0x508] sm:$0xff]
    %v196 = vld [vmem:[%s1 + $0x510] sm:$0xff]
    %v197 = vld [vmem:[%s1 + $0x518] sm:$0xff]
    %v198 = vld [vmem:[%s1 + $0x520] sm:$0xff]
    %v199 = vld [vmem:[%s1 + $0x528] sm:$0xff]
    %v200 = vld [vmem:[%s1 + $0x530] sm:$0xff]
    %v201 = vld [vmem:[%s1 + $0x538] sm:$0xff]
    %v202 = vld [vmem:[%s1 + $0x540] sm:$0xff]
    %v203 = vld [vmem:[%s1 + $0x548] sm:$0xff]
    %v204 = vld [vmem:[%s1 + $0x550] sm:$0xff]
    %v205 = vld [vmem:[%s1 + $0x558] sm:$0xff]
    %v206 = vld [vmem:[%s1 + $0x560] sm:$0xff]
    %v207 = vld [vmem:[%s1 + $0x568] sm:$0xff]
    %v208 = vld [vmem:[%s1 + $0x570] sm:$0xff]
    %v209 = vld [vmem:[%s1 + $0x578] sm:$0xff]
    %v210 = vld [vmem:[%s1 + $0x580] sm:$0xff]
    %v211 = vld [vmem:[%s1 + $0x588] sm:$0xff]
    %v212 = vld [vmem:[%s1 + $0x590] sm:$0xff]
    %v213 = vld [vmem:[%s1 + $0x598] sm:$0xff]
    %v214 = vld [vmem:[%s1 + $0x5a0] sm:$0xff]
    %v215 = vld [vmem:[%s1 + $0x5a8] sm:$0xff]
    %v216 = vld [vmem:[%s1 + $0x5b0] sm:$0xff]
    %v217 = vld [vmem:[%s1 + $0x5b8] sm:$0xff]
    %v218 = vld [vmem:[%s1 + $0x5c0] sm:$0xff]
    %v219 = vld [vmem:[%s1 + $0x5c8] sm:$0xff]
    %v220 = vld [vmem:[%s1 + $0x5d0] sm:$0xff]
    %v221 = vld [vmem:[%s1 + $0x5d8] sm:$0xff]
    %v222 = vld [vmem:[%s1 + $0x5e0] sm:$0xff]
    %v223 = vld [vmem:[%s1 + $0x5e8] sm:$0xff]
    %v224 = vld [vmem:[%s1 + $0x5f0] sm:$0xff]
    %v225 = vld [vmem:[%s1 + $0x5f8] sm:$0xff]
    %v226 = vld [vmem:[%s1 + $0x600] sm:$0xff]
    %v227 = vld [vmem:[%s1 + $0x608] sm:$0xff]
    %v228 = vld [vmem:[%s1 + $0x610] sm:$0xff]
    %v229 = vld [vmem:[%s1 + $0x618] sm:$0xff]
    %v230 = vld [vmem:[%s1 + $0x620] sm:$0xff]
    %v231 = vld [vmem:[%s1 + $0x628] sm:$0xff]
    %v232 = vld [vmem:[%s1 + $0x630] sm:$0xff]
    %v233 = vld [vmem:[%s1 + $0x638] sm:$0xff]
    %v234 = vld [vmem:[%s1 + $0x640] sm:$0xff]
    %v235 = vld [vmem:[%s1 + $0x648] sm:$0xff]
    %v236 = vld [vmem:[%s1 + $0x650] sm:$0xff]
    %v237 = vld [vmem:[%s1 + $0x658] sm:$0xff]
    %v238 = vld [vmem:[%s1 + $0x660] sm:$0xff]
    %v239 = vld [vmem:[%s1 + $0x668] sm:$0xff]
    %v240 = vld [vmem:[%s1 + $0x670] sm:$0xff]
    %v241 = vld [vmem:[%s1 + $0x678] sm:$0xff]
    %v242 = vld [vmem:[%s1 + $0x680] sm:$0xff]
    %v243 = vld [vmem:[%s1 + $0x688] sm:$0xff]
    %v244 = vld [vmem:[%s1 + $0x690] sm:$0xff]
    %v245 = vld [vmem:[%s1 + $0x698] sm:$0xff]
    %v246 = vld [vmem:[%s1 + $0x6a0] sm:$0xff]
    %v247 = vld [vmem:[%s1 + $0x6a8] sm:$0xff]
    %v248 = vld [vmem:[%s1 + $0x6b0] sm:$0xff]
    %v249 = vld [vmem:[%s1 + $0x6b8] sm:$0xff]
    %v250 = vld [vmem:[%s1 + $0x6c0] sm:$0xff]
    %v251 = vld [vmem:[%s1 + $0x6c8] sm:$0xff]
    %v252 = vld [vmem:[%s1 + $0x6d0] sm:$0xff]
    %v253 = vld [vmem:[%s1 + $0x6d8] sm:$0xff]
    %v254 = vld [vmem:[%s1 + $0x6e0] sm:$0xff]
    %v255 = vld [vmem:[%s1 + $0x6e8] sm:$0xff]
    %v256 = vld [vmem:[%s1 + $0x6f0] sm:$0xff]
    %v257 = vld [vmem:[%s1 + $0x6f8] sm:$0xff]
    %v258 = vld [vmem:[%s1 + $0x700] sm:$0xff]
    %v259 = vld [vmem:[%s1 + $0x708] sm:$0xff]
    %v260 = vld [vmem:[%s1 + $0x710] sm:$0xff]
    %v261 = vld [vmem:[%s1 + $0x718] sm:$0xff]
    %v262 = vld [vmem:[%s1 + $0x720] sm:$0xff]
    %v263 = vld [vmem:[%s1 + $0x728] sm:$0xff]
    %v264 = vld [vmem:[%s1 + $0x730] sm:$0xff]
    %v265 = vld [vmem:[%s1 + $0x738] sm:$0xff]
    %v266 = vld [vmem:[%s1 + $0x740] sm:$0xff]
    %v267 = vld [vmem:[%s1 + $0x748] sm:$0xff]
    %v268 = vld [vmem:[%s1 + $0x750] sm:$0xff]
    %v269 = vld [vmem:[%s1 + $0x758] sm:$0xff]
    %v270 = vld [vmem:[%s1 + $0x760] sm:$0xff]
    %v271 = vld [vmem:[%s1 + $0x768] sm:$0xff]
    %v272 = vld [vmem:[%s1 + $0x770] sm:$0xff]
    %v273 = vld [vmem:[%s1 + $0x778] sm:$0xff]
    %v274 = vld [vmem:[%s1 + $0x780] sm:$0xff]
    %v275 = vld [vmem:[%s1 + $0x788] sm:$0xff]
    %v276 = vld [vmem:[%s1 + $0x790] sm:$0xff]
    %v277 = vld [vmem:[%s1 + $0x798] sm:$0xff]
    %v278 = vld [vmem:[%s1 + $0x7a0] sm:$0xff]
    %v279 = vld [vmem:[%s1 + $0x7a8] sm:$0xff]
    %v280 = vld [vmem:[%s1 + $0x7b0] sm:$0xff]
    %v281 = vld [vmem:[%s1 + $0x7b8] sm:$0xff]
    %v282 = vld [vmem:[%s1 + $0x7c0] sm:$0xff]
    %v283 = vld [vmem:[%s1 + $0x7c8] sm:$0xff]
    %v284 = vld [vmem:[%s1 + $0x7d0] sm:$0xff]
    %v285 = vld [vmem:[%s1 + $0x7d8] sm:$0xff]
    %v286 = vld [vmem:[%s1 + $0x7e0] sm:$0xff]
    %v287 = vld [vmem:[%s1 + $0x7e8] sm:$0xff]
    %v288 = vld [vmem:[%s1 + $0x7f0] sm:$0xff]
    %v289 = vld [vmem:[%s1 + $0x7f8] sm:$0xff]
    %v290 = vld [vmem:[%s1 + $0x800] sm:$0xff]
    %v291 = vld [vmem:[%s1 + $0x808] sm:$0xff]
    %v292 = vld [vmem:[%s1 + $0x810] sm:$0xff]
    %v293 = vld [vmem:[%s1 + $0x818] sm:$0xff]
    %v294 = vld [vmem:[%s1 + $0x820] sm:$0xff]
    %v295 = vld [vmem:[%s1 + $0x828] sm:$0xff]
    %v296 = vld [vmem:[%s1 + $0x830] sm:$0xff]
    %v297 = vld [vmem:[%s1 + $0x838] sm:$0xff]
    %v298 = vld [vmem:[%s1 + $0x840] sm:$0xff]
    %v299 = vld [vmem:[%s1 + $0x848] sm:$0xff]
    %v300 = vld [vmem:[%s1 + $0x850] sm:$0xff]
    %v301 = vld [vmem:[%s1 + $0x858] sm:$0xff]
    %v302 = vld [vmem:[%s1 + $0x860] sm:$0xff]
    %v303 = vld [vmem:[%s1 + $0x868] sm:$0xff]
    %v304 = vld [vmem:[%s1 + $0x870] sm:$0xff]
    %v305 = vld [vmem:[%s1 + $0x878] sm:$0xff]
    %v306 = vld [vmem:[%s1 + $0x880] sm:$0xff]
    %v307 = vld [vmem:[%s1 + $0x888] sm:$0xff]
    %v308 = vld [vmem:[%s1 + $0x890] sm:$0xff]
    %v309 = vld [vmem:[%s1 + $0x898] sm:$0xff]
    %v310 = vld [vmem:[%s1 + $0x8a0] sm:$0xff]
    %v311 = vld [vmem:[%s1 + $0x8a8] sm:$0xff]
    %v312 = vld [vmem:[%s1 + $0x8b0] sm:$0xff]
    %v313 = vld [vmem:[%s1 + $0x8b8] sm:$0xff]
    %v314 = vld [vmem:[%s1 + $0x8c0] sm:$0xff]
    %v315 = vld [vmem:[%s1 + $0x8c8] sm:$0xff]
    %v316 = vld [vmem:[%s1 + $0x8d0] sm:$0xff]
    %v317 = vld [vmem:[%s1 + $0x8d8] sm:$0xff]
    %v318 = vld [vmem:[%s1 + $0x8e0] sm:$0xff]
    %v319 = vld [vmem:[%s1 + $0x8e8] sm:$0xff]
    %v320 = vld [vmem:[%s1 + $0x8f0] sm:$0xff]
    %v321 = vld [vmem:[%s1 + $0x8f8] sm:$0xff]
    %v322 = vld [vmem:[%s1 + $0x900] sm:$0xff]
    %v323 = vld [vmem:[%s1 + $0x908] sm:$0xff]
    %v324 = vld [vmem:[%s1 + $0x910] sm:$0xff]
    %v325 = vld [vmem:[%s1 + $0x918] sm:$0xff]
    %v326 = vld [vmem:[%s1 + $0x920] sm:$0xff]
    %v327 = vld [vmem:[%s1 + $0x928] sm:$0xff]
    %v328 = vld [vmem:[%s1 + $0x930] sm:$0xff]
    %v329 = vld [vmem:[%s1 + $0x938] sm:$0xff]
    %v330 = vld [vmem:[%s1 + $0x940] sm:$0xff]
    %v331 = vld [vmem:[%s1 + $0x948] sm:$0xff]
    %v332 = vld [vmem:[%s1 + $0x950] sm:$0xff]
    %v333 = vld [vmem:[%s1 + $0x958] sm:$0xff]
    %v334 = vld [vmem:[%s1 + $0x960] sm:$0xff]
    %v335 = vld [vmem:[%s1 + $0x968] sm:$0xff]
    %v336 = vld [vmem:[%s1 + $0x970] sm:$0xff]
    %v337 = vld [vmem:[%s1 + $0x978] sm:$0xff]
    %v338 = vld [vmem:[%s1 + $0x980] sm:$0xff]
    %v339 = vld [vmem:[%s1 + $0x988] sm:$0xff]
    %v340 = vld [vmem:[%s1 + $0x990] sm:$0xff]
    %v341 = vld [vmem:[%s1 + $0x998] sm:$0xff]
    %v342 = vld [vmem:[%s1 + $0x9a0] sm:$0xff]
    %v343 = vld [vmem:[%s1 + $0x9a8] sm:$0xff]
    %v344 = vld [vmem:[%s1 + $0x9b0] sm:$0xff]
    %v345 = vld [vmem:[%s1 + $0x9b8] sm:$0xff]
    %v346 = vld [vmem:[%s1 + $0x9c0] sm:$0xff]
    %v347 = vld [vmem:[%s1 + $0x9c8] sm:$0xff]
    %v348 = vld [vmem:[%s1 + $0x9d0] sm:$0xff]
    %v349 = vld [vmem:[%s1 + $0x9d8] sm:$0xff]
    %v350 = vld [vmem:[%s1 + $0x9e0] sm:$0xff]
    %v351 = vld [vmem:[%s1 + $0x9e8] sm:$0xff]
    %v352 = vld [vmem:[%s1 + $0x9f0] sm:$0xff]
    %v353 = vld [vmem:[%s1 + $0x9f8] sm:$0xff]
    %v354 = vld [vmem:[%s1 + $0xa00] sm:$0xff]
    %v355 = vld [vmem:[%s1 + $0xa08] sm:$0xff]
    %v356 = vld [vmem:[%s1 + $0xa10] sm:$0xff]
    %v357 = vld [vmem:[%s1 + $0xa18] sm:$0xff]
    %v358 = vld [vmem:[%s1 + $0xa20] sm:$0xff]
    %v359 = vld [vmem:[%s1 + $0xa28] sm:$0xff]
    %v360 = vld [vmem:[%s1 + $0xa30] sm:$0xff]
    %v361 = vld [vmem:[%s1 + $0xa38] sm:$0xff]
    %v362 = vld [vmem:[%s1 + $0xa40] sm:$0xff]
    %v363 = vld [vmem:[%s1 + $0xa48] sm:$0xff]
    %v364 = vld [vmem:[%s1 + $0xa50] sm:$0xff]
    %v365 = vld [vmem:[%s1 + $0xa58] sm:$0xff]
    %v366 = vld [vmem:[%s1 + $0xa60] sm:$0xff]
    %v367 = vld [vmem:[%s1 + $0xa68] sm:$0xff]
    %v368 = vld [vmem:[%s1 + $0xa70] sm:$0xff]
    %v369 = vld [vmem:[%s1 + $0xa78] sm:$0xff]
    %v370 = vld [vmem:[%s1 + $0xa80] sm:$0xff]
    %v371 = vld [vmem:[%s1 + $0xa88] sm:$0xff]
    %v372 = vld [vmem:[%s1 + $0xa90] sm:$0xff]
    %v373 = vld [vmem:[%s1 + $0xa98] sm:$0xff]
    %v374 = vld [vmem:[%s1 + $0xaa0] sm:$0xff]
    %v375 = vld [vmem:[%s1 + $0xaa8] sm:$0xff]
    %v376 = vld [vmem:[%s1 + $0xab0] sm:$0xff]
    %v377 = vld [vmem:[%s1 + $0xab8] sm:$0xff]
    %v378 = vld [vmem:[%s1 + $0xac0] sm:$0xff]
    %v379 = vld [vmem:[%s1 + $0xac8] sm:$0xff]
    %v380 = vld [vmem:[%s1 + $0xad0] sm:$0xff]
    %v381 = vld [vmem:[%s1 + $0xad8] sm:$0xff]
    %v382 = vld [vmem:[%s1 + $0xae0] sm:$0xff]
    %v383 = vld [vmem:[%s1 + $0xae8] sm:$0xff]
    %v384 = vld [vmem:[%s1 + $0xaf0] sm:$0xff]
    %v385 = vld [vmem:[%s1 + $0xaf8] sm:$0xff]
    %v386 = vld [vmem:[%s1 + $0xb00] sm:$0xff]
    %v387 = vld [vmem:[%s1 + $0xb08] sm:$0xff]
    %v388 = vld [vmem:[%s1 + $0xb10] sm:$0xff]
    %v389 = vld [vmem:[%s1 + $0xb18] sm:$0xff]
    %v390 = vld [vmem:[%s1 + $0xb20] sm:$0xff]
    %v391 = vld [vmem:[%s1 + $0xb28] sm:$0xff]
    %v392 = vld [vmem:[%s1 + $0xb30] sm:$0xff]
    %v393 = vld [vmem:[%s1 + $0xb38] sm:$0xff]
    %v394 = vld [vmem:[%s1 + $0xb40] sm:$0xff]
    %v395 = vld [vmem:[%s1 + $0xb48] sm:$0xff]
    %v396 = vld [vmem:[%s1 + $0xb50] sm:$0xff]
    %v397 = vld [vmem:[%s1 + $0xb58] sm:$0xff]
    %v398 = vld [vmem:[%s1 + $0xb60] sm:$0xff]
    %v399 = vld [vmem:[%s1 + $0xb68] sm:$0xff]
    %v400 = vld [vmem:[%s1 + $0xb70] sm:$0xff]
    %v401 = vld [vmem:[%s1 + $0xb78] sm:$0xff]
    %v402 = vld [vmem:[%s1 + $0xb80] sm:$0xff]
    %v403 = vld [vmem:[%s1 + $0xb88] sm:$0xff]
    %v404 = vld [vmem:[%s1 + $0xb90] sm:$0xff]
    %v405 = vld [vmem:[%s1 + $0xb98] sm:$0xff]
    %v406 = vld [vmem:[%s1 + $0xba0] sm:$0xff]
    %v407 = vld [vmem:[%s1 + $0xba8] sm:$0xff]
    %v408 = vld [vmem:[%s1 + $0xbb0] sm:$0xff]
    %v409 = vld [vmem:[%s1 + $0xbb8] sm:$0xff]
    %v410 = vld [vmem:[%s1 + $0xbc0] sm:$0xff]
    %v411 = vld [vmem:[%s1 + $0xbc8] sm:$0xff]
    %v412 = vld [vmem:[%s1 + $0xbd0] sm:$0xff]
    %v413 = vld [vmem:[%s1 + $0xbd8] sm:$0xff]
    %v414 = vld [vmem:[%s1 + $0xbe0] sm:$0xff]
    %v415 = vld [vmem:[%s1 + $0xbe8] sm:$0xff]
    %v416 = vld [vmem:[%s1 + $0xbf0] sm:$0xff]
    %v417 = vld [vmem:[%s1 + $0xbf8] sm:$0xff]
    %v418 = vld [vmem:[%s1 + $0xc00] sm:$0xff]
    %v419 = vld [vmem:[%s1 + $0xc08] sm:$0xff]
    %v420 = vld [vmem:[%s1 + $0xc10] sm:$0xff]
    %v421 = vld [vmem:[%s1 + $0xc18] sm:$0xff]
    %v422 = vld [vmem:[%s1 + $0xc20] sm:$0xff]
    %v423 = vld [vmem:[%s1 + $0xc28] sm:$0xff]
    %v424 = vld [vmem:[%s1 + $0xc30] sm:$0xff]
    %v425 = vld [vmem:[%s1 + $0xc38] sm:$0xff]
    %v426 = vld [vmem:[%s1 + $0xc40] sm:$0xff]
    %v427 = vld [vmem:[%s1 + $0xc48] sm:$0xff]
    %v428 = vld [vmem:[%s1 + $0xc50] sm:$0xff]
    %v429 = vld [vmem:[%s1 + $0xc58] sm:$0xff]
    %v430 = vld [vmem:[%s1 + $0xc60] sm:$0xff]
    %v431 = vld [vmem:[%s1 + $0xc68] sm:$0xff]
    %v432 = vld [vmem:[%s1 + $0xc70] sm:$0xff]
    %v433 = vld [vmem:[%s1 + $0xc78] sm:$0xff]
    %v434 = vld [vmem:[%s2] sm:$0x1]
    %v436 = vlaneseq
    %v437 = vshrl.u32 %v436, 7
    %v438 = vsub.s32 0, %v437
    %v439 = vrot.slane %v434, %v438
    %v448 = vcombine.high %v27, %v27
    %v450 = vunpack.c.l.s4 1983009808
    %v451 = vunpack.c.0.s8 %v450
    %v452 = vlaneseq
    %v453 = vshrl.u32 %v452, 7
    %v454 = vsub.s32 %v451, %v453
    %v455 = vrot.slane %v27, %v454
    %v457 = vunpack.c.l.s4 1983009808
    %v458 = vunpack.c.0.s8 %v457
    %v459 = vlaneseq
    %v460 = vshrl.u32 %v459, 7
    %v461 = vsub.s32 %v458, %v460
    %v462 = vrot.slane %v448, %v461
    %v463 = vcombine.high %v455, %v455
    %v464 = vcombine.high %v462, %v462
    %v465 = vcombine.high %v28, %v28
    %v467 = vunpack.c.l.s4 1983009808
    %v468 = vunpack.c.0.s8 %v467
    %v469 = vlaneseq
    %v470 = vshrl.u32 %v469, 7
    %v471 = vsub.s32 %v468, %v470
    %v472 = vrot.slane %v28, %v471
    %v474 = vunpack.c.l.s4 1983009808
    %v475 = vunpack.c.0.s8 %v474
    %v476 = vlaneseq
    %v477 = vshrl.u32 %v476, 7
    %v478 = vsub.s32 %v475, %v477
    %v479 = vrot.slane %v465, %v478
    %v480 = vcombine.high %v472, %v472
    %v481 = vcombine.high %v479, %v479
    %v482 = vcombine.high %v29, %v29
    %v484 = vunpack.c.l.s4 1983009808
    %v485 = vunpack.c.0.s8 %v484
    %v486 = vlaneseq
    %v487 = vshrl.u32 %v486, 7
    %v488 = vsub.s32 %v485, %v487
    %v489 = vrot.slane %v29, %v488
    %v491 = vunpack.c.l.s4 1983009808
    %v492 = vunpack.c.0.s8 %v491
    %v493 = vlaneseq
    %v494 = vshrl.u32 %v493, 7
    %v495 = vsub.s32 %v492, %v494
    %v496 = vrot.slane %v482, %v495
    %v497 = vcombine.high %v489, %v489
    %v498 = vcombine.high %v496, %v496
    %v499 = vcombine.high %v30, %v30
    %v501 = vunpack.c.l.s4 1983009808
    %v502 = vunpack.c.0.s8 %v501
    %v503 = vlaneseq
    %v504 = vshrl.u32 %v503, 7
    %v505 = vsub.s32 %v502, %v504
    %v506 = vrot.slane %v30, %v505
    %v508 = vunpack.c.l.s4 1983009808
    %v509 = vunpack.c.0.s8 %v508
    %v510 = vlaneseq
    %v511 = vshrl.u32 %v510, 7
    %v512 = vsub.s32 %v509, %v511
    %v513 = vrot.slane %v499, %v512
    %v514 = vcombine.high %v506, %v506
    %v515 = vcombine.high %v513, %v513
    %v516 = vcombine.high %v31, %v31
    %v518 = vunpack.c.l.s4 1983009808
    %v519 = vunpack.c.0.s8 %v518
    %v520 = vlaneseq
    %v521 = vshrl.u32 %v520, 7
    %v522 = vsub.s32 %v519, %v521
    %v523 = vrot.slane %v31, %v522
    %v525 = vunpack.c.l.s4 1983009808
    %v526 = vunpack.c.0.s8 %v525
    %v527 = vlaneseq
    %v528 = vshrl.u32 %v527, 7
    %v529 = vsub.s32 %v526, %v528
    %v530 = vrot.slane %v516, %v529
    %v531 = vcombine.high %v523, %v523
    %v532 = vcombine.high %v530, %v530
    %v533 = vcombine.high %v32, %v32
    %v535 = vunpack.c.l.s4 1983009808
    %v536 = vunpack.c.0.s8 %v535
    %v537 = vlaneseq
    %v538 = vshrl.u32 %v537, 7
    %v539 = vsub.s32 %v536, %v538
    %v540 = vrot.slane %v32, %v539
    %v542 = vunpack.c.l.s4 1983009808
    %v543 = vunpack.c.0.s8 %v542
    %v544 = vlaneseq
    %v545 = vshrl.u32 %v544, 7
    %v546 = vsub.s32 %v543, %v545
    %v547 = vrot.slane %v533, %v546
    %v548 = vcombine.high %v540, %v540
    %v549 = vcombine.high %v547, %v547
    %v551 = vunpack.c.l.s4 1983009808
    %v552 = vunpack.c.0.s8 %v551
    %v553 = vlaneseq
    %v554 = vshrl.u32 %v553, 7
    %v555 = vsub.s32 %v552, %v554
    %v556 = vrot.slane %v33, %v555
    %582 = vmatprep.subr.mxu0 0.0
    %583 = vmatpush1.msra.mxu0 %v49
    %584 = vmatprep.subr.mxu0 0.0
    %585 = vmatpush1.msra.mxu0 %v48
    %586 = vmatprep.subr.mxu0 0.0
    %587 = vmatpush1.msra.mxu0 %v47
    %588 = vmatprep.subr.mxu0 0.0
    %589 = vmatpush1.msra.mxu0 %v46
    %590 = vmatprep.subr.mxu0 0.0
    %591 = vmatpush1.msra.mxu0 %v45
    %592 = vmatprep.subr.mxu0 0.0
    %593 = vmatpush1.msra.mxu0 %v44
    %594 = vmatprep.subr.mxu0 0.0
    %595 = vmatpush1.msra.mxu0 %v43
    %596 = vmatprep.subr.mxu0 0.0
    %597 = vmatpush1.msra.mxu0 %v42
    %598 = vmatprep.subr.mxu0 0.0
    %599 = vmatpush1.msra.mxu0 %v41
    %600 = vmatprep.subr.mxu0 0.0
    %601 = vmatpush1.msra.mxu0 %v40
    %602 = vmatprep.subr.mxu0 0.0
    %603 = vmatpush1.msra.mxu0 %v39
    %604 = vmatprep.subr.mxu0 0.0
    %605 = vmatpush1.msra.mxu0 %v38
    %606 = vmatprep.subr.mxu0 0.0
    %607 = vmatpush1.msra.mxu0 %v37
    %608 = vmatprep.subr.mxu0 0.0
    %609 = vmatpush1.msra.mxu0 %v36
    %610 = vmatprep.subr.mxu0 0.0
    %611 = vmatpush1.msra.mxu0 %v35
    %612 = vmatprep.subr.mxu0 0.0
    %613 = vmatpush1.msra.mxu0 %v34
    %614 = vmatprep.subr.mxu0 0.0
    %615 = vmatpush2.msra.mxu0 %v65
    %616 = vmatprep.subr.mxu0 0.0
    %617 = vmatpush2.msra.mxu0 %v64
    %618 = vmatprep.subr.mxu0 0.0
    %619 = vmatpush2.msra.mxu0 %v63
    %620 = vmatprep.subr.mxu0 0.0
    %621 = vmatpush2.msra.mxu0 %v62
    %622 = vmatprep.subr.mxu0 0.0
    %623 = vmatpush2.msra.mxu0 %v61
    %624 = vmatprep.subr.mxu0 0.0
    %625 = vmatpush2.msra.mxu0 %v60
    %626 = vmatprep.subr.mxu0 0.0
    %627 = vmatpush2.msra.mxu0 %v59
    %628 = vmatprep.subr.mxu0 0.0
    %629 = vmatpush2.msra.mxu0 %v58
    %630 = vmatprep.subr.mxu0 0.0
    %631 = vmatpush2.msra.mxu0 %v57
    %632 = vmatprep.subr.mxu0 0.0
    %633 = vmatpush2.msra.mxu0 %v56
    %634 = vmatprep.subr.mxu0 0.0
    %635 = vmatpush2.msra.mxu0 %v55
    %636 = vmatprep.subr.mxu0 0.0
    %637 = vmatpush2.msra.mxu0 %v54
    %638 = vmatprep.subr.mxu0 0.0
    %639 = vmatpush2.msra.mxu0 %v53
    %640 = vmatprep.subr.mxu0 0.0
    %641 = vmatpush2.msra.mxu0 %v52
    %642 = vmatprep.subr.mxu0 0.0
    %643 = vmatpush2.msra.mxu0 %v51
    %644 = vmatprep.subr.mxu0 0.0
    %645 = vmatpush2.msra.mxu0 %v50
    %646 = vmatprep.mubr.f32.mxu0 %v463
    %647 = vmatmul.mubr.f32.gmra.mxu0 %v455
    %v648 = vpop.f32.mrf.mxu0
    %v649 = vadd.f32 %v439, %v648
    %v650 = vpop.f32.mrf.mxu0
    %651 = vdwg.mxu0
    %652 = vmatprep.subr.mxu0 0.0
    %653 = vmatpush1.msra.mxu0 %v81
    %654 = vmatprep.subr.mxu0 0.0
    %655 = vmatpush1.msra.mxu0 %v80
    %656 = vmatprep.subr.mxu0 0.0
    %657 = vmatpush1.msra.mxu0 %v79
    %658 = vmatprep.subr.mxu0 0.0
    %659 = vmatpush1.msra.mxu0 %v78
    %660 = vmatprep.subr.mxu0 0.0
    %661 = vmatpush1.msra.mxu0 %v77
    %662 = vmatprep.subr.mxu0 0.0
    %663 = vmatpush1.msra.mxu0 %v76
    %664 = vmatprep.subr.mxu0 0.0
    %665 = vmatpush1.msra.mxu0 %v75
    %666 = vmatprep.subr.mxu0 0.0
    %667 = vmatpush1.msra.mxu0 %v74
    %668 = vmatprep.subr.mxu0 0.0
    %669 = vmatpush1.msra.mxu0 %v73
    %670 = vmatprep.subr.mxu0 0.0
    %671 = vmatpush1.msra.mxu0 %v72
    %672 = vmatprep.subr.mxu0 0.0
    %673 = vmatpush1.msra.mxu0 %v71
    %674 = vmatprep.subr.mxu0 0.0
    %675 = vmatpush1.msra.mxu0 %v70
    %676 = vmatprep.subr.mxu0 0.0
    %677 = vmatpush1.msra.mxu0 %v69
    %678 = vmatprep.subr.mxu0 0.0
    %679 = vmatpush1.msra.mxu0 %v68
    %680 = vmatprep.subr.mxu0 0.0
    %681 = vmatpush1.msra.mxu0 %v67
    %682 = vmatprep.subr.mxu0 0.0
    %683 = vmatpush1.msra.mxu0 %v66
    %684 = vmatprep.subr.mxu0 0.0
    %685 = vmatpush2.msra.mxu0 %v97
    %686 = vmatprep.subr.mxu0 0.0
    %687 = vmatpush2.msra.mxu0 %v96
    %688 = vmatprep.subr.mxu0 0.0
    %689 = vmatpush2.msra.mxu0 %v95
    %690 = vmatprep.subr.mxu0 0.0
    %691 = vmatpush2.msra.mxu0 %v94
    %692 = vmatprep.subr.mxu0 0.0
    %693 = vmatpush2.msra.mxu0 %v93
    %694 = vmatprep.subr.mxu0 0.0
    %695 = vmatpush2.msra.mxu0 %v92
    %696 = vmatprep.subr.mxu0 0.0
    %697 = vmatpush2.msra.mxu0 %v91
    %698 = vmatprep.subr.mxu0 0.0
    %699 = vmatpush2.msra.mxu0 %v90
    %700 = vmatprep.subr.mxu0 0.0
    %701 = vmatpush2.msra.mxu0 %v89
    %702 = vmatprep.subr.mxu0 0.0
    %703 = vmatpush2.msra.mxu0 %v88
    %704 = vmatprep.subr.mxu0 0.0
    %705 = vmatpush2.msra.mxu0 %v87
    %706 = vmatprep.subr.mxu0 0.0
    %707 = vmatpush2.msra.mxu0 %v86
    %708 = vmatprep.subr.mxu0 0.0
    %709 = vmatpush2.msra.mxu0 %v85
    %710 = vmatprep.subr.mxu0 0.0
    %711 = vmatpush2.msra.mxu0 %v84
    %712 = vmatprep.subr.mxu0 0.0
    %713 = vmatpush2.msra.mxu0 %v83
    %714 = vmatprep.subr.mxu0 0.0
    %715 = vmatpush2.msra.mxu0 %v82
    %716 = vmatprep.mubr.f32.mxu0 %v464
    %717 = vmatmul.mubr.f32.gmra.mxu0 %v462
    %v718 = vpop.f32.mrf.mxu0
    %v719 = vadd.f32 %v649, %v718
    %v720 = vpop.f32.mrf.mxu0
    %721 = vdwg.mxu0
    %722 = vmatprep.subr.mxu0 0.0
    %723 = vmatpush1.msra.mxu0 %v113
    %724 = vmatprep.subr.mxu0 0.0
    %725 = vmatpush1.msra.mxu0 %v112
    %726 = vmatprep.subr.mxu0 0.0
    %727 = vmatpush1.msra.mxu0 %v111
    %728 = vmatprep.subr.mxu0 0.0
    %729 = vmatpush1.msra.mxu0 %v110
    %730 = vmatprep.subr.mxu0 0.0
    %731 = vmatpush1.msra.mxu0 %v109
    %732 = vmatprep.subr.mxu0 0.0
    %733 = vmatpush1.msra.mxu0 %v108
    %734 = vmatprep.subr.mxu0 0.0
    %735 = vmatpush1.msra.mxu0 %v107
    %736 = vmatprep.subr.mxu0 0.0
    %737 = vmatpush1.msra.mxu0 %v106
    %738 = vmatprep.subr.mxu0 0.0
    %739 = vmatpush1.msra.mxu0 %v105
    %740 = vmatprep.subr.mxu0 0.0
    %741 = vmatpush1.msra.mxu0 %v104
    %742 = vmatprep.subr.mxu0 0.0
    %743 = vmatpush1.msra.mxu0 %v103
    %744 = vmatprep.subr.mxu0 0.0
    %745 = vmatpush1.msra.mxu0 %v102
    %746 = vmatprep.subr.mxu0 0.0
    %747 = vmatpush1.msra.mxu0 %v101
    %748 = vmatprep.subr.mxu0 0.0
    %749 = vmatpush1.msra.mxu0 %v100
    %750 = vmatprep.subr.mxu0 0.0
    %751 = vmatpush1.msra.mxu0 %v99
    %752 = vmatprep.subr.mxu0 0.0
    %753 = vmatpush1.msra.mxu0 %v98
    %754 = vmatprep.subr.mxu0 0.0
    %755 = vmatpush2.msra.mxu0 %v129
    %756 = vmatprep.subr.mxu0 0.0
    %757 = vmatpush2.msra.mxu0 %v128
    %758 = vmatprep.subr.mxu0 0.0
    %759 = vmatpush2.msra.mxu0 %v127
    %760 = vmatprep.subr.mxu0 0.0
    %761 = vmatpush2.msra.mxu0 %v126
    %762 = vmatprep.subr.mxu0 0.0
    %763 = vmatpush2.msra.mxu0 %v125
    %764 = vmatprep.subr.mxu0 0.0
    %765 = vmatpush2.msra.mxu0 %v124
    %766 = vmatprep.subr.mxu0 0.0
    %767 = vmatpush2.msra.mxu0 %v123
    %768 = vmatprep.subr.mxu0 0.0
    %769 = vmatpush2.msra.mxu0 %v122
    %770 = vmatprep.subr.mxu0 0.0
    %771 = vmatpush2.msra.mxu0 %v121
    %772 = vmatprep.subr.mxu0 0.0
    %773 = vmatpush2.msra.mxu0 %v120
    %774 = vmatprep.subr.mxu0 0.0
    %775 = vmatpush2.msra.mxu0 %v119
    %776 = vmatprep.subr.mxu0 0.0
    %777 = vmatpush2.msra.mxu0 %v118
    %778 = vmatprep.subr.mxu0 0.0
    %779 = vmatpush2.msra.mxu0 %v117
    %780 = vmatprep.subr.mxu0 0.0
    %781 = vmatpush2.msra.mxu0 %v116
    %782 = vmatprep.subr.mxu0 0.0
    %783 = vmatpush2.msra.mxu0 %v115
    %784 = vmatprep.subr.mxu0 0.0
    %785 = vmatpush2.msra.mxu0 %v114
    %786 = vmatprep.mubr.f32.mxu0 %v480
    %787 = vmatmul.mubr.f32.gmra.mxu0 %v472
    %v788 = vpop.f32.mrf.mxu0
    %v789 = vadd.f32 %v719, %v788
    %v790 = vpop.f32.mrf.mxu0
    %791 = vdwg.mxu0
    %792 = vmatprep.subr.mxu0 0.0
    %793 = vmatpush1.msra.mxu0 %v145
    %794 = vmatprep.subr.mxu0 0.0
    %795 = vmatpush1.msra.mxu0 %v144
    %796 = vmatprep.subr.mxu0 0.0
    %797 = vmatpush1.msra.mxu0 %v143
    %798 = vmatprep.subr.mxu0 0.0
    %799 = vmatpush1.msra.mxu0 %v142
    %800 = vmatprep.subr.mxu0 0.0
    %801 = vmatpush1.msra.mxu0 %v141
    %802 = vmatprep.subr.mxu0 0.0
    %803 = vmatpush1.msra.mxu0 %v140
    %804 = vmatprep.subr.mxu0 0.0
    %805 = vmatpush1.msra.mxu0 %v139
    %806 = vmatprep.subr.mxu0 0.0
    %807 = vmatpush1.msra.mxu0 %v138
    %808 = vmatprep.subr.mxu0 0.0
    %809 = vmatpush1.msra.mxu0 %v137
    %810 = vmatprep.subr.mxu0 0.0
    %811 = vmatpush1.msra.mxu0 %v136
    %812 = vmatprep.subr.mxu0 0.0
    %813 = vmatpush1.msra.mxu0 %v135
    %814 = vmatprep.subr.mxu0 0.0
    %815 = vmatpush1.msra.mxu0 %v134
    %816 = vmatprep.subr.mxu0 0.0
    %817 = vmatpush1.msra.mxu0 %v133
    %818 = vmatprep.subr.mxu0 0.0
    %819 = vmatpush1.msra.mxu0 %v132
    %820 = vmatprep.subr.mxu0 0.0
    %821 = vmatpush1.msra.mxu0 %v131
    %822 = vmatprep.subr.mxu0 0.0
    %823 = vmatpush1.msra.mxu0 %v130
    %824 = vmatprep.subr.mxu0 0.0
    %825 = vmatpush2.msra.mxu0 %v161
    %826 = vmatprep.subr.mxu0 0.0
    %827 = vmatpush2.msra.mxu0 %v160
    %828 = vmatprep.subr.mxu0 0.0
    %829 = vmatpush2.msra.mxu0 %v159
    %830 = vmatprep.subr.mxu0 0.0
    %831 = vmatpush2.msra.mxu0 %v158
    %832 = vmatprep.subr.mxu0 0.0
    %833 = vmatpush2.msra.mxu0 %v157
    %834 = vmatprep.subr.mxu0 0.0
    %835 = vmatpush2.msra.mxu0 %v156
    %836 = vmatprep.subr.mxu0 0.0
    %837 = vmatpush2.msra.mxu0 %v155
    %838 = vmatprep.subr.mxu0 0.0
    %839 = vmatpush2.msra.mxu0 %v154
    %840 = vmatprep.subr.mxu0 0.0
    %841 = vmatpush2.msra.mxu0 %v153
    %842 = vmatprep.subr.mxu0 0.0
    %843 = vmatpush2.msra.mxu0 %v152
    %844 = vmatprep.subr.mxu0 0.0
    %845 = vmatpush2.msra.mxu0 %v151
    %846 = vmatprep.subr.mxu0 0.0
    %847 = vmatpush2.msra.mxu0 %v150
    %848 = vmatprep.subr.mxu0 0.0
    %849 = vmatpush2.msra.mxu0 %v149
    %850 = vmatprep.subr.mxu0 0.0
    %851 = vmatpush2.msra.mxu0 %v148
    %852 = vmatprep.subr.mxu0 0.0
    %853 = vmatpush2.msra.mxu0 %v147
    %854 = vmatprep.subr.mxu0 0.0
    %855 = vmatpush2.msra.mxu0 %v146
    %856 = vmatprep.mubr.f32.mxu0 %v481
    %857 = vmatmul.mubr.f32.gmra.mxu0 %v479
    %v858 = vpop.f32.mrf.mxu0
    %v859 = vadd.f32 %v789, %v858
    %v860 = vpop.f32.mrf.mxu0
    %861 = vdwg.mxu0
    %862 = vmatprep.subr.mxu0 0.0
    %863 = vmatpush1.msra.mxu0 %v177
    %864 = vmatprep.subr.mxu0 0.0
    %865 = vmatpush1.msra.mxu0 %v176
    %866 = vmatprep.subr.mxu0 0.0
    %867 = vmatpush1.msra.mxu0 %v175
    %868 = vmatprep.subr.mxu0 0.0
    %869 = vmatpush1.msra.mxu0 %v174
    %870 = vmatprep.subr.mxu0 0.0
    %871 = vmatpush1.msra.mxu0 %v173
    %872 = vmatprep.subr.mxu0 0.0
    %873 = vmatpush1.msra.mxu0 %v172
    %874 = vmatprep.subr.mxu0 0.0
    %875 = vmatpush1.msra.mxu0 %v171
    %876 = vmatprep.subr.mxu0 0.0
    %877 = vmatpush1.msra.mxu0 %v170
    %878 = vmatprep.subr.mxu0 0.0
    %879 = vmatpush1.msra.mxu0 %v169
    %880 = vmatprep.subr.mxu0 0.0
    %881 = vmatpush1.msra.mxu0 %v168
    %882 = vmatprep.subr.mxu0 0.0
    %883 = vmatpush1.msra.mxu0 %v167
    %884 = vmatprep.subr.mxu0 0.0
    %885 = vmatpush1.msra.mxu0 %v166
    %886 = vmatprep.subr.mxu0 0.0
    %887 = vmatpush1.msra.mxu0 %v165
    %888 = vmatprep.subr.mxu0 0.0
    %889 = vmatpush1.msra.mxu0 %v164
    %890 = vmatprep.subr.mxu0 0.0
    %891 = vmatpush1.msra.mxu0 %v163
    %892 = vmatprep.subr.mxu0 0.0
    %893 = vmatpush1.msra.mxu0 %v162
    %894 = vmatprep.subr.mxu0 0.0
    %895 = vmatpush2.msra.mxu0 %v193
    %896 = vmatprep.subr.mxu0 0.0
    %897 = vmatpush2.msra.mxu0 %v192
    %898 = vmatprep.subr.mxu0 0.0
    %899 = vmatpush2.msra.mxu0 %v191
    %900 = vmatprep.subr.mxu0 0.0
    %901 = vmatpush2.msra.mxu0 %v190
    %902 = vmatprep.subr.mxu0 0.0
    %903 = vmatpush2.msra.mxu0 %v189
    %904 = vmatprep.subr.mxu0 0.0
    %905 = vmatpush2.msra.mxu0 %v188
    %906 = vmatprep.subr.mxu0 0.0
    %907 = vmatpush2.msra.mxu0 %v187
    %908 = vmatprep.subr.mxu0 0.0
    %909 = vmatpush2.msra.mxu0 %v186
    %910 = vmatprep.subr.mxu0 0.0
    %911 = vmatpush2.msra.mxu0 %v185
    %912 = vmatprep.subr.mxu0 0.0
    %913 = vmatpush2.msra.mxu0 %v184
    %914 = vmatprep.subr.mxu0 0.0
    %915 = vmatpush2.msra.mxu0 %v183
    %916 = vmatprep.subr.mxu0 0.0
    %917 = vmatpush2.msra.mxu0 %v182
    %918 = vmatprep.subr.mxu0 0.0
    %919 = vmatpush2.msra.mxu0 %v181
    %920 = vmatprep.subr.mxu0 0.0
    %921 = vmatpush2.msra.mxu0 %v180
    %922 = vmatprep.subr.mxu0 0.0
    %923 = vmatpush2.msra.mxu0 %v179
    %924 = vmatprep.subr.mxu0 0.0
    %925 = vmatpush2.msra.mxu0 %v178
    %926 = vmatprep.mubr.f32.mxu0 %v497
    %927 = vmatmul.mubr.f32.gmra.mxu0 %v489
    %v928 = vpop.f32.mrf.mxu0
    %v929 = vadd.f32 %v859, %v928
    %v930 = vpop.f32.mrf.mxu0
    %931 = vdwg.mxu0
    %932 = vmatprep.subr.mxu0 0.0
    %933 = vmatpush1.msra.mxu0 %v209
    %934 = vmatprep.subr.mxu0 0.0
    %935 = vmatpush1.msra.mxu0 %v208
    %936 = vmatprep.subr.mxu0 0.0
    %937 = vmatpush1.msra.mxu0 %v207
    %938 = vmatprep.subr.mxu0 0.0
    %939 = vmatpush1.msra.mxu0 %v206
    %940 = vmatprep.subr.mxu0 0.0
    %941 = vmatpush1.msra.mxu0 %v205
    %942 = vmatprep.subr.mxu0 0.0
    %943 = vmatpush1.msra.mxu0 %v204
    %944 = vmatprep.subr.mxu0 0.0
    %945 = vmatpush1.msra.mxu0 %v203
    %946 = vmatprep.subr.mxu0 0.0
    %947 = vmatpush1.msra.mxu0 %v202
    %948 = vmatprep.subr.mxu0 0.0
    %949 = vmatpush1.msra.mxu0 %v201
    %950 = vmatprep.subr.mxu0 0.0
    %951 = vmatpush1.msra.mxu0 %v200
    %952 = vmatprep.subr.mxu0 0.0
    %953 = vmatpush1.msra.mxu0 %v199
    %954 = vmatprep.subr.mxu0 0.0
    %955 = vmatpush1.msra.mxu0 %v198
    %956 = vmatprep.subr.mxu0 0.0
    %957 = vmatpush1.msra.mxu0 %v197
    %958 = vmatprep.subr.mxu0 0.0
    %959 = vmatpush1.msra.mxu0 %v196
    %960 = vmatprep.subr.mxu0 0.0
    %961 = vmatpush1.msra.mxu0 %v195
    %962 = vmatprep.subr.mxu0 0.0
    %963 = vmatpush1.msra.mxu0 %v194
    %964 = vmatprep.subr.mxu0 0.0
    %965 = vmatpush2.msra.mxu0 %v225
    %966 = vmatprep.subr.mxu0 0.0
    %967 = vmatpush2.msra.mxu0 %v224
    %968 = vmatprep.subr.mxu0 0.0
    %969 = vmatpush2.msra.mxu0 %v223
    %970 = vmatprep.subr.mxu0 0.0
    %971 = vmatpush2.msra.mxu0 %v222
    %972 = vmatprep.subr.mxu0 0.0
    %973 = vmatpush2.msra.mxu0 %v221
    %974 = vmatprep.subr.mxu0 0.0
    %975 = vmatpush2.msra.mxu0 %v220
    %976 = vmatprep.subr.mxu0 0.0
    %977 = vmatpush2.msra.mxu0 %v219
    %978 = vmatprep.subr.mxu0 0.0
    %979 = vmatpush2.msra.mxu0 %v218
    %980 = vmatprep.subr.mxu0 0.0
    %981 = vmatpush2.msra.mxu0 %v217
    %982 = vmatprep.subr.mxu0 0.0
    %983 = vmatpush2.msra.mxu0 %v216
    %984 = vmatprep.subr.mxu0 0.0
    %985 = vmatpush2.msra.mxu0 %v215
    %986 = vmatprep.subr.mxu0 0.0
    %987 = vmatpush2.msra.mxu0 %v214
    %988 = vmatprep.subr.mxu0 0.0
    %989 = vmatpush2.msra.mxu0 %v213
    %990 = vmatprep.subr.mxu0 0.0
    %991 = vmatpush2.msra.mxu0 %v212
    %992 = vmatprep.subr.mxu0 0.0
    %993 = vmatpush2.msra.mxu0 %v211
    %994 = vmatprep.subr.mxu0 0.0
    %995 = vmatpush2.msra.mxu0 %v210
    %996 = vmatprep.mubr.f32.mxu0 %v498
    %997 = vmatmul.mubr.f32.gmra.mxu0 %v496
    %v998 = vpop.f32.mrf.mxu0
    %v999 = vadd.f32 %v929, %v998
    %v1000 = vpop.f32.mrf.mxu0
    %1001 = vdwg.mxu0
    %1002 = vmatprep.subr.mxu0 0.0
    %1003 = vmatpush1.msra.mxu0 %v241
    %1004 = vmatprep.subr.mxu0 0.0
    %1005 = vmatpush1.msra.mxu0 %v240
    %1006 = vmatprep.subr.mxu0 0.0
    %1007 = vmatpush1.msra.mxu0 %v239
    %1008 = vmatprep.subr.mxu0 0.0
    %1009 = vmatpush1.msra.mxu0 %v238
    %1010 = vmatprep.subr.mxu0 0.0
    %1011 = vmatpush1.msra.mxu0 %v237
    %1012 = vmatprep.subr.mxu0 0.0
    %1013 = vmatpush1.msra.mxu0 %v236
    %1014 = vmatprep.subr.mxu0 0.0
    %1015 = vmatpush1.msra.mxu0 %v235
    %1016 = vmatprep.subr.mxu0 0.0
    %1017 = vmatpush1.msra.mxu0 %v234
    %1018 = vmatprep.subr.mxu0 0.0
    %1019 = vmatpush1.msra.mxu0 %v233
    %1020 = vmatprep.subr.mxu0 0.0
    %1021 = vmatpush1.msra.mxu0 %v232
    %1022 = vmatprep.subr.mxu0 0.0
    %1023 = vmatpush1.msra.mxu0 %v231
    %1024 = vmatprep.subr.mxu0 0.0
    %1025 = vmatpush1.msra.mxu0 %v230
    %1026 = vmatprep.subr.mxu0 0.0
    %1027 = vmatpush1.msra.mxu0 %v229
    %1028 = vmatprep.subr.mxu0 0.0
    %1029 = vmatpush1.msra.mxu0 %v228
    %1030 = vmatprep.subr.mxu0 0.0
    %1031 = vmatpush1.msra.mxu0 %v227
    %1032 = vmatprep.subr.mxu0 0.0
    %1033 = vmatpush1.msra.mxu0 %v226
    %1034 = vmatprep.subr.mxu0 0.0
    %1035 = vmatpush2.msra.mxu0 %v257
    %1036 = vmatprep.subr.mxu0 0.0
    %1037 = vmatpush2.msra.mxu0 %v256
    %1038 = vmatprep.subr.mxu0 0.0
    %1039 = vmatpush2.msra.mxu0 %v255
    %1040 = vmatprep.subr.mxu0 0.0
    %1041 = vmatpush2.msra.mxu0 %v254
    %1042 = vmatprep.subr.mxu0 0.0
    %1043 = vmatpush2.msra.mxu0 %v253
    %1044 = vmatprep.subr.mxu0 0.0
    %1045 = vmatpush2.msra.mxu0 %v252
    %1046 = vmatprep.subr.mxu0 0.0
    %1047 = vmatpush2.msra.mxu0 %v251
    %1048 = vmatprep.subr.mxu0 0.0
    %1049 = vmatpush2.msra.mxu0 %v250
    %1050 = vmatprep.subr.mxu0 0.0
    %1051 = vmatpush2.msra.mxu0 %v249
    %1052 = vmatprep.subr.mxu0 0.0
    %1053 = vmatpush2.msra.mxu0 %v248
    %1054 = vmatprep.subr.mxu0 0.0
    %1055 = vmatpush2.msra.mxu0 %v247
    %1056 = vmatprep.subr.mxu0 0.0
    %1057 = vmatpush2.msra.mxu0 %v246
    %1058 = vmatprep.subr.mxu0 0.0
    %1059 = vmatpush2.msra.mxu0 %v245
    %1060 = vmatprep.subr.mxu0 0.0
    %1061 = vmatpush2.msra.mxu0 %v244
    %1062 = vmatprep.subr.mxu0 0.0
    %1063 = vmatpush2.msra.mxu0 %v243
    %1064 = vmatprep.subr.mxu0 0.0
    %1065 = vmatpush2.msra.mxu0 %v242
    %1066 = vmatprep.mubr.f32.mxu0 %v514
    %1067 = vmatmul.mubr.f32.gmra.mxu0 %v506
    %v1068 = vpop.f32.mrf.mxu0
    %v1069 = vadd.f32 %v999, %v1068
    %v1070 = vpop.f32.mrf.mxu0
    %1071 = vdwg.mxu0
    %1072 = vmatprep.subr.mxu0 0.0
    %1073 = vmatpush1.msra.mxu0 %v273
    %1074 = vmatprep.subr.mxu0 0.0
    %1075 = vmatpush1.msra.mxu0 %v272
    %1076 = vmatprep.subr.mxu0 0.0
    %1077 = vmatpush1.msra.mxu0 %v271
    %1078 = vmatprep.subr.mxu0 0.0
    %1079 = vmatpush1.msra.mxu0 %v270
    %1080 = vmatprep.subr.mxu0 0.0
    %1081 = vmatpush1.msra.mxu0 %v269
    %1082 = vmatprep.subr.mxu0 0.0
    %1083 = vmatpush1.msra.mxu0 %v268
    %1084 = vmatprep.subr.mxu0 0.0
    %1085 = vmatpush1.msra.mxu0 %v267
    %1086 = vmatprep.subr.mxu0 0.0
    %1087 = vmatpush1.msra.mxu0 %v266
    %1088 = vmatprep.subr.mxu0 0.0
    %1089 = vmatpush1.msra.mxu0 %v265
    %1090 = vmatprep.subr.mxu0 0.0
    %1091 = vmatpush1.msra.mxu0 %v264
    %1092 = vmatprep.subr.mxu0 0.0
    %1093 = vmatpush1.msra.mxu0 %v263
    %1094 = vmatprep.subr.mxu0 0.0
    %1095 = vmatpush1.msra.mxu0 %v262
    %1096 = vmatprep.subr.mxu0 0.0
    %1097 = vmatpush1.msra.mxu0 %v261
    %1098 = vmatprep.subr.mxu0 0.0
    %1099 = vmatpush1.msra.mxu0 %v260
    %1100 = vmatprep.subr.mxu0 0.0
    %1101 = vmatpush1.msra.mxu0 %v259
    %1102 = vmatprep.subr.mxu0 0.0
    %1103 = vmatpush1.msra.mxu0 %v258
    %1104 = vmatprep.subr.mxu0 0.0
    %1105 = vmatpush2.msra.mxu0 %v289
    %1106 = vmatprep.subr.mxu0 0.0
    %1107 = vmatpush2.msra.mxu0 %v288
    %1108 = vmatprep.subr.mxu0 0.0
    %1109 = vmatpush2.msra.mxu0 %v287
    %1110 = vmatprep.subr.mxu0 0.0
    %1111 = vmatpush2.msra.mxu0 %v286
    %1112 = vmatprep.subr.mxu0 0.0
    %1113 = vmatpush2.msra.mxu0 %v285
    %1114 = vmatprep.subr.mxu0 0.0
    %1115 = vmatpush2.msra.mxu0 %v284
    %1116 = vmatprep.subr.mxu0 0.0
    %1117 = vmatpush2.msra.mxu0 %v283
    %1118 = vmatprep.subr.mxu0 0.0
    %1119 = vmatpush2.msra.mxu0 %v282
    %1120 = vmatprep.subr.mxu0 0.0
    %1121 = vmatpush2.msra.mxu0 %v281
    %1122 = vmatprep.subr.mxu0 0.0
    %1123 = vmatpush2.msra.mxu0 %v280
    %1124 = vmatprep.subr.mxu0 0.0
    %1125 = vmatpush2.msra.mxu0 %v279
    %1126 = vmatprep.subr.mxu0 0.0
    %1127 = vmatpush2.msra.mxu0 %v278
    %1128 = vmatprep.subr.mxu0 0.0
    %1129 = vmatpush2.msra.mxu0 %v277
    %1130 = vmatprep.subr.mxu0 0.0
    %1131 = vmatpush2.msra.mxu0 %v276
    %1132 = vmatprep.subr.mxu0 0.0
    %1133 = vmatpush2.msra.mxu0 %v275
    %1134 = vmatprep.subr.mxu0 0.0
    %1135 = vmatpush2.msra.mxu0 %v274
    %1136 = vmatprep.mubr.f32.mxu0 %v515
    %1137 = vmatmul.mubr.f32.gmra.mxu0 %v513
    %v1138 = vpop.f32.mrf.mxu0
    %v1139 = vadd.f32 %v1069, %v1138
    %v1140 = vpop.f32.mrf.mxu0
    %1141 = vdwg.mxu0
    %1142 = vmatprep.subr.mxu0 0.0
    %1143 = vmatpush1.msra.mxu0 %v305
    %1144 = vmatprep.subr.mxu0 0.0
    %1145 = vmatpush1.msra.mxu0 %v304
    %1146 = vmatprep.subr.mxu0 0.0
    %1147 = vmatpush1.msra.mxu0 %v303
    %1148 = vmatprep.subr.mxu0 0.0
    %1149 = vmatpush1.msra.mxu0 %v302
    %1150 = vmatprep.subr.mxu0 0.0
    %1151 = vmatpush1.msra.mxu0 %v301
    %1152 = vmatprep.subr.mxu0 0.0
    %1153 = vmatpush1.msra.mxu0 %v300
    %1154 = vmatprep.subr.mxu0 0.0
    %1155 = vmatpush1.msra.mxu0 %v299
    %1156 = vmatprep.subr.mxu0 0.0
    %1157 = vmatpush1.msra.mxu0 %v298
    %1158 = vmatprep.subr.mxu0 0.0
    %1159 = vmatpush1.msra.mxu0 %v297
    %1160 = vmatprep.subr.mxu0 0.0
    %1161 = vmatpush1.msra.mxu0 %v296
    %1162 = vmatprep.subr.mxu0 0.0
    %1163 = vmatpush1.msra.mxu0 %v295
    %1164 = vmatprep.subr.mxu0 0.0
    %1165 = vmatpush1.msra.mxu0 %v294
    %1166 = vmatprep.subr.mxu0 0.0
    %1167 = vmatpush1.msra.mxu0 %v293
    %1168 = vmatprep.subr.mxu0 0.0
    %1169 = vmatpush1.msra.mxu0 %v292
    %1170 = vmatprep.subr.mxu0 0.0
    %1171 = vmatpush1.msra.mxu0 %v291
    %1172 = vmatprep.subr.mxu0 0.0
    %1173 = vmatpush1.msra.mxu0 %v290
    %1174 = vmatprep.subr.mxu0 0.0
    %1175 = vmatpush2.msra.mxu0 %v321
    %1176 = vmatprep.subr.mxu0 0.0
    %1177 = vmatpush2.msra.mxu0 %v320
    %1178 = vmatprep.subr.mxu0 0.0
    %1179 = vmatpush2.msra.mxu0 %v319
    %1180 = vmatprep.subr.mxu0 0.0
    %1181 = vmatpush2.msra.mxu0 %v318
    %1182 = vmatprep.subr.mxu0 0.0
    %1183 = vmatpush2.msra.mxu0 %v317
    %1184 = vmatprep.subr.mxu0 0.0
    %1185 = vmatpush2.msra.mxu0 %v316
    %1186 = vmatprep.subr.mxu0 0.0
    %1187 = vmatpush2.msra.mxu0 %v315
    %1188 = vmatprep.subr.mxu0 0.0
    %1189 = vmatpush2.msra.mxu0 %v314
    %1190 = vmatprep.subr.mxu0 0.0
    %1191 = vmatpush2.msra.mxu0 %v313
    %1192 = vmatprep.subr.mxu0 0.0
    %1193 = vmatpush2.msra.mxu0 %v312
    %1194 = vmatprep.subr.mxu0 0.0
    %1195 = vmatpush2.msra.mxu0 %v311
    %1196 = vmatprep.subr.mxu0 0.0
    %1197 = vmatpush2.msra.mxu0 %v310
    %1198 = vmatprep.subr.mxu0 0.0
    %1199 = vmatpush2.msra.mxu0 %v309
    %1200 = vmatprep.subr.mxu0 0.0
    %1201 = vmatpush2.msra.mxu0 %v308
    %1202 = vmatprep.subr.mxu0 0.0
    %1203 = vmatpush2.msra.mxu0 %v307
    %1204 = vmatprep.subr.mxu0 0.0
    %1205 = vmatpush2.msra.mxu0 %v306
    %1206 = vmatprep.mubr.f32.mxu0 %v531
    %1207 = vmatmul.mubr.f32.gmra.mxu0 %v523
    %v1208 = vpop.f32.mrf.mxu0
    %v1209 = vadd.f32 %v1139, %v1208
    %v1210 = vpop.f32.mrf.mxu0
    %1211 = vdwg.mxu0
    %1212 = vmatprep.subr.mxu0 0.0
    %1213 = vmatpush1.msra.mxu0 %v337
    %1214 = vmatprep.subr.mxu0 0.0
    %1215 = vmatpush1.msra.mxu0 %v336
    %1216 = vmatprep.subr.mxu0 0.0
    %1217 = vmatpush1.msra.mxu0 %v335
    %1218 = vmatprep.subr.mxu0 0.0
    %1219 = vmatpush1.msra.mxu0 %v334
    %1220 = vmatprep.subr.mxu0 0.0
    %1221 = vmatpush1.msra.mxu0 %v333
    %1222 = vmatprep.subr.mxu0 0.0
    %1223 = vmatpush1.msra.mxu0 %v332
    %1224 = vmatprep.subr.mxu0 0.0
    %1225 = vmatpush1.msra.mxu0 %v331
    %1226 = vmatprep.subr.mxu0 0.0
    %1227 = vmatpush1.msra.mxu0 %v330
    %1228 = vmatprep.subr.mxu0 0.0
    %1229 = vmatpush1.msra.mxu0 %v329
    %1230 = vmatprep.subr.mxu0 0.0
    %1231 = vmatpush1.msra.mxu0 %v328
    %1232 = vmatprep.subr.mxu0 0.0
    %1233 = vmatpush1.msra.mxu0 %v327
    %1234 = vmatprep.subr.mxu0 0.0
    %1235 = vmatpush1.msra.mxu0 %v326
    %1236 = vmatprep.subr.mxu0 0.0
    %1237 = vmatpush1.msra.mxu0 %v325
    %1238 = vmatprep.subr.mxu0 0.0
    %1239 = vmatpush1.msra.mxu0 %v324
    %1240 = vmatprep.subr.mxu0 0.0
    %1241 = vmatpush1.msra.mxu0 %v323
    %1242 = vmatprep.subr.mxu0 0.0
    %1243 = vmatpush1.msra.mxu0 %v322
    %1244 = vmatprep.subr.mxu0 0.0
    %1245 = vmatpush2.msra.mxu0 %v353
    %1246 = vmatprep.subr.mxu0 0.0
    %1247 = vmatpush2.msra.mxu0 %v352
    %1248 = vmatprep.subr.mxu0 0.0
    %1249 = vmatpush2.msra.mxu0 %v351
    %1250 = vmatprep.subr.mxu0 0.0
    %1251 = vmatpush2.msra.mxu0 %v350
    %1252 = vmatprep.subr.mxu0 0.0
    %1253 = vmatpush2.msra.mxu0 %v349
    %1254 = vmatprep.subr.mxu0 0.0
    %1255 = vmatpush2.msra.mxu0 %v348
    %1256 = vmatprep.subr.mxu0 0.0
    %1257 = vmatpush2.msra.mxu0 %v347
    %1258 = vmatprep.subr.mxu0 0.0
    %1259 = vmatpush2.msra.mxu0 %v346
    %1260 = vmatprep.subr.mxu0 0.0
    %1261 = vmatpush2.msra.mxu0 %v345
    %1262 = vmatprep.subr.mxu0 0.0
    %1263 = vmatpush2.msra.mxu0 %v344
    %1264 = vmatprep.subr.mxu0 0.0
    %1265 = vmatpush2.msra.mxu0 %v343
    %1266 = vmatprep.subr.mxu0 0.0
    %1267 = vmatpush2.msra.mxu0 %v342
    %1268 = vmatprep.subr.mxu0 0.0
    %1269 = vmatpush2.msra.mxu0 %v341
    %1270 = vmatprep.subr.mxu0 0.0
    %1271 = vmatpush2.msra.mxu0 %v340
    %1272 = vmatprep.subr.mxu0 0.0
    %1273 = vmatpush2.msra.mxu0 %v339
    %1274 = vmatprep.subr.mxu0 0.0
    %1275 = vmatpush2.msra.mxu0 %v338
    %1276 = vmatprep.mubr.f32.mxu0 %v532
    %1277 = vmatmul.mubr.f32.gmra.mxu0 %v530
    %v1278 = vpop.f32.mrf.mxu0
    %v1279 = vadd.f32 %v1209, %v1278
    %v1280 = vpop.f32.mrf.mxu0
    %1281 = vdwg.mxu0
    %1282 = vmatprep.subr.mxu0 0.0
    %1283 = vmatpush1.msra.mxu0 %v369
    %1284 = vmatprep.subr.mxu0 0.0
    %1285 = vmatpush1.msra.mxu0 %v368
    %1286 = vmatprep.subr.mxu0 0.0
    %1287 = vmatpush1.msra.mxu0 %v367
    %1288 = vmatprep.subr.mxu0 0.0
    %1289 = vmatpush1.msra.mxu0 %v366
    %1290 = vmatprep.subr.mxu0 0.0
    %1291 = vmatpush1.msra.mxu0 %v365
    %1292 = vmatprep.subr.mxu0 0.0
    %1293 = vmatpush1.msra.mxu0 %v364
    %1294 = vmatprep.subr.mxu0 0.0
    %1295 = vmatpush1.msra.mxu0 %v363
    %1296 = vmatprep.subr.mxu0 0.0
    %1297 = vmatpush1.msra.mxu0 %v362
    %1298 = vmatprep.subr.mxu0 0.0
    %1299 = vmatpush1.msra.mxu0 %v361
    %1300 = vmatprep.subr.mxu0 0.0
    %1301 = vmatpush1.msra.mxu0 %v360
    %1302 = vmatprep.subr.mxu0 0.0
    %1303 = vmatpush1.msra.mxu0 %v359
    %1304 = vmatprep.subr.mxu0 0.0
    %1305 = vmatpush1.msra.mxu0 %v358
    %1306 = vmatprep.subr.mxu0 0.0
    %1307 = vmatpush1.msra.mxu0 %v357
    %1308 = vmatprep.subr.mxu0 0.0
    %1309 = vmatpush1.msra.mxu0 %v356
    %1310 = vmatprep.subr.mxu0 0.0
    %1311 = vmatpush1.msra.mxu0 %v355
    %1312 = vmatprep.subr.mxu0 0.0
    %1313 = vmatpush1.msra.mxu0 %v354
    %1314 = vmatprep.subr.mxu0 0.0
    %1315 = vmatpush2.msra.mxu0 %v385
    %1316 = vmatprep.subr.mxu0 0.0
    %1317 = vmatpush2.msra.mxu0 %v384
    %1318 = vmatprep.subr.mxu0 0.0
    %1319 = vmatpush2.msra.mxu0 %v383
    %1320 = vmatprep.subr.mxu0 0.0
    %1321 = vmatpush2.msra.mxu0 %v382
    %1322 = vmatprep.subr.mxu0 0.0
    %1323 = vmatpush2.msra.mxu0 %v381
    %1324 = vmatprep.subr.mxu0 0.0
    %1325 = vmatpush2.msra.mxu0 %v380
    %1326 = vmatprep.subr.mxu0 0.0
    %1327 = vmatpush2.msra.mxu0 %v379
    %1328 = vmatprep.subr.mxu0 0.0
    %1329 = vmatpush2.msra.mxu0 %v378
    %1330 = vmatprep.subr.mxu0 0.0
    %1331 = vmatpush2.msra.mxu0 %v377
    %1332 = vmatprep.subr.mxu0 0.0
    %1333 = vmatpush2.msra.mxu0 %v376
    %1334 = vmatprep.subr.mxu0 0.0
    %1335 = vmatpush2.msra.mxu0 %v375
    %1336 = vmatprep.subr.mxu0 0.0
    %1337 = vmatpush2.msra.mxu0 %v374
    %1338 = vmatprep.subr.mxu0 0.0
    %1339 = vmatpush2.msra.mxu0 %v373
    %1340 = vmatprep.subr.mxu0 0.0
    %1341 = vmatpush2.msra.mxu0 %v372
    %1342 = vmatprep.subr.mxu0 0.0
    %1343 = vmatpush2.msra.mxu0 %v371
    %1344 = vmatprep.subr.mxu0 0.0
    %1345 = vmatpush2.msra.mxu0 %v370
    %1346 = vmatprep.mubr.f32.mxu0 %v548
    %1347 = vmatmul.mubr.f32.gmra.mxu0 %v540
    %v1348 = vpop.f32.mrf.mxu0
    %v1349 = vadd.f32 %v1279, %v1348
    %v1350 = vpop.f32.mrf.mxu0
    %1351 = vdwg.mxu0
    %1352 = vmatprep.subr.mxu0 0.0
    %1353 = vmatpush1.msra.mxu0 %v401
    %1354 = vmatprep.subr.mxu0 0.0
    %1355 = vmatpush1.msra.mxu0 %v400
    %1356 = vmatprep.subr.mxu0 0.0
    %1357 = vmatpush1.msra.mxu0 %v399
    %1358 = vmatprep.subr.mxu0 0.0
    %1359 = vmatpush1.msra.mxu0 %v398
    %1360 = vmatprep.subr.mxu0 0.0
    %1361 = vmatpush1.msra.mxu0 %v397
    %1362 = vmatprep.subr.mxu0 0.0
    %1363 = vmatpush1.msra.mxu0 %v396
    %1364 = vmatprep.subr.mxu0 0.0
    %1365 = vmatpush1.msra.mxu0 %v395
    %1366 = vmatprep.subr.mxu0 0.0
    %1367 = vmatpush1.msra.mxu0 %v394
    %1368 = vmatprep.subr.mxu0 0.0
    %1369 = vmatpush1.msra.mxu0 %v393
    %1370 = vmatprep.subr.mxu0 0.0
    %1371 = vmatpush1.msra.mxu0 %v392
    %1372 = vmatprep.subr.mxu0 0.0
    %1373 = vmatpush1.msra.mxu0 %v391
    %1374 = vmatprep.subr.mxu0 0.0
    %1375 = vmatpush1.msra.mxu0 %v390
    %1376 = vmatprep.subr.mxu0 0.0
    %1377 = vmatpush1.msra.mxu0 %v389
    %1378 = vmatprep.subr.mxu0 0.0
    %1379 = vmatpush1.msra.mxu0 %v388
    %1380 = vmatprep.subr.mxu0 0.0
    %1381 = vmatpush1.msra.mxu0 %v387
    %1382 = vmatprep.subr.mxu0 0.0
    %1383 = vmatpush1.msra.mxu0 %v386
    %1384 = vmatprep.subr.mxu0 0.0
    %1385 = vmatpush2.msra.mxu0 %v417
    %1386 = vmatprep.subr.mxu0 0.0
    %1387 = vmatpush2.msra.mxu0 %v416
    %1388 = vmatprep.subr.mxu0 0.0
    %1389 = vmatpush2.msra.mxu0 %v415
    %1390 = vmatprep.subr.mxu0 0.0
    %1391 = vmatpush2.msra.mxu0 %v414
    %1392 = vmatprep.subr.mxu0 0.0
    %1393 = vmatpush2.msra.mxu0 %v413
    %1394 = vmatprep.subr.mxu0 0.0
    %1395 = vmatpush2.msra.mxu0 %v412
    %1396 = vmatprep.subr.mxu0 0.0
    %1397 = vmatpush2.msra.mxu0 %v411
    %1398 = vmatprep.subr.mxu0 0.0
    %1399 = vmatpush2.msra.mxu0 %v410
    %1400 = vmatprep.subr.mxu0 0.0
    %1401 = vmatpush2.msra.mxu0 %v409
    %1402 = vmatprep.subr.mxu0 0.0
    %1403 = vmatpush2.msra.mxu0 %v408
    %1404 = vmatprep.subr.mxu0 0.0
    %1405 = vmatpush2.msra.mxu0 %v407
    %1406 = vmatprep.subr.mxu0 0.0
    %1407 = vmatpush2.msra.mxu0 %v406
    %1408 = vmatprep.subr.mxu0 0.0
    %1409 = vmatpush2.msra.mxu0 %v405
    %1410 = vmatprep.subr.mxu0 0.0
    %1411 = vmatpush2.msra.mxu0 %v404
    %1412 = vmatprep.subr.mxu0 0.0
    %1413 = vmatpush2.msra.mxu0 %v403
    %1414 = vmatprep.subr.mxu0 0.0
    %1415 = vmatpush2.msra.mxu0 %v402
    %1416 = vmatprep.mubr.f32.mxu0 %v549
    %1417 = vmatmul.mubr.f32.gmra.mxu0 %v547
    %v1418 = vpop.f32.mrf.mxu0
    %v1419 = vadd.f32 %v1349, %v1418
    %v1420 = vpop.f32.mrf.mxu0
    %1421 = vdwg.mxu0
    %1422 = vmatprep.subr.mxu0 0.0
    %1423 = vmatpush1.msra.mxu0 %v433
    %1424 = vmatprep.subr.mxu0 0.0
    %1425 = vmatpush1.msra.mxu0 %v432
    %1426 = vmatprep.subr.mxu0 0.0
    %1427 = vmatpush1.msra.mxu0 %v431
    %1428 = vmatprep.subr.mxu0 0.0
    %1429 = vmatpush1.msra.mxu0 %v430
    %1430 = vmatprep.subr.mxu0 0.0
    %1431 = vmatpush1.msra.mxu0 %v429
    %1432 = vmatprep.subr.mxu0 0.0
    %1433 = vmatpush1.msra.mxu0 %v428
    %1434 = vmatprep.subr.mxu0 0.0
    %1435 = vmatpush1.msra.mxu0 %v427
    %1436 = vmatprep.subr.mxu0 0.0
    %1437 = vmatpush1.msra.mxu0 %v426
    %1438 = vmatprep.subr.mxu0 0.0
    %1439 = vmatpush1.msra.mxu0 %v425
    %1440 = vmatprep.subr.mxu0 0.0
    %1441 = vmatpush1.msra.mxu0 %v424
    %1442 = vmatprep.subr.mxu0 0.0
    %1443 = vmatpush1.msra.mxu0 %v423
    %1444 = vmatprep.subr.mxu0 0.0
    %1445 = vmatpush1.msra.mxu0 %v422
    %1446 = vmatprep.subr.mxu0 0.0
    %1447 = vmatpush1.msra.mxu0 %v421
    %1448 = vmatprep.subr.mxu0 0.0
    %1449 = vmatpush1.msra.mxu0 %v420
    %1450 = vmatprep.subr.mxu0 0.0
    %1451 = vmatpush1.msra.mxu0 %v419
    %1452 = vmatprep.subr.mxu0 0.0
    %1453 = vmatpush1.msra.mxu0 %v418
    %1454 = vmatprep.subr.mxu0 0.0
    %1455 = vmatpush2.msra.mxu0 0.0
    %1456 = vmatprep.subr.mxu0 0.0
    %1457 = vmatpush2.msra.mxu0 0.0
    %1458 = vmatprep.subr.mxu0 0.0
    %1459 = vmatpush2.msra.mxu0 0.0
    %1460 = vmatprep.subr.mxu0 0.0
    %1461 = vmatpush2.msra.mxu0 0.0
    %1462 = vmatprep.subr.mxu0 0.0
    %1463 = vmatpush2.msra.mxu0 0.0
    %1464 = vmatprep.subr.mxu0 0.0
    %1465 = vmatpush2.msra.mxu0 0.0
    %1466 = vmatprep.subr.mxu0 0.0
    %1467 = vmatpush2.msra.mxu0 0.0
    %1468 = vmatprep.subr.mxu0 0.0
    %1469 = vmatpush2.msra.mxu0 0.0
    %1470 = vmatprep.subr.mxu0 0.0
    %1471 = vmatpush2.msra.mxu0 0.0
    %1472 = vmatprep.subr.mxu0 0.0
    %1473 = vmatpush2.msra.mxu0 0.0
    %1474 = vmatprep.subr.mxu0 0.0
    %1475 = vmatpush2.msra.mxu0 0.0
    %1476 = vmatprep.subr.mxu0 0.0
    %1477 = vmatpush2.msra.mxu0 0.0
    %1478 = vmatprep.subr.mxu0 0.0
    %1479 = vmatpush2.msra.mxu0 0.0
    %1480 = vmatprep.subr.mxu0 0.0
    %1481 = vmatpush2.msra.mxu0 0.0
    %1482 = vmatprep.subr.mxu0 0.0
    %1483 = vmatpush2.msra.mxu0 0.0
    %1484 = vmatprep.subr.mxu0 0.0
    %1485 = vmatpush2.msra.mxu0 0.0
    %1486 = vmatprep.mubr.f32.mxu0 0.0
    %1487 = vmatmul.mubr.f32.gmra.mxu0 %v556
    %v1488 = vpop.f32.mrf.mxu0
    %v1489 = vadd.f32 %v1419, %v1488
    %v1490 = vpop.f32.mrf.mxu0
    %1491 = vdwg.mxu0
    %v1492 = vmax.f32 %v1489, 0.0
    %v1493 = vld [vmem:[%s3] sm:$0xff]
    %v1494 = vld [vmem:[%s3 + $0x8] sm:$0xff]
    %v1495 = vld [vmem:[%s3 + $0x10] sm:$0xff]
    %v1496 = vld [vmem:[%s3 + $0x18] sm:$0xff]
    %v1497 = vld [vmem:[%s3 + $0x20] sm:$0xff]
    %v1498 = vld [vmem:[%s3 + $0x28] sm:$0xff]
    %v1499 = vld [vmem:[%s3 + $0x30] sm:$0xff]
    %v1500 = vld [vmem:[%s3 + $0x38] sm:$0xff]
    %v1501 = vld [vmem:[%s3 + $0x40] sm:$0xff]
    %v1502 = vld [vmem:[%s3 + $0x48] sm:$0xff]
    %v1503 = vld [vmem:[%s3 + $0x50] sm:$0xff]
    %v1504 = vld [vmem:[%s3 + $0x58] sm:$0xff]
    %v1505 = vld [vmem:[%s3 + $0x60] sm:$0xff]
    %v1506 = vld [vmem:[%s3 + $0x68] sm:$0xff]
    %v1507 = vld [vmem:[%s3 + $0x70] sm:$0xff]
    %v1508 = vld [vmem:[%s3 + $0x78] sm:$0xff]
    %v1509 = vld [vmem:[%s4] sm:$0x1]
    %v1511 = vlaneseq
    %v1512 = vshrl.u32 %v1511, 7
    %v1513 = vsub.s32 0, %v1512
    %v1514 = vrot.slane %v1509, %v1513
    %1516 = vmatprep.subr.mxu0 0.0
    %1517 = vmatpush1.msra.mxu0 %v1508
    %1518 = vmatprep.subr.mxu0 0.0
    %1519 = vmatpush1.msra.mxu0 %v1507
    %1520 = vmatprep.subr.mxu0 0.0
    %1521 = vmatpush1.msra.mxu0 %v1506
    %1522 = vmatprep.subr.mxu0 0.0
    %1523 = vmatpush1.msra.mxu0 %v1505
    %1524 = vmatprep.subr.mxu0 0.0
    %1525 = vmatpush1.msra.mxu0 %v1504
    %1526 = vmatprep.subr.mxu0 0.0
    %1527 = vmatpush1.msra.mxu0 %v1503
    %1528 = vmatprep.subr.mxu0 0.0
    %1529 = vmatpush1.msra.mxu0 %v1502
    %1530 = vmatprep.subr.mxu0 0.0
    %1531 = vmatpush1.msra.mxu0 %v1501
    %1532 = vmatprep.subr.mxu0 0.0
    %1533 = vmatpush1.msra.mxu0 %v1500
    %1534 = vmatprep.subr.mxu0 0.0
    %1535 = vmatpush1.msra.mxu0 %v1499
    %1536 = vmatprep.subr.mxu0 0.0
    %1537 = vmatpush1.msra.mxu0 %v1498
    %1538 = vmatprep.subr.mxu0 0.0
    %1539 = vmatpush1.msra.mxu0 %v1497
    %1540 = vmatprep.subr.mxu0 0.0
    %1541 = vmatpush1.msra.mxu0 %v1496
    %1542 = vmatprep.subr.mxu0 0.0
    %1543 = vmatpush1.msra.mxu0 %v1495
    %1544 = vmatprep.subr.mxu0 0.0
    %1545 = vmatpush1.msra.mxu0 %v1494
    %1546 = vmatprep.subr.mxu0 0.0
    %1547 = vmatpush1.msra.mxu0 %v1493
    %1548 = vmatprep.subr.mxu0 0.0
    %1549 = vmatpush2.msra.mxu0 0.0
    %1550 = vmatprep.subr.mxu0 0.0
    %1551 = vmatpush2.msra.mxu0 0.0
    %1552 = vmatprep.subr.mxu0 0.0
    %1553 = vmatpush2.msra.mxu0 0.0
    %1554 = vmatprep.subr.mxu0 0.0
    %1555 = vmatpush2.msra.mxu0 0.0
    %1556 = vmatprep.subr.mxu0 0.0
    %1557 = vmatpush2.msra.mxu0 0.0
    %1558 = vmatprep.subr.mxu0 0.0
    %1559 = vmatpush2.msra.mxu0 0.0
    %1560 = vmatprep.subr.mxu0 0.0
    %1561 = vmatpush2.msra.mxu0 0.0
    %1562 = vmatprep.subr.mxu0 0.0
    %1563 = vmatpush2.msra.mxu0 0.0
    %1564 = vmatprep.subr.mxu0 0.0
    %1565 = vmatpush2.msra.mxu0 0.0
    %1566 = vmatprep.subr.mxu0 0.0
    %1567 = vmatpush2.msra.mxu0 0.0
    %1568 = vmatprep.subr.mxu0 0.0
    %1569 = vmatpush2.msra.mxu0 0.0
    %1570 = vmatprep.subr.mxu0 0.0
    %1571 = vmatpush2.msra.mxu0 0.0
    %1572 = vmatprep.subr.mxu0 0.0
    %1573 = vmatpush2.msra.mxu0 0.0
    %1574 = vmatprep.subr.mxu0 0.0
    %1575 = vmatpush2.msra.mxu0 0.0
    %1576 = vmatprep.subr.mxu0 0.0
    %1577 = vmatpush2.msra.mxu0 0.0
    %1578 = vmatprep.subr.mxu0 0.0
    %1579 = vmatpush2.msra.mxu0 0.0
    %1580 = vmatprep.mubr.f32.mxu0 0.0
    %1581 = vmatmul.mubr.f32.gmra.mxu0 %v1492
    %v1582 = vpop.f32.mrf.mxu0
    %v1583 = vadd.f32 %v1514, %v1582
    %v1584 = vpop.f32.mrf.mxu0
    %1585 = vdwg.mxu0
    %v1586 = vmax.f32 %v1583, 0.0
    %v1587 = vld [vmem:[%s5] sm:$0xff]
    %v1588 = vld [vmem:[%s5 + $0x8] sm:$0xff]
    %v1589 = vld [vmem:[%s5 + $0x10] sm:$0xff]
    %v1590 = vld [vmem:[%s5 + $0x18] sm:$0xff]
    %v1591 = vld [vmem:[%s5 + $0x20] sm:$0xff]
    %v1592 = vld [vmem:[%s5 + $0x28] sm:$0xff]
    %v1593 = vld [vmem:[%s5 + $0x30] sm:$0xff]
    %v1594 = vld [vmem:[%s5 + $0x38] sm:$0xff]
    %v1595 = vld [vmem:[%s5 + $0x40] sm:$0xff]
    %v1596 = vld [vmem:[%s5 + $0x48] sm:$0xff]
    %v1597 = vld [vmem:[%s5 + $0x50] sm:$0xff]
    %v1598 = vld [vmem:[%s5 + $0x58] sm:$0xff]
    %v1599 = vld [vmem:[%s5 + $0x60] sm:$0xff]
    %v1600 = vld [vmem:[%s5 + $0x68] sm:$0xff]
    %v1601 = vld [vmem:[%s5 + $0x70] sm:$0xff]
    %v1602 = vld [vmem:[%s5 + $0x78] sm:$0xff]
    %v1603 = vld [vmem:[%s6] sm:$0x1]
    %v1605 = vlaneseq
    %v1606 = vshrl.u32 %v1605, 7
    %v1607 = vsub.s32 0, %v1606
    %v1608 = vrot.slane %v1603, %v1607
    %1610 = vmatprep.subr.mxu0 0.0
    %1611 = vmatpush1.msra.mxu0 %v1602
    %1612 = vmatprep.subr.mxu0 0.0
    %1613 = vmatpush1.msra.mxu0 %v1601
    %1614 = vmatprep.subr.mxu0 0.0
    %1615 = vmatpush1.msra.mxu0 %v1600
    %1616 = vmatprep.subr.mxu0 0.0
    %1617 = vmatpush1.msra.mxu0 %v1599
    %1618 = vmatprep.subr.mxu0 0.0
    %1619 = vmatpush1.msra.mxu0 %v1598
    %1620 = vmatprep.subr.mxu0 0.0
    %1621 = vmatpush1.msra.mxu0 %v1597
    %1622 = vmatprep.subr.mxu0 0.0
    %1623 = vmatpush1.msra.mxu0 %v1596
    %1624 = vmatprep.subr.mxu0 0.0
    %1625 = vmatpush1.msra.mxu0 %v1595
    %1626 = vmatprep.subr.mxu0 0.0
    %1627 = vmatpush1.msra.mxu0 %v1594
    %1628 = vmatprep.subr.mxu0 0.0
    %1629 = vmatpush1.msra.mxu0 %v1593
    %1630 = vmatprep.subr.mxu0 0.0
    %1631 = vmatpush1.msra.mxu0 %v1592
    %1632 = vmatprep.subr.mxu0 0.0
    %1633 = vmatpush1.msra.mxu0 %v1591
    %1634 = vmatprep.subr.mxu0 0.0
    %1635 = vmatpush1.msra.mxu0 %v1590
    %1636 = vmatprep.subr.mxu0 0.0
    %1637 = vmatpush1.msra.mxu0 %v1589
    %1638 = vmatprep.subr.mxu0 0.0
    %1639 = vmatpush1.msra.mxu0 %v1588
    %1640 = vmatprep.subr.mxu0 0.0
    %1641 = vmatpush1.msra.mxu0 %v1587
    %1642 = vmatprep.subr.mxu0 0.0
    %1643 = vmatpush2.msra.mxu0 0.0
    %1644 = vmatprep.subr.mxu0 0.0
    %1645 = vmatpush2.msra.mxu0 0.0
    %1646 = vmatprep.subr.mxu0 0.0
    %1647 = vmatpush2.msra.mxu0 0.0
    %1648 = vmatprep.subr.mxu0 0.0
    %1649 = vmatpush2.msra.mxu0 0.0
    %1650 = vmatprep.subr.mxu0 0.0
    %1651 = vmatpush2.msra.mxu0 0.0
    %1652 = vmatprep.subr.mxu0 0.0
    %1653 = vmatpush2.msra.mxu0 0.0
    %1654 = vmatprep.subr.mxu0 0.0
    %1655 = vmatpush2.msra.mxu0 0.0
    %1656 = vmatprep.subr.mxu0 0.0
    %1657 = vmatpush2.msra.mxu0 0.0
    %1658 = vmatprep.subr.mxu0 0.0
    %1659 = vmatpush2.msra.mxu0 0.0
    %1660 = vmatprep.subr.mxu0 0.0
    %1661 = vmatpush2.msra.mxu0 0.0
    %1662 = vmatprep.subr.mxu0 0.0
    %1663 = vmatpush2.msra.mxu0 0.0
    %1664 = vmatprep.subr.mxu0 0.0
    %1665 = vmatpush2.msra.mxu0 0.0
    %1666 = vmatprep.subr.mxu0 0.0
    %1667 = vmatpush2.msra.mxu0 0.0
    %1668 = vmatprep.subr.mxu0 0.0
    %1669 = vmatpush2.msra.mxu0 0.0
    %1670 = vmatprep.subr.mxu0 0.0
    %1671 = vmatpush2.msra.mxu0 0.0
    %1672 = vmatprep.subr.mxu0 0.0
    %1673 = vmatpush2.msra.mxu0 0.0
    %1674 = vmatprep.mubr.f32.mxu0 0.0
    %1675 = vmatmul.mubr.f32.gmra.mxu0 %v1586
    %v1676 = vpop.f32.mrf.mxu0
    %v1677 = vadd.f32 %v1608, %v1676
    %v1678 = vpop.f32.mrf.mxu0
    %1679 = vdwg.mxu0
    %1680 = vst [vmem:[#allocation2] sm:$0x3] %v1677
    // Predicated region
    $region30: #{lenet_forward.5} parent=1 // pred_check
      _
    $region31: #{lenet_forward.5} parent=1 // pred_check_branch
      %1682 = sbr.rel (0) target = $region33
    $region32: #{lenet_forward.5} parent=1 // pred_region
      %s1684 = ssub.s32 32, 32
      %1685 = vsyncadd [#allocation3], %s1684
      %s1687 = sshll.u32 [#allocation2], 4
      %s1688 = int_to_ptr.vmem [resolvable:$true] %s1687
      %1690 = dma.vmem_to_hbm [thread:$0]  %s1688, 32, %s7, [#allocation3]
    $region33: #{lenet_forward.5} parent=1 // pred_fallthru
      _
    // Predicated region
    $region34: #{lenet_forward.5} parent=1 // pred_check
      _
    $region35: #{lenet_forward.5} parent=1 // pred_check_branch
      %1692 = sbr.rel (0) target = $region37
    $region36: #{lenet_forward.5} parent=1 // pred_region
      %1693 = dma.done [#allocation3], 32
    $region37: #{lenet_forward.5} parent=1 // pred_fallthru
      _
    %1694 = vsyncpa [#allocation3], 1

</llo_original>
